<compile_context>
chip_gen: v5e
topology: v5e:2x2
jax: 0.10.0
libtpu: 0.0.40
codegen_flags: <defaults>
</compile_context>

<pallas_src>
import functools
import math

import jax
import jax.numpy as jnp
from jax.experimental import pallas as pl
from jax.experimental.pallas import tpu as pltpu


# MXU operand dtype.  bf16 is the native MXU path on every generation
# (f32 matmuls are multi-pass emulation, and v7x has no native f32 MXU).
MXU_DTYPE = jnp.bfloat16

# Indices into the stacked per-layer attention-weight slab w_att [L, 8, C, C].
W_SA_Q, W_SA_K, W_SA_V, W_SA_O, W_CA_Q, W_CA_K, W_CA_V, W_CA_O = range(8)
# Indices into the stacked per-layer [1, C] vector slab vec_c [L, 15, 1, C].
(V_SA_BQ, V_SA_BK, V_SA_BV, V_SA_BO,
 V_CA_BQ, V_CA_BK, V_CA_BV, V_CA_BO,
 V_N1_G, V_N1_B, V_N2_G, V_N2_B, V_N3_G, V_N3_B, V_FF_B2) = range(15)
NUM_VEC = 15

WEIGHT_ORDER = ("nl_w", "nl_b", "nl_wout", "nl_bout",
                "w_att", "w_ff1", "w_ff2", "vec_c", "b_ff1", "fn")


# ------------------------- in-kernel helper math ---------------------------

def _mm(a, b):
    """a @ b with bf16 MXU operands and f32 accumulation."""
    return jnp.dot(a.astype(MXU_DTYPE), b.astype(MXU_DTYPE),
                   preferred_element_type=jnp.float32)


def _mm_t(a, b):
    """a @ b.T (contract last dims) without materializing a transpose."""
    return jax.lax.dot_general(
        a.astype(MXU_DTYPE), b.astype(MXU_DTYPE),
        (((1,), (1,)), ((), ())), preferred_element_type=jnp.float32)


def _softmax_last(s):
    """Numerically stable softmax over the last axis (f32, exact division)."""
    s = s - jnp.max(s, axis=-1, keepdims=True)
    e = jnp.exp(s)
    return e / jnp.sum(e, axis=-1, keepdims=True)


def _layernorm(x, g, b, eps=1e-5):
    mu = jnp.mean(x, axis=-1, keepdims=True)
    var = jnp.mean(jnp.square(x - mu), axis=-1, keepdims=True)
    return (x - mu) * jax.lax.rsqrt(var + eps) * g + b


# --------------------------- the fused kernel ------------------------------

def _fused_kernel(x_ref, pos_ref, kbias_ref, qpos_ref,
                  nlw_ref, nlb_ref, nlwo_ref, nlbo_ref,
                  watt_ref, wff1_ref, wff2_ref, vecc_ref, bff1_ref, fn_ref,
                  hs_ref, mem_ref, *, num_layers, nhead):
    """NonLocal2d encoder + full transformer decoder for one batch element."""
    x = x_ref[0]                                   # [HW, C] == src + pos tokens
    HW, C = x.shape
    NQ = qpos_ref.shape[0]
    inter = nlw_ref.shape[2]
    hd = C // nhead

    # ---- NonLocal2d (embedded_gaussian, use_scale, no sub_sample) ----------
    g_x = _mm(x, nlw_ref[0]) + nlb_ref[0]          # 1x1 conv g      [HW, inter]
    theta = _mm(x, nlw_ref[1]) + nlb_ref[1]        # 1x1 conv theta  [HW, inter]
    phi = _mm(x, nlw_ref[2]) + nlb_ref[2]          # 1x1 conv phi    [HW, inter]
    pw = _softmax_last(_mm_t(theta, phi) * (1.0 / math.sqrt(inter)))   # [HW, HW]
    y = _mm(pw, g_x)                               # [HW, inter]
    mem = x + _mm(y, nlwo_ref[...]) + nlbo_ref[...]  # conv_out + residual [HW, C]
    mem_ref[0] = mem.astype(mem_ref.dtype)

    # ---- decoder loop invariants (hoisted) ----------------------------------
    pos = pos_ref[0]                               # [HW, C]
    qpos = qpos_ref[...]                           # [NQ, C]
    mem_k = mem + pos                              # cross-attn keys = memory + pos
    # Additive key-padding bias, broadcast ONCE (not per head/layer).
    # NOTE: with a finite -1e30 bias a fully-masked key row yields a uniform
    # 1/HW softmax (PyTorch's -inf masking would yield NaN); partially masked
    # rows match PyTorch.
    kbias = jnp.broadcast_to(kbias_ref[...], (nhead, NQ, HW))          # f32

    # Per-head channel mask [nhead, 1, C] — lets us batch heads on a leading
    # axis with full-width contractions instead of slicing 8-lane columns.
    lane = jax.lax.broadcasted_iota(jnp.int32, (nhead, 1, C), 2)
    head = jax.lax.broadcasted_iota(jnp.int32, (nhead, 1, C), 0)
    head_mask = jnp.logical_and(lane >= head * hd,
                                lane < (head + 1) * hd).astype(jnp.float32)
    scale = 1.0 / math.sqrt(hd)

    def mha(q, k, v, wo, bo, bias, lk):
        """Multi-head attention, heads batched on a leading axis.

        q: [Lq, C], k/v: [lk, C].  Masking v per head makes each head's
        attention output occupy disjoint channels, so summing over the head
        axis IS the head concatenation and the output projection is applied
        once on the re-concatenated [Lq, C]."""
        qm = (q * scale)[None] * head_mask                          # [h, Lq, C]
        kb = jnp.broadcast_to(k[None], (nhead, lk, C))              # [h, lk, C]
        s = jnp.einsum("hqc,hkc->hqk", qm.astype(MXU_DTYPE), kb.astype(MXU_DTYPE),
                       preferred_element_type=jnp.float32)          # [h, Lq, lk]
        if bias is not None:
            s = s + bias
        p = _softmax_last(s)
        vm = v[None] * head_mask                                    # [h, lk, C]
        o = jnp.einsum("hqk,hkc->hqc", p.astype(MXU_DTYPE), vm.astype(MXU_DTYPE),
                       preferred_element_type=jnp.float32)          # [h, Lq, C]
        o_cat = jnp.sum(o, axis=0)                                  # [Lq, C]
        return _mm(o_cat, wo) + bo

    # ---- decoder layers (forward_post; dropout = identity) -----------------
    tgt = jnp.zeros((NQ, C), jnp.float32)          # tgt = zeros_like(query_embed)
    for l in range(num_layers):
        def w(i, _l=l):
            return watt_ref[_l, i]                 # [C, C]

        def vec(i, _l=l):
            return vecc_ref[_l, i]                 # [1, C]

        # self-attention: q = k = tgt + query_pos, value = tgt
        q_in = tgt + qpos
        q = _mm(q_in, w(W_SA_Q)) + vec(V_SA_BQ)
        k = _mm(q_in, w(W_SA_K)) + vec(V_SA_BK)
        v = _mm(tgt, w(W_SA_V)) + vec(V_SA_BV)
        sa = mha(q, k, v, w(W_SA_O), vec(V_SA_BO), None, NQ)
        tgt = _layernorm(tgt + sa, vec(V_N1_G), vec(V_N1_B))

        # cross-attention: key = memory + pos, value = memory, key padding mask
        q = _mm(tgt + qpos, w(W_CA_Q)) + vec(V_CA_BQ)
        k = _mm(mem_k, w(W_CA_K)) + vec(V_CA_BK)
        v = _mm(mem, w(W_CA_V)) + vec(V_CA_BV)
        ca = mha(q, k, v, w(W_CA_O), vec(V_CA_BO), kbias, HW)
        tgt = _layernorm(tgt + ca, vec(V_N2_G), vec(V_N2_B))

        # feed-forward (relu)
        h1 = jnp.maximum(_mm(tgt, wff1_ref[l]) + bff1_ref[l], 0.0)
        ff = _mm(h1, wff2_ref[l]) + vec(V_FF_B2)
        tgt = _layernorm(tgt + ff, vec(V_N3_G), vec(V_N3_B))

    tgt = _layernorm(tgt, fn_ref[0], fn_ref[1])    # decoder.norm
    hs_ref[0] = tgt.astype(hs_ref.dtype)


def fused_transformer_call(params, x_tok, pos_tok, key_bias, query_embed, nhead):
    """x_tok/pos_tok: [B, HW, C], key_bias: [B, 1, HW], query_embed: [NQ, C].
    Returns (hs_last [B, NQ, C], memory [B, HW, C])."""
    B, HW, C = x_tok.shape
    NQ = query_embed.shape[0]
    L = params["w_att"].shape[0]

    def const_spec(a):
        nd = a.ndim
        return pl.BlockSpec(a.shape, lambda b, _nd=nd: (0,) * _nd)

    in_specs = (
        [pl.BlockSpec((1, HW, C), lambda b: (b, 0, 0)),      # x_tok (src + pos)
         pl.BlockSpec((1, HW, C), lambda b: (b, 0, 0)),      # pos tokens
         pl.BlockSpec((1, 1, HW), lambda b: (b, 0, 0)),      # key-padding bias
         pl.BlockSpec((NQ, C), lambda b: (0, 0))]            # query_embed
        + [const_spec(params[name]) for name in WEIGHT_ORDER]  # resident weights
    )
    out_shape = (jax.ShapeDtypeStruct((B, NQ, C), jnp.float32),   # hs (last layer)
                 jax.ShapeDtypeStruct((B, HW, C), jnp.float32))   # memory tokens
    out_specs = (pl.BlockSpec((1, NQ, C), lambda b: (b, 0, 0)),
                 pl.BlockSpec((1, HW, C), lambda b: (b, 0, 0)))

    return pl.pallas_call(
        functools.partial(_fused_kernel, num_layers=L, nhead=nhead),
        out_shape=out_shape,
        grid=(B,),
        in_specs=in_specs,
        out_specs=out_specs,
        compiler_params=pltpu.CompilerParams(dimension_semantics=("parallel",)),
    )(x_tok, pos_tok, key_bias, query_embed,
      *[params[name] for name in WEIGHT_ORDER])


# ------------------------------- forward -----------------------------------

def nonlocal_transformer_forward(params, src, mask, query_embed, pos_embed, nhead):
    """Mirror of NonLocalTransformer.forward (eval mode).
    src/pos_embed: [B, C, H, W], mask: [B, H, W] bool, query_embed: [NQ, C].
    Returns (hs [1, B, NQ, C], memory [B, C, H, W])."""
    bs, c, h, w = src.shape
    hw = h * w

    x_tok = jnp.transpose((src + pos_embed).reshape(bs, c, hw), (0, 2, 1))
    pos_tok = jnp.transpose(pos_embed.reshape(bs, c, hw), (0, 2, 1))
    key_bias = jnp.where(mask.reshape(bs, 1, hw), -1e30, 0.0).astype(jnp.float32)

    hs_last, memory = fused_transformer_call(params, x_tok, pos_tok, key_bias,
                                             query_embed, nhead)

    hs = hs_last[None]                                               # [1, B, NQ, C]
    mem_out = jnp.transpose(memory, (0, 2, 1)).reshape(bs, c, h, w)  # NCHW
    return hs, mem_out


# ---------------------------- parameter init --------------------------------

def init_params(key, d_model, nhead, num_decoder_layers, dim_ff, reduction=2):
    inter = max(d_model // reduction, 1)
    C, F, L = d_model, dim_ff, num_decoder_layers
    it = iter(jax.random.split(key, 64))

    def wgt(shape, scale=0.05):
        return jax.random.normal(next(it), shape, jnp.float32) * scale

    params = {
        # NonLocal2d 1x1 convs: stacked [g | theta | phi] along a leading axis.
        "nl_w": wgt((3, C, inter)),
        "nl_b": jnp.zeros((3, 1, inter), jnp.float32),
        "nl_wout": wgt((inter, C)),
        "nl_bout": jnp.zeros((1, C), jnp.float32),
        # Decoder: per-layer slabs indexed on leading dims only.
        "w_att": wgt((L, 8, C, C)),             # sa_q,sa_k,sa_v,sa_o,ca_q,ca_k,ca_v,ca_o
        "w_ff1": wgt((L, C, F)),
        "w_ff2": wgt((L, F, C)),
        "b_ff1": jnp.zeros((L, 1, F), jnp.float32),
        "fn": jnp.concatenate([jnp.ones((1, 1, C), jnp.float32),
                               jnp.zeros((1, 1, C), jnp.float32)], axis=0),
    }
    vec = jnp.zeros((L, NUM_VEC, 1, C), jnp.float32)    # biases 0, norm gammas 1
    for idx in (V_N1_G, V_N2_G, V_N3_G):
        vec = vec.at[:, idx].set(1.0)
    params["vec_c"] = vec
    return params


# ---------------------------------- main -------------------------------------

if __name__ == "__main__":
    d_model, nhead, num_dec_layers, dim_ff = 32, 4, 2, 64
    bs, h, w, num_queries = 2, 8, 8, 8

    key = jax.random.PRNGKey(0)
    k_src, k_pos, k_qe, k_par = jax.random.split(key, 4)
    src = jax.random.normal(k_src, (bs, d_model, h, w), jnp.float32)
    pos_embed = jax.random.normal(k_pos, (bs, d_model, h, w), jnp.float32)
    query_embed = jax.random.normal(k_qe, (num_queries, d_model), jnp.float32)
    mask = jnp.zeros((bs, h, w), jnp.bool_).at[0, -1, :].set(True)

    params = init_params(k_par, d_model, nhead, num_dec_layers, dim_ff)

    fwd = jax.jit(functools.partial(nonlocal_transformer_forward, nhead=nhead))
    hs, mem = fwd(params, src, mask, query_embed, pos_embed)
    jax.block_until_ready((hs, mem))

    assert hs.shape == (1, bs, num_queries, d_model), hs.shape
    assert mem.shape == (bs, d_model, h, w), mem.shape
    assert bool(jnp.all(jnp.isfinite(hs))) and bool(jnp.all(jnp.isfinite(mem)))
    print("KERNEL_OK")
</pallas_src>

<mosaic_0001>
module attributes {stable_mosaic.version = 11 : i64} {
  func.func @_fused_kernel(%arg0: i32, %arg1: memref<1x64x32xf32, #tpu.memory_space<vmem>>, %arg2: memref<1x64x32xf32, #tpu.memory_space<vmem>>, %arg3: memref<1x1x64xf32, #tpu.memory_space<vmem>>, %arg4: memref<8x32xf32, #tpu.memory_space<vmem>>, %arg5: memref<3x32x16xf32, #tpu.memory_space<vmem>>, %arg6: memref<3x1x16xf32, #tpu.memory_space<vmem>>, %arg7: memref<16x32xf32, #tpu.memory_space<vmem>>, %arg8: memref<1x32xf32, #tpu.memory_space<vmem>>, %arg9: memref<2x8x32x32xf32, #tpu.memory_space<vmem>>, %arg10: memref<2x32x64xf32, #tpu.memory_space<vmem>>, %arg11: memref<2x64x32xf32, #tpu.memory_space<vmem>>, %arg12: memref<2x15x1x32xf32, #tpu.memory_space<vmem>>, %arg13: memref<2x1x64xf32, #tpu.memory_space<vmem>>, %arg14: memref<2x1x32xf32, #tpu.memory_space<vmem>>, %arg15: memref<1x8x32xf32, #tpu.memory_space<vmem>>, %arg16: memref<1x64x32xf32, #tpu.memory_space<vmem>>) attributes {dimension_semantics = [#tpu.dimension_semantics<parallel>], iteration_bounds = array<i64: 2>, scalar_prefetch = 0 : i64, scratch_operands = 0 : i64, tpu.core_type = #tpu.core_type<tc>, window_params = [{transform_indices = @transform_0, window_bounds = array<i64: 1, 64, 32>}, {transform_indices = @transform_1, window_bounds = array<i64: 1, 64, 32>}, {transform_indices = @transform_2, window_bounds = array<i64: 1, 1, 64>}, {pipeline_mode = #tpu.pipeline_mode<synchronous>, transform_indices = @transform_3, window_bounds = array<i64: 8, 32>}, {pipeline_mode = #tpu.pipeline_mode<synchronous>, transform_indices = @transform_4, window_bounds = array<i64: 3, 32, 16>}, {pipeline_mode = #tpu.pipeline_mode<synchronous>, transform_indices = @transform_5, window_bounds = array<i64: 3, 1, 16>}, {pipeline_mode = #tpu.pipeline_mode<synchronous>, transform_indices = @transform_6, window_bounds = array<i64: 16, 32>}, {pipeline_mode = #tpu.pipeline_mode<synchronous>, transform_indices = @transform_7, window_bounds = array<i64: 1, 32>}, {pipeline_mode = #tpu.pipeline_mode<synchronous>, transform_indices = @transform_8, window_bounds = array<i64: 2, 8, 32, 32>}, {pipeline_mode = #tpu.pipeline_mode<synchronous>, transform_indices = @transform_9, window_bounds = array<i64: 2, 32, 64>}, {pipeline_mode = #tpu.pipeline_mode<synchronous>, transform_indices = @transform_10, window_bounds = array<i64: 2, 64, 32>}, {pipeline_mode = #tpu.pipeline_mode<synchronous>, transform_indices = @transform_11, window_bounds = array<i64: 2, 15, 1, 32>}, {pipeline_mode = #tpu.pipeline_mode<synchronous>, transform_indices = @transform_12, window_bounds = array<i64: 2, 1, 64>}, {pipeline_mode = #tpu.pipeline_mode<synchronous>, transform_indices = @transform_13, window_bounds = array<i64: 2, 1, 32>}, {transform_indices = @transform_14, window_bounds = array<i64: 1, 8, 32>}, {transform_indices = @transform_15, window_bounds = array<i64: 1, 64, 32>}]} {
    %c0 = arith.constant 0 : index
    %c0_0 = arith.constant 0 : index
    %c0_1 = arith.constant 0 : index
    %0 = vector.load %arg1[%c0, %c0_0, %c0_1] : memref<1x64x32xf32, #tpu.memory_space<vmem>>, vector<1x64x32xf32>
    %1 = vector.shape_cast %0 : vector<1x64x32xf32> to vector<64x32xf32>
    %c0_2 = arith.constant 0 : index
    %c0_3 = arith.constant 0 : index
    %c0_4 = arith.constant 0 : index
    %2 = vector.load %arg5[%c0_2, %c0_3, %c0_4] : memref<3x32x16xf32, #tpu.memory_space<vmem>>, vector<1x32x16xf32>
    %3 = vector.shape_cast %2 : vector<1x32x16xf32> to vector<32x16xf32>
    %4 = arith.truncf %1 : vector<64x32xf32> to vector<64x32xbf16>
    %5 = arith.truncf %3 : vector<32x16xf32> to vector<32x16xbf16>
    %cst = arith.constant dense<0.000000e+00> : vector<64x16xf32>
    %6 = tpu.matmul %4, %5, %cst {dimension_numbers = #tpu.dot_dimension_numbers<[1], [0], [0], [1], [0, 0, 1, 1], [], []>} : vector<64x32xbf16>, vector<32x16xbf16>, vector<64x16xf32> -> vector<64x16xf32>
    %c0_5 = arith.constant 0 : index
    %c0_6 = arith.constant 0 : index
    %c0_7 = arith.constant 0 : index
    %7 = vector.load %arg6[%c0_5, %c0_6, %c0_7] : memref<3x1x16xf32, #tpu.memory_space<vmem>>, vector<1x1x16xf32>
    %8 = vector.shape_cast %7 : vector<1x1x16xf32> to vector<1x16xf32>
    %9 = vector.broadcast %8 : vector<1x16xf32> to vector<64x16xf32>
    %10 = arith.addf %6, %9 : vector<64x16xf32>
    %c1 = arith.constant 1 : index
    %c0_8 = arith.constant 0 : index
    %c0_9 = arith.constant 0 : index
    %11 = vector.load %arg5[%c1, %c0_8, %c0_9] : memref<3x32x16xf32, #tpu.memory_space<vmem>>, vector<1x32x16xf32>
    %12 = vector.shape_cast %11 : vector<1x32x16xf32> to vector<32x16xf32>
    %13 = arith.truncf %1 : vector<64x32xf32> to vector<64x32xbf16>
    %14 = arith.truncf %12 : vector<32x16xf32> to vector<32x16xbf16>
    %cst_10 = arith.constant dense<0.000000e+00> : vector<64x16xf32>
    %15 = tpu.matmul %13, %14, %cst_10 {dimension_numbers = #tpu.dot_dimension_numbers<[1], [0], [0], [1], [0, 0, 1, 1], [], []>} : vector<64x32xbf16>, vector<32x16xbf16>, vector<64x16xf32> -> vector<64x16xf32>
    %c1_11 = arith.constant 1 : index
    %c0_12 = arith.constant 0 : index
    %c0_13 = arith.constant 0 : index
    %16 = vector.load %arg6[%c1_11, %c0_12, %c0_13] : memref<3x1x16xf32, #tpu.memory_space<vmem>>, vector<1x1x16xf32>
    %17 = vector.shape_cast %16 : vector<1x1x16xf32> to vector<1x16xf32>
    %18 = vector.broadcast %17 : vector<1x16xf32> to vector<64x16xf32>
    %19 = arith.addf %15, %18 : vector<64x16xf32>
    %c2 = arith.constant 2 : index
    %c0_14 = arith.constant 0 : index
    %c0_15 = arith.constant 0 : index
    %20 = vector.load %arg5[%c2, %c0_14, %c0_15] : memref<3x32x16xf32, #tpu.memory_space<vmem>>, vector<1x32x16xf32>
    %21 = vector.shape_cast %20 : vector<1x32x16xf32> to vector<32x16xf32>
    %22 = arith.truncf %1 : vector<64x32xf32> to vector<64x32xbf16>
    %23 = arith.truncf %21 : vector<32x16xf32> to vector<32x16xbf16>
    %cst_16 = arith.constant dense<0.000000e+00> : vector<64x16xf32>
    %24 = tpu.matmul %22, %23, %cst_16 {dimension_numbers = #tpu.dot_dimension_numbers<[1], [0], [0], [1], [0, 0, 1, 1], [], []>} : vector<64x32xbf16>, vector<32x16xbf16>, vector<64x16xf32> -> vector<64x16xf32>
    %c2_17 = arith.constant 2 : index
    %c0_18 = arith.constant 0 : index
    %c0_19 = arith.constant 0 : index
    %25 = vector.load %arg6[%c2_17, %c0_18, %c0_19] : memref<3x1x16xf32, #tpu.memory_space<vmem>>, vector<1x1x16xf32>
    %26 = vector.shape_cast %25 : vector<1x1x16xf32> to vector<1x16xf32>
    %27 = vector.broadcast %26 : vector<1x16xf32> to vector<64x16xf32>
    %28 = arith.addf %24, %27 : vector<64x16xf32>
    %29 = arith.truncf %19 : vector<64x16xf32> to vector<64x16xbf16>
    %30 = arith.truncf %28 : vector<64x16xf32> to vector<64x16xbf16>
    %cst_20 = arith.constant dense<0.000000e+00> : vector<64x64xf32>
    %31 = tpu.matmul %29, %30, %cst_20 {dimension_numbers = #tpu.dot_dimension_numbers<[1], [1], [0], [0], [0, 0, 1, 0], [], []>} : vector<64x16xbf16>, vector<64x16xbf16>, vector<64x64xf32> -> vector<64x64xf32>
    %cst_21 = arith.constant 2.500000e-01 : f32
    %32 = vector.broadcast %cst_21 : f32 to vector<64x64xf32>
    %33 = arith.mulf %31, %32 : vector<64x64xf32>
    %cst_22 = arith.constant dense<0xFF800000> : vector<64xf32>
    %34 = vector.multi_reduction <maximumf>, %33, %cst_22 [1] : vector<64x64xf32> to vector<64xf32>
    %35 = vector.shape_cast %34 : vector<64xf32> to vector<64x1xf32>
    %36 = vector.broadcast %35 : vector<64x1xf32> to vector<64x64xf32>
    %37 = arith.subf %33, %36 : vector<64x64xf32>
    %38 = math.exp %37 : vector<64x64xf32>
    %cst_23 = arith.constant dense<0.000000e+00> : vector<64xf32>
    %39 = vector.multi_reduction <add>, %38, %cst_23 [1] : vector<64x64xf32> to vector<64xf32>
    %40 = vector.shape_cast %39 : vector<64xf32> to vector<64x1xf32>
    %41 = vector.broadcast %40 : vector<64x1xf32> to vector<64x64xf32>
    %42 = arith.divf %38, %41 : vector<64x64xf32>
    %43 = arith.truncf %42 : vector<64x64xf32> to vector<64x64xbf16>
    %44 = arith.truncf %10 : vector<64x16xf32> to vector<64x16xbf16>
    %cst_24 = arith.constant dense<0.000000e+00> : vector<64x16xf32>
    %45 = tpu.matmul %43, %44, %cst_24 {dimension_numbers = #tpu.dot_dimension_numbers<[1], [0], [0], [1], [0, 0, 1, 1], [], []>} : vector<64x64xbf16>, vector<64x16xbf16>, vector<64x16xf32> -> vector<64x16xf32>
    %c0_25 = arith.constant 0 : index
    %c0_26 = arith.constant 0 : index
    %46 = vector.load %arg7[%c0_25, %c0_26] : memref<16x32xf32, #tpu.memory_space<vmem>>, vector<16x32xf32>
    %47 = arith.truncf %45 : vector<64x16xf32> to vector<64x16xbf16>
    %48 = arith.truncf %46 : vector<16x32xf32> to vector<16x32xbf16>
    %cst_27 = arith.constant dense<0.000000e+00> : vector<64x32xf32>
    %49 = tpu.matmul %47, %48, %cst_27 {dimension_numbers = #tpu.dot_dimension_numbers<[1], [0], [0], [1], [0, 0, 1, 1], [], []>} : vector<64x16xbf16>, vector<16x32xbf16>, vector<64x32xf32> -> vector<64x32xf32>
    %50 = arith.addf %1, %49 : vector<64x32xf32>
    %c0_28 = arith.constant 0 : index
    %c0_29 = arith.constant 0 : index
    %51 = vector.load %arg8[%c0_28, %c0_29] : memref<1x32xf32, #tpu.memory_space<vmem>>, vector<1x32xf32>
    %52 = vector.broadcast %51 : vector<1x32xf32> to vector<64x32xf32>
    %53 = arith.addf %50, %52 : vector<64x32xf32>
    %c0_30 = arith.constant 0 : index
    %c0_31 = arith.constant 0 : index
    %c0_32 = arith.constant 0 : index
    %54 = vector.load %arg16[%c0_30, %c0_31, %c0_32] : memref<1x64x32xf32, #tpu.memory_space<vmem>>, vector<1x64x32xf32>
    %55 = vector.shape_cast %54 : vector<1x64x32xf32> to vector<64x32xf32>
    %56 = vector.shape_cast %53 : vector<64x32xf32> to vector<1x64x32xf32>
    tpu.vector_store %arg16[%c0_30, %c0_31, %c0_32], %56 {strides = array<i32>} : memref<1x64x32xf32, #tpu.memory_space<vmem>>, vector<1x64x32xf32>,
    %c0_33 = arith.constant 0 : index
    %c0_34 = arith.constant 0 : index
    %c0_35 = arith.constant 0 : index
    %57 = vector.load %arg2[%c0_33, %c0_34, %c0_35] : memref<1x64x32xf32, #tpu.memory_space<vmem>>, vector<1x64x32xf32>
    %58 = vector.shape_cast %57 : vector<1x64x32xf32> to vector<64x32xf32>
    %c0_36 = arith.constant 0 : index
    %c0_37 = arith.constant 0 : index
    %59 = vector.load %arg4[%c0_36, %c0_37] : memref<8x32xf32, #tpu.memory_space<vmem>>, vector<8x32xf32>
    %60 = arith.addf %53, %58 : vector<64x32xf32>
    %c0_38 = arith.constant 0 : index
    %c0_39 = arith.constant 0 : index
    %c0_40 = arith.constant 0 : index
    %61 = vector.load %arg3[%c0_38, %c0_39, %c0_40] : memref<1x1x64xf32, #tpu.memory_space<vmem>>, vector<1x1x64xf32>
    %62 = vector.shape_cast %61 : vector<1x1x64xf32> to vector<1x1x64xf32>
    %63 = vector.broadcast %62 : vector<1x1x64xf32> to vector<4x8x64xf32>
    %64 = tpu.iota {dimensions = array<i32: 2>} : vector<4x1x32xi32>
    %65 = tpu.iota {dimensions = array<i32: 0>} : vector<4x1x32xi32>
    %c8_i32 = arith.constant 8 : i32
    %66 = vector.broadcast %c8_i32 : i32 to vector<4x1x32xi32>
    %67 = arith.muli %65, %66 : vector<4x1x32xi32>
    %68 = arith.cmpi sge, %64, %67 : vector<4x1x32xi32>
    %c1_i32 = arith.constant 1 : i32
    %69 = vector.broadcast %c1_i32 : i32 to vector<4x1x32xi32>
    %70 = arith.addi %65, %69 : vector<4x1x32xi32>
    %c8_i32_41 = arith.constant 8 : i32
    %71 = vector.broadcast %c8_i32_41 : i32 to vector<4x1x32xi32>
    %72 = arith.muli %70, %71 : vector<4x1x32xi32>
    %73 = arith.cmpi slt, %64, %72 : vector<4x1x32xi32>
    %74 = arith.andi %68, %73 : vector<4x1x32xi1>
    %75 = arith.extui %74 : vector<4x1x32xi1> to vector<4x1x32xi32>
    %76 = arith.sitofp %75 : vector<4x1x32xi32> to vector<4x1x32xf32>
    %cst_42 = arith.constant 0.000000e+00 : f32
    %77 = vector.broadcast %cst_42 : f32 to vector<8x32xf32>
    %78 = arith.addf %77, %59 : vector<8x32xf32>
    %c0_43 = arith.constant 0 : index
    %c0_44 = arith.constant 0 : index
    %c0_45 = arith.constant 0 : index
    %c0_46 = arith.constant 0 : index
    %79 = vector.load %arg9[%c0_43, %c0_44, %c0_45, %c0_46] : memref<2x8x32x32xf32, #tpu.memory_space<vmem>>, vector<1x1x32x32xf32>
    %80 = vector.shape_cast %79 : vector<1x1x32x32xf32> to vector<32x32xf32>
    %81 = arith.truncf %78 : vector<8x32xf32> to vector<8x32xbf16>
    %82 = arith.truncf %80 : vector<32x32xf32> to vector<32x32xbf16>
    %cst_47 = arith.constant dense<0.000000e+00> : vector<8x32xf32>
    %83 = tpu.matmul %81, %82, %cst_47 {dimension_numbers = #tpu.dot_dimension_numbers<[1], [0], [0], [1], [0, 0, 1, 1], [], []>} : vector<8x32xbf16>, vector<32x32xbf16>, vector<8x32xf32> -> vector<8x32xf32>
    %c0_48 = arith.constant 0 : index
    %c0_49 = arith.constant 0 : index
    %c0_50 = arith.constant 0 : index
    %c0_51 = arith.constant 0 : index
    %84 = vector.load %arg12[%c0_48, %c0_49, %c0_50, %c0_51] : memref<2x15x1x32xf32, #tpu.memory_space<vmem>>, vector<1x1x1x32xf32>
    %85 = vector.shape_cast %84 : vector<1x1x1x32xf32> to vector<1x32xf32>
    %86 = vector.broadcast %85 : vector<1x32xf32> to vector<8x32xf32>
    %87 = arith.addf %83, %86 : vector<8x32xf32>
    %c0_52 = arith.constant 0 : index
    %c1_53 = arith.constant 1 : index
    %c0_54 = arith.constant 0 : index
    %c0_55 = arith.constant 0 : index
    %88 = vector.load %arg9[%c0_52, %c1_53, %c0_54, %c0_55] : memref<2x8x32x32xf32, #tpu.memory_space<vmem>>, vector<1x1x32x32xf32>
    %89 = vector.shape_cast %88 : vector<1x1x32x32xf32> to vector<32x32xf32>
    %90 = arith.truncf %78 : vector<8x32xf32> to vector<8x32xbf16>
    %91 = arith.truncf %89 : vector<32x32xf32> to vector<32x32xbf16>
    %cst_56 = arith.constant dense<0.000000e+00> : vector<8x32xf32>
    %92 = tpu.matmul %90, %91, %cst_56 {dimension_numbers = #tpu.dot_dimension_numbers<[1], [0], [0], [1], [0, 0, 1, 1], [], []>} : vector<8x32xbf16>, vector<32x32xbf16>, vector<8x32xf32> -> vector<8x32xf32>
    %c0_57 = arith.constant 0 : index
    %c1_58 = arith.constant 1 : index
    %c0_59 = arith.constant 0 : index
    %c0_60 = arith.constant 0 : index
    %93 = vector.load %arg12[%c0_57, %c1_58, %c0_59, %c0_60] : memref<2x15x1x32xf32, #tpu.memory_space<vmem>>, vector<1x1x1x32xf32>
    %94 = vector.shape_cast %93 : vector<1x1x1x32xf32> to vector<1x32xf32>
    %95 = vector.broadcast %94 : vector<1x32xf32> to vector<8x32xf32>
    %96 = arith.addf %92, %95 : vector<8x32xf32>
    %c0_61 = arith.constant 0 : index
    %c2_62 = arith.constant 2 : index
    %c0_63 = arith.constant 0 : index
    %c0_64 = arith.constant 0 : index
    %97 = vector.load %arg9[%c0_61, %c2_62, %c0_63, %c0_64] : memref<2x8x32x32xf32, #tpu.memory_space<vmem>>, vector<1x1x32x32xf32>
    %98 = vector.shape_cast %97 : vector<1x1x32x32xf32> to vector<32x32xf32>
    %99 = arith.truncf %77 : vector<8x32xf32> to vector<8x32xbf16>
    %100 = arith.truncf %98 : vector<32x32xf32> to vector<32x32xbf16>
    %cst_65 = arith.constant dense<0.000000e+00> : vector<8x32xf32>
    %101 = tpu.matmul %99, %100, %cst_65 {dimension_numbers = #tpu.dot_dimension_numbers<[1], [0], [0], [1], [0, 0, 1, 1], [], []>} : vector<8x32xbf16>, vector<32x32xbf16>, vector<8x32xf32> -> vector<8x32xf32>
    %c0_66 = arith.constant 0 : index
    %c2_67 = arith.constant 2 : index
    %c0_68 = arith.constant 0 : index
    %c0_69 = arith.constant 0 : index
    %102 = vector.load %arg12[%c0_66, %c2_67, %c0_68, %c0_69] : memref<2x15x1x32xf32, #tpu.memory_space<vmem>>, vector<1x1x1x32xf32>
    %103 = vector.shape_cast %102 : vector<1x1x1x32xf32> to vector<1x32xf32>
    %104 = vector.broadcast %103 : vector<1x32xf32> to vector<8x32xf32>
    %105 = arith.addf %101, %104 : vector<8x32xf32>
    %c0_70 = arith.constant 0 : index
    %c3 = arith.constant 3 : index
    %c0_71 = arith.constant 0 : index
    %c0_72 = arith.constant 0 : index
    %106 = vector.load %arg9[%c0_70, %c3, %c0_71, %c0_72] : memref<2x8x32x32xf32, #tpu.memory_space<vmem>>, vector<1x1x32x32xf32>
    %107 = vector.shape_cast %106 : vector<1x1x32x32xf32> to vector<32x32xf32>
    %c0_73 = arith.constant 0 : index
    %c3_74 = arith.constant 3 : index
    %c0_75 = arith.constant 0 : index
    %c0_76 = arith.constant 0 : index
    %108 = vector.load %arg12[%c0_73, %c3_74, %c0_75, %c0_76] : memref<2x15x1x32xf32, #tpu.memory_space<vmem>>, vector<1x1x1x32xf32>
    %109 = vector.shape_cast %108 : vector<1x1x1x32xf32> to vector<1x32xf32>
    %cst_77 = arith.constant 0.353553385 : f32
    %110 = vector.broadcast %cst_77 : f32 to vector<8x32xf32>
    %111 = arith.mulf %87, %110 : vector<8x32xf32>
    %112 = vector.shape_cast %111 : vector<8x32xf32> to vector<1x8x32xf32>
    %113 = vector.broadcast %112 : vector<1x8x32xf32> to vector<4x8x32xf32>
    %114 = vector.broadcast %76 : vector<4x1x32xf32> to vector<4x8x32xf32>
    %115 = arith.mulf %113, %114 : vector<4x8x32xf32>
    %116 = vector.shape_cast %96 : vector<8x32xf32> to vector<1x8x32xf32>
    %117 = vector.shape_cast %116 : vector<1x8x32xf32> to vector<1x8x32xf32>
    %118 = vector.broadcast %117 : vector<1x8x32xf32> to vector<4x8x32xf32>
    %119 = arith.truncf %115 : vector<4x8x32xf32> to vector<4x8x32xbf16>
    %120 = arith.truncf %118 : vector<4x8x32xf32> to vector<4x8x32xbf16>
    "tpu.trace_start"() <{level = 10 : i32, message = "hqc,hkc->hqk"}> : () -> ()
    %cst_78 = arith.constant dense<0.000000e+00> : vector<4x8x8xf32>
    %121 = tpu.matmul %119, %120, %cst_78 {dimension_numbers = #tpu.dot_dimension_numbers<[2], [2], [1], [1], [0, 0, 0, 1, 1, 1], [0], [0]>} : vector<4x8x32xbf16>, vector<4x8x32xbf16>, vector<4x8x8xf32> -> vector<4x8x8xf32>
    "tpu.trace_stop"() : () -> ()
    %cst_79 = arith.constant dense<0xFF800000> : vector<4x8xf32>
    %122 = vector.multi_reduction <maximumf>, %121, %cst_79 [2] : vector<4x8x8xf32> to vector<4x8xf32>
    %123 = vector.shape_cast %122 : vector<4x8xf32> to vector<4x8x1xf32>
    %124 = vector.broadcast %123 : vector<4x8x1xf32> to vector<4x8x8xf32>
    %125 = arith.subf %121, %124 : vector<4x8x8xf32>
    %126 = math.exp %125 : vector<4x8x8xf32>
    %cst_80 = arith.constant dense<0.000000e+00> : vector<4x8xf32>
    %127 = vector.multi_reduction <add>, %126, %cst_80 [2] : vector<4x8x8xf32> to vector<4x8xf32>
    %128 = vector.shape_cast %127 : vector<4x8xf32> to vector<4x8x1xf32>
    %129 = vector.broadcast %128 : vector<4x8x1xf32> to vector<4x8x8xf32>
    %130 = arith.divf %126, %129 : vector<4x8x8xf32>
    %131 = vector.shape_cast %105 : vector<8x32xf32> to vector<1x8x32xf32>
    %132 = vector.broadcast %131 : vector<1x8x32xf32> to vector<4x8x32xf32>
    %133 = vector.broadcast %76 : vector<4x1x32xf32> to vector<4x8x32xf32>
    %134 = arith.mulf %132, %133 : vector<4x8x32xf32>
    %135 = arith.truncf %130 : vector<4x8x8xf32> to vector<4x8x8xbf16>
    %136 = arith.truncf %134 : vector<4x8x32xf32> to vector<4x8x32xbf16>
    "tpu.trace_start"() <{level = 10 : i32, message = "hqk,hkc->hqc"}> : () -> ()
    %cst_81 = arith.constant dense<0.000000e+00> : vector<4x8x32xf32>
    %137 = tpu.matmul %135, %136, %cst_81 {dimension_numbers = #tpu.dot_dimension_numbers<[2], [1], [1], [2], [0, 0, 0, 1, 1, 2], [0], [0]>} : vector<4x8x8xbf16>, vector<4x8x32xbf16>, vector<4x8x32xf32> -> vector<4x8x32xf32>
    "tpu.trace_stop"() : () -> ()
    %cst_82 = arith.constant dense<0.000000e+00> : vector<8x32xf32>
    %138 = vector.multi_reduction <add>, %137, %cst_82 [0] : vector<4x8x32xf32> to vector<8x32xf32>
    %139 = arith.truncf %138 : vector<8x32xf32> to vector<8x32xbf16>
    %140 = arith.truncf %107 : vector<32x32xf32> to vector<32x32xbf16>
    %cst_83 = arith.constant dense<0.000000e+00> : vector<8x32xf32>
    %141 = tpu.matmul %139, %140, %cst_83 {dimension_numbers = #tpu.dot_dimension_numbers<[1], [0], [0], [1], [0, 0, 1, 1], [], []>} : vector<8x32xbf16>, vector<32x32xbf16>, vector<8x32xf32> -> vector<8x32xf32>
    %142 = vector.broadcast %109 : vector<1x32xf32> to vector<8x32xf32>
    %143 = arith.addf %141, %142 : vector<8x32xf32>
    %144 = arith.addf %77, %143 : vector<8x32xf32>
    %c0_84 = arith.constant 0 : index
    %c8 = arith.constant 8 : index
    %c0_85 = arith.constant 0 : index
    %c0_86 = arith.constant 0 : index
    %145 = vector.load %arg12[%c0_84, %c8, %c0_85, %c0_86] : memref<2x15x1x32xf32, #tpu.memory_space<vmem>>, vector<1x1x1x32xf32>
    %146 = vector.shape_cast %145 : vector<1x1x1x32xf32> to vector<1x32xf32>
    %c0_87 = arith.constant 0 : index
    %c9 = arith.constant 9 : index
    %c0_88 = arith.constant 0 : index
    %c0_89 = arith.constant 0 : index
    %147 = vector.load %arg12[%c0_87, %c9, %c0_88, %c0_89] : memref<2x15x1x32xf32, #tpu.memory_space<vmem>>, vector<1x1x1x32xf32>
    %148 = vector.shape_cast %147 : vector<1x1x1x32xf32> to vector<1x32xf32>
    %cst_90 = arith.constant dense<0.000000e+00> : vector<8xf32>
    %149 = vector.multi_reduction <add>, %144, %cst_90 [1] : vector<8x32xf32> to vector<8xf32>
    %150 = vector.shape_cast %149 : vector<8xf32> to vector<8x1xf32>
    %cst_91 = arith.constant 3.200000e+01 : f32
    %151 = vector.broadcast %cst_91 : f32 to vector<8x1xf32>
    %152 = arith.divf %150, %151 : vector<8x1xf32>
    %153 = vector.broadcast %152 : vector<8x1xf32> to vector<8x32xf32>
    %154 = arith.subf %144, %153 : vector<8x32xf32>
    %155 = arith.mulf %154, %154 : vector<8x32xf32>
    %cst_92 = arith.constant dense<0.000000e+00> : vector<8xf32>
    %156 = vector.multi_reduction <add>, %155, %cst_92 [1] : vector<8x32xf32> to vector<8xf32>
    %157 = vector.shape_cast %156 : vector<8xf32> to vector<8x1xf32>
    %cst_93 = arith.constant 3.200000e+01 : f32
    %158 = vector.broadcast %cst_93 : f32 to vector<8x1xf32>
    %159 = arith.divf %157, %158 : vector<8x1xf32>
    %160 = vector.broadcast %152 : vector<8x1xf32> to vector<8x32xf32>
    %161 = arith.subf %144, %160 : vector<8x32xf32>
    %cst_94 = arith.constant 9.99999974E-6 : f32
    %162 = vector.broadcast %cst_94 : f32 to vector<8x1xf32>
    %163 = arith.addf %159, %162 : vector<8x1xf32>
    %164 = math.rsqrt %163 : vector<8x1xf32>
    %165 = vector.broadcast %164 : vector<8x1xf32> to vector<8x32xf32>
    %166 = arith.mulf %161, %165 : vector<8x32xf32>
    %167 = vector.broadcast %146 : vector<1x32xf32> to vector<8x32xf32>
    %168 = arith.mulf %166, %167 : vector<8x32xf32>
    %169 = vector.broadcast %148 : vector<1x32xf32> to vector<8x32xf32>
    %170 = arith.addf %168, %169 : vector<8x32xf32>
    %171 = arith.addf %170, %59 : vector<8x32xf32>
    %c0_95 = arith.constant 0 : index
    %c4 = arith.constant 4 : index
    %c0_96 = arith.constant 0 : index
    %c0_97 = arith.constant 0 : index
    %172 = vector.load %arg9[%c0_95, %c4, %c0_96, %c0_97] : memref<2x8x32x32xf32, #tpu.memory_space<vmem>>, vector<1x1x32x32xf32>
    %173 = vector.shape_cast %172 : vector<1x1x32x32xf32> to vector<32x32xf32>
    %174 = arith.truncf %171 : vector<8x32xf32> to vector<8x32xbf16>
    %175 = arith.truncf %173 : vector<32x32xf32> to vector<32x32xbf16>
    %cst_98 = arith.constant dense<0.000000e+00> : vector<8x32xf32>
    %176 = tpu.matmul %174, %175, %cst_98 {dimension_numbers = #tpu.dot_dimension_numbers<[1], [0], [0], [1], [0, 0, 1, 1], [], []>} : vector<8x32xbf16>, vector<32x32xbf16>, vector<8x32xf32> -> vector<8x32xf32>
    %c0_99 = arith.constant 0 : index
    %c4_100 = arith.constant 4 : index
    %c0_101 = arith.constant 0 : index
    %c0_102 = arith.constant 0 : index
    %177 = vector.load %arg12[%c0_99, %c4_100, %c0_101, %c0_102] : memref<2x15x1x32xf32, #tpu.memory_space<vmem>>, vector<1x1x1x32xf32>
    %178 = vector.shape_cast %177 : vector<1x1x1x32xf32> to vector<1x32xf32>
    %179 = vector.broadcast %178 : vector<1x32xf32> to vector<8x32xf32>
    %180 = arith.addf %176, %179 : vector<8x32xf32>
    %c0_103 = arith.constant 0 : index
    %c5 = arith.constant 5 : index
    %c0_104 = arith.constant 0 : index
    %c0_105 = arith.constant 0 : index
    %181 = vector.load %arg9[%c0_103, %c5, %c0_104, %c0_105] : memref<2x8x32x32xf32, #tpu.memory_space<vmem>>, vector<1x1x32x32xf32>
    %182 = vector.shape_cast %181 : vector<1x1x32x32xf32> to vector<32x32xf32>
    %183 = arith.truncf %60 : vector<64x32xf32> to vector<64x32xbf16>
    %184 = arith.truncf %182 : vector<32x32xf32> to vector<32x32xbf16>
    %cst_106 = arith.constant dense<0.000000e+00> : vector<64x32xf32>
    %185 = tpu.matmul %183, %184, %cst_106 {dimension_numbers = #tpu.dot_dimension_numbers<[1], [0], [0], [1], [0, 0, 1, 1], [], []>} : vector<64x32xbf16>, vector<32x32xbf16>, vector<64x32xf32> -> vector<64x32xf32>
    %c0_107 = arith.constant 0 : index
    %c5_108 = arith.constant 5 : index
    %c0_109 = arith.constant 0 : index
    %c0_110 = arith.constant 0 : index
    %186 = vector.load %arg12[%c0_107, %c5_108, %c0_109, %c0_110] : memref<2x15x1x32xf32, #tpu.memory_space<vmem>>, vector<1x1x1x32xf32>
    %187 = vector.shape_cast %186 : vector<1x1x1x32xf32> to vector<1x32xf32>
    %188 = vector.broadcast %187 : vector<1x32xf32> to vector<64x32xf32>
    %189 = arith.addf %185, %188 : vector<64x32xf32>
    %c0_111 = arith.constant 0 : index
    %c6 = arith.constant 6 : index
    %c0_112 = arith.constant 0 : index
    %c0_113 = arith.constant 0 : index
    %190 = vector.load %arg9[%c0_111, %c6, %c0_112, %c0_113] : memref<2x8x32x32xf32, #tpu.memory_space<vmem>>, vector<1x1x32x32xf32>
    %191 = vector.shape_cast %190 : vector<1x1x32x32xf32> to vector<32x32xf32>
    %192 = arith.truncf %53 : vector<64x32xf32> to vector<64x32xbf16>
    %193 = arith.truncf %191 : vector<32x32xf32> to vector<32x32xbf16>
    %cst_114 = arith.constant dense<0.000000e+00> : vector<64x32xf32>
    %194 = tpu.matmul %192, %193, %cst_114 {dimension_numbers = #tpu.dot_dimension_numbers<[1], [0], [0], [1], [0, 0, 1, 1], [], []>} : vector<64x32xbf16>, vector<32x32xbf16>, vector<64x32xf32> -> vector<64x32xf32>
    %c0_115 = arith.constant 0 : index
    %c6_116 = arith.constant 6 : index
    %c0_117 = arith.constant 0 : index
    %c0_118 = arith.constant 0 : index
    %195 = vector.load %arg12[%c0_115, %c6_116, %c0_117, %c0_118] : memref<2x15x1x32xf32, #tpu.memory_space<vmem>>, vector<1x1x1x32xf32>
    %196 = vector.shape_cast %195 : vector<1x1x1x32xf32> to vector<1x32xf32>
    %197 = vector.broadcast %196 : vector<1x32xf32> to vector<64x32xf32>
    %198 = arith.addf %194, %197 : vector<64x32xf32>
    %c0_119 = arith.constant 0 : index
    %c7 = arith.constant 7 : index
    %c0_120 = arith.constant 0 : index
    %c0_121 = arith.constant 0 : index
    %199 = vector.load %arg9[%c0_119, %c7, %c0_120, %c0_121] : memref<2x8x32x32xf32, #tpu.memory_space<vmem>>, vector<1x1x32x32xf32>
    %200 = vector.shape_cast %199 : vector<1x1x32x32xf32> to vector<32x32xf32>
    %c0_122 = arith.constant 0 : index
    %c7_123 = arith.constant 7 : index
    %c0_124 = arith.constant 0 : index
    %c0_125 = arith.constant 0 : index
    %201 = vector.load %arg12[%c0_122, %c7_123, %c0_124, %c0_125] : memref<2x15x1x32xf32, #tpu.memory_space<vmem>>, vector<1x1x1x32xf32>
    %202 = vector.shape_cast %201 : vector<1x1x1x32xf32> to vector<1x32xf32>
    %cst_126 = arith.constant 0.353553385 : f32
    %203 = vector.broadcast %cst_126 : f32 to vector<8x32xf32>
    %204 = arith.mulf %180, %203 : vector<8x32xf32>
    %205 = vector.shape_cast %204 : vector<8x32xf32> to vector<1x8x32xf32>
    %206 = vector.broadcast %205 : vector<1x8x32xf32> to vector<4x8x32xf32>
    %207 = vector.broadcast %76 : vector<4x1x32xf32> to vector<4x8x32xf32>
    %208 = arith.mulf %206, %207 : vector<4x8x32xf32>
    %209 = vector.shape_cast %189 : vector<64x32xf32> to vector<1x64x32xf32>
    %210 = vector.shape_cast %209 : vector<1x64x32xf32> to vector<1x64x32xf32>
    %211 = vector.broadcast %210 : vector<1x64x32xf32> to vector<4x64x32xf32>
    %212 = arith.truncf %208 : vector<4x8x32xf32> to vector<4x8x32xbf16>
    %213 = arith.truncf %211 : vector<4x64x32xf32> to vector<4x64x32xbf16>
    "tpu.trace_start"() <{level = 10 : i32, message = "hqc,hkc->hqk"}> : () -> ()
    %cst_127 = arith.constant dense<0.000000e+00> : vector<4x8x64xf32>
    %214 = tpu.matmul %212, %213, %cst_127 {dimension_numbers = #tpu.dot_dimension_numbers<[2], [2], [1], [1], [0, 0, 0, 1, 1, 1], [0], [0]>} : vector<4x8x32xbf16>, vector<4x64x32xbf16>, vector<4x8x64xf32> -> vector<4x8x64xf32>
    "tpu.trace_stop"() : () -> ()
    %215 = arith.addf %214, %63 : vector<4x8x64xf32>
    %cst_128 = arith.constant dense<0xFF800000> : vector<4x8xf32>
    %216 = vector.multi_reduction <maximumf>, %215, %cst_128 [2] : vector<4x8x64xf32> to vector<4x8xf32>
    %217 = vector.shape_cast %216 : vector<4x8xf32> to vector<4x8x1xf32>
    %218 = vector.broadcast %217 : vector<4x8x1xf32> to vector<4x8x64xf32>
    %219 = arith.subf %215, %218 : vector<4x8x64xf32>
    %220 = math.exp %219 : vector<4x8x64xf32>
    %cst_129 = arith.constant dense<0.000000e+00> : vector<4x8xf32>
    %221 = vector.multi_reduction <add>, %220, %cst_129 [2] : vector<4x8x64xf32> to vector<4x8xf32>
    %222 = vector.shape_cast %221 : vector<4x8xf32> to vector<4x8x1xf32>
    %223 = vector.broadcast %222 : vector<4x8x1xf32> to vector<4x8x64xf32>
    %224 = arith.divf %220, %223 : vector<4x8x64xf32>
    %225 = vector.shape_cast %198 : vector<64x32xf32> to vector<1x64x32xf32>
    %226 = vector.broadcast %225 : vector<1x64x32xf32> to vector<4x64x32xf32>
    %227 = vector.broadcast %76 : vector<4x1x32xf32> to vector<4x64x32xf32>
    %228 = arith.mulf %226, %227 : vector<4x64x32xf32>
    %229 = arith.truncf %224 : vector<4x8x64xf32> to vector<4x8x64xbf16>
    %230 = arith.truncf %228 : vector<4x64x32xf32> to vector<4x64x32xbf16>
    "tpu.trace_start"() <{level = 10 : i32, message = "hqk,hkc->hqc"}> : () -> ()
    %cst_130 = arith.constant dense<0.000000e+00> : vector<4x8x32xf32>
    %231 = tpu.matmul %229, %230, %cst_130 {dimension_numbers = #tpu.dot_dimension_numbers<[2], [1], [1], [2], [0, 0, 0, 1, 1, 2], [0], [0]>} : vector<4x8x64xbf16>, vector<4x64x32xbf16>, vector<4x8x32xf32> -> vector<4x8x32xf32>
    "tpu.trace_stop"() : () -> ()
    %cst_131 = arith.constant dense<0.000000e+00> : vector<8x32xf32>
    %232 = vector.multi_reduction <add>, %231, %cst_131 [0] : vector<4x8x32xf32> to vector<8x32xf32>
    %233 = arith.truncf %232 : vector<8x32xf32> to vector<8x32xbf16>
    %234 = arith.truncf %200 : vector<32x32xf32> to vector<32x32xbf16>
    %cst_132 = arith.constant dense<0.000000e+00> : vector<8x32xf32>
    %235 = tpu.matmul %233, %234, %cst_132 {dimension_numbers = #tpu.dot_dimension_numbers<[1], [0], [0], [1], [0, 0, 1, 1], [], []>} : vector<8x32xbf16>, vector<32x32xbf16>, vector<8x32xf32> -> vector<8x32xf32>
    %236 = vector.broadcast %202 : vector<1x32xf32> to vector<8x32xf32>
    %237 = arith.addf %235, %236 : vector<8x32xf32>
    %238 = arith.addf %170, %237 : vector<8x32xf32>
    %c0_133 = arith.constant 0 : index
    %c10 = arith.constant 10 : index
    %c0_134 = arith.constant 0 : index
    %c0_135 = arith.constant 0 : index
    %239 = vector.load %arg12[%c0_133, %c10, %c0_134, %c0_135] : memref<2x15x1x32xf32, #tpu.memory_space<vmem>>, vector<1x1x1x32xf32>
    %240 = vector.shape_cast %239 : vector<1x1x1x32xf32> to vector<1x32xf32>
    %c0_136 = arith.constant 0 : index
    %c11 = arith.constant 11 : index
    %c0_137 = arith.constant 0 : index
    %c0_138 = arith.constant 0 : index
    %241 = vector.load %arg12[%c0_136, %c11, %c0_137, %c0_138] : memref<2x15x1x32xf32, #tpu.memory_space<vmem>>, vector<1x1x1x32xf32>
    %242 = vector.shape_cast %241 : vector<1x1x1x32xf32> to vector<1x32xf32>
    %cst_139 = arith.constant dense<0.000000e+00> : vector<8xf32>
    %243 = vector.multi_reduction <add>, %238, %cst_139 [1] : vector<8x32xf32> to vector<8xf32>
    %244 = vector.shape_cast %243 : vector<8xf32> to vector<8x1xf32>
    %cst_140 = arith.constant 3.200000e+01 : f32
    %245 = vector.broadcast %cst_140 : f32 to vector<8x1xf32>
    %246 = arith.divf %244, %245 : vector<8x1xf32>
    %247 = vector.broadcast %246 : vector<8x1xf32> to vector<8x32xf32>
    %248 = arith.subf %238, %247 : vector<8x32xf32>
    %249 = arith.mulf %248, %248 : vector<8x32xf32>
    %cst_141 = arith.constant dense<0.000000e+00> : vector<8xf32>
    %250 = vector.multi_reduction <add>, %249, %cst_141 [1] : vector<8x32xf32> to vector<8xf32>
    %251 = vector.shape_cast %250 : vector<8xf32> to vector<8x1xf32>
    %cst_142 = arith.constant 3.200000e+01 : f32
    %252 = vector.broadcast %cst_142 : f32 to vector<8x1xf32>
    %253 = arith.divf %251, %252 : vector<8x1xf32>
    %254 = vector.broadcast %246 : vector<8x1xf32> to vector<8x32xf32>
    %255 = arith.subf %238, %254 : vector<8x32xf32>
    %cst_143 = arith.constant 9.99999974E-6 : f32
    %256 = vector.broadcast %cst_143 : f32 to vector<8x1xf32>
    %257 = arith.addf %253, %256 : vector<8x1xf32>
    %258 = math.rsqrt %257 : vector<8x1xf32>
    %259 = vector.broadcast %258 : vector<8x1xf32> to vector<8x32xf32>
    %260 = arith.mulf %255, %259 : vector<8x32xf32>
    %261 = vector.broadcast %240 : vector<1x32xf32> to vector<8x32xf32>
    %262 = arith.mulf %260, %261 : vector<8x32xf32>
    %263 = vector.broadcast %242 : vector<1x32xf32> to vector<8x32xf32>
    %264 = arith.addf %262, %263 : vector<8x32xf32>
    %c0_144 = arith.constant 0 : index
    %c0_145 = arith.constant 0 : index
    %c0_146 = arith.constant 0 : index
    %265 = vector.load %arg10[%c0_144, %c0_145, %c0_146] : memref<2x32x64xf32, #tpu.memory_space<vmem>>, vector<1x32x64xf32>
    %266 = vector.shape_cast %265 : vector<1x32x64xf32> to vector<32x64xf32>
    %267 = arith.truncf %264 : vector<8x32xf32> to vector<8x32xbf16>
    %268 = arith.truncf %266 : vector<32x64xf32> to vector<32x64xbf16>
    %cst_147 = arith.constant dense<0.000000e+00> : vector<8x64xf32>
    %269 = tpu.matmul %267, %268, %cst_147 {dimension_numbers = #tpu.dot_dimension_numbers<[1], [0], [0], [1], [0, 0, 1, 1], [], []>} : vector<8x32xbf16>, vector<32x64xbf16>, vector<8x64xf32> -> vector<8x64xf32>
    %c0_148 = arith.constant 0 : index
    %c0_149 = arith.constant 0 : index
    %c0_150 = arith.constant 0 : index
    %270 = vector.load %arg13[%c0_148, %c0_149, %c0_150] : memref<2x1x64xf32, #tpu.memory_space<vmem>>, vector<1x1x64xf32>
    %271 = vector.shape_cast %270 : vector<1x1x64xf32> to vector<1x64xf32>
    %272 = vector.broadcast %271 : vector<1x64xf32> to vector<8x64xf32>
    %273 = arith.addf %269, %272 : vector<8x64xf32>
    %cst_151 = arith.constant 0.000000e+00 : f32
    %274 = vector.broadcast %cst_151 : f32 to vector<8x64xf32>
    %275 = arith.maximumf %273, %274 : vector<8x64xf32>
    %c0_152 = arith.constant 0 : index
    %c0_153 = arith.constant 0 : index
    %c0_154 = arith.constant 0 : index
    %276 = vector.load %arg11[%c0_152, %c0_153, %c0_154] : memref<2x64x32xf32, #tpu.memory_space<vmem>>, vector<1x64x32xf32>
    %277 = vector.shape_cast %276 : vector<1x64x32xf32> to vector<64x32xf32>
    %278 = arith.truncf %275 : vector<8x64xf32> to vector<8x64xbf16>
    %279 = arith.truncf %277 : vector<64x32xf32> to vector<64x32xbf16>
    %cst_155 = arith.constant dense<0.000000e+00> : vector<8x32xf32>
    %280 = tpu.matmul %278, %279, %cst_155 {dimension_numbers = #tpu.dot_dimension_numbers<[1], [0], [0], [1], [0, 0, 1, 1], [], []>} : vector<8x64xbf16>, vector<64x32xbf16>, vector<8x32xf32> -> vector<8x32xf32>
    %c0_156 = arith.constant 0 : index
    %c14 = arith.constant 14 : index
    %c0_157 = arith.constant 0 : index
    %c0_158 = arith.constant 0 : index
    %281 = vector.load %arg12[%c0_156, %c14, %c0_157, %c0_158] : memref<2x15x1x32xf32, #tpu.memory_space<vmem>>, vector<1x1x1x32xf32>
    %282 = vector.shape_cast %281 : vector<1x1x1x32xf32> to vector<1x32xf32>
    %283 = vector.broadcast %282 : vector<1x32xf32> to vector<8x32xf32>
    %284 = arith.addf %280, %283 : vector<8x32xf32>
    %285 = arith.addf %264, %284 : vector<8x32xf32>
    %c0_159 = arith.constant 0 : index
    %c12 = arith.constant 12 : index
    %c0_160 = arith.constant 0 : index
    %c0_161 = arith.constant 0 : index
    %286 = vector.load %arg12[%c0_159, %c12, %c0_160, %c0_161] : memref<2x15x1x32xf32, #tpu.memory_space<vmem>>, vector<1x1x1x32xf32>
    %287 = vector.shape_cast %286 : vector<1x1x1x32xf32> to vector<1x32xf32>
    %c0_162 = arith.constant 0 : index
    %c13 = arith.constant 13 : index
    %c0_163 = arith.constant 0 : index
    %c0_164 = arith.constant 0 : index
    %288 = vector.load %arg12[%c0_162, %c13, %c0_163, %c0_164] : memref<2x15x1x32xf32, #tpu.memory_space<vmem>>, vector<1x1x1x32xf32>
    %289 = vector.shape_cast %288 : vector<1x1x1x32xf32> to vector<1x32xf32>
    %cst_165 = arith.constant dense<0.000000e+00> : vector<8xf32>
    %290 = vector.multi_reduction <add>, %285, %cst_165 [1] : vector<8x32xf32> to vector<8xf32>
    %291 = vector.shape_cast %290 : vector<8xf32> to vector<8x1xf32>
    %cst_166 = arith.constant 3.200000e+01 : f32
    %292 = vector.broadcast %cst_166 : f32 to vector<8x1xf32>
    %293 = arith.divf %291, %292 : vector<8x1xf32>
    %294 = vector.broadcast %293 : vector<8x1xf32> to vector<8x32xf32>
    %295 = arith.subf %285, %294 : vector<8x32xf32>
    %296 = arith.mulf %295, %295 : vector<8x32xf32>
    %cst_167 = arith.constant dense<0.000000e+00> : vector<8xf32>
    %297 = vector.multi_reduction <add>, %296, %cst_167 [1] : vector<8x32xf32> to vector<8xf32>
    %298 = vector.shape_cast %297 : vector<8xf32> to vector<8x1xf32>
    %cst_168 = arith.constant 3.200000e+01 : f32
    %299 = vector.broadcast %cst_168 : f32 to vector<8x1xf32>
    %300 = arith.divf %298, %299 : vector<8x1xf32>
    %301 = vector.broadcast %293 : vector<8x1xf32> to vector<8x32xf32>
    %302 = arith.subf %285, %301 : vector<8x32xf32>
    %cst_169 = arith.constant 9.99999974E-6 : f32
    %303 = vector.broadcast %cst_169 : f32 to vector<8x1xf32>
    %304 = arith.addf %300, %303 : vector<8x1xf32>
    %305 = math.rsqrt %304 : vector<8x1xf32>
    %306 = vector.broadcast %305 : vector<8x1xf32> to vector<8x32xf32>
    %307 = arith.mulf %302, %306 : vector<8x32xf32>
    %308 = vector.broadcast %287 : vector<1x32xf32> to vector<8x32xf32>
    %309 = arith.mulf %307, %308 : vector<8x32xf32>
    %310 = vector.broadcast %289 : vector<1x32xf32> to vector<8x32xf32>
    %311 = arith.addf %309, %310 : vector<8x32xf32>
    %312 = arith.addf %311, %59 : vector<8x32xf32>
    %c1_170 = arith.constant 1 : index
    %c0_171 = arith.constant 0 : index
    %c0_172 = arith.constant 0 : index
    %c0_173 = arith.constant 0 : index
    %313 = vector.load %arg9[%c1_170, %c0_171, %c0_172, %c0_173] : memref<2x8x32x32xf32, #tpu.memory_space<vmem>>, vector<1x1x32x32xf32>
    %314 = vector.shape_cast %313 : vector<1x1x32x32xf32> to vector<32x32xf32>
    %315 = arith.truncf %312 : vector<8x32xf32> to vector<8x32xbf16>
    %316 = arith.truncf %314 : vector<32x32xf32> to vector<32x32xbf16>
    %cst_174 = arith.constant dense<0.000000e+00> : vector<8x32xf32>
    %317 = tpu.matmul %315, %316, %cst_174 {dimension_numbers = #tpu.dot_dimension_numbers<[1], [0], [0], [1], [0, 0, 1, 1], [], []>} : vector<8x32xbf16>, vector<32x32xbf16>, vector<8x32xf32> -> vector<8x32xf32>
    %c1_175 = arith.constant 1 : index
    %c0_176 = arith.constant 0 : index
    %c0_177 = arith.constant 0 : index
    %c0_178 = arith.constant 0 : index
    %318 = vector.load %arg12[%c1_175, %c0_176, %c0_177, %c0_178] : memref<2x15x1x32xf32, #tpu.memory_space<vmem>>, vector<1x1x1x32xf32>
    %319 = vector.shape_cast %318 : vector<1x1x1x32xf32> to vector<1x32xf32>
    %320 = vector.broadcast %319 : vector<1x32xf32> to vector<8x32xf32>
    %321 = arith.addf %317, %320 : vector<8x32xf32>
    %c1_179 = arith.constant 1 : index
    %c1_180 = arith.constant 1 : index
    %c0_181 = arith.constant 0 : index
    %c0_182 = arith.constant 0 : index
    %322 = vector.load %arg9[%c1_179, %c1_180, %c0_181, %c0_182] : memref<2x8x32x32xf32, #tpu.memory_space<vmem>>, vector<1x1x32x32xf32>
    %323 = vector.shape_cast %322 : vector<1x1x32x32xf32> to vector<32x32xf32>
    %324 = arith.truncf %312 : vector<8x32xf32> to vector<8x32xbf16>
    %325 = arith.truncf %323 : vector<32x32xf32> to vector<32x32xbf16>
    %cst_183 = arith.constant dense<0.000000e+00> : vector<8x32xf32>
    %326 = tpu.matmul %324, %325, %cst_183 {dimension_numbers = #tpu.dot_dimension_numbers<[1], [0], [0], [1], [0, 0, 1, 1], [], []>} : vector<8x32xbf16>, vector<32x32xbf16>, vector<8x32xf32> -> vector<8x32xf32>
    %c1_184 = arith.constant 1 : index
    %c1_185 = arith.constant 1 : index
    %c0_186 = arith.constant 0 : index
    %c0_187 = arith.constant 0 : index
    %327 = vector.load %arg12[%c1_184, %c1_185, %c0_186, %c0_187] : memref<2x15x1x32xf32, #tpu.memory_space<vmem>>, vector<1x1x1x32xf32>
    %328 = vector.shape_cast %327 : vector<1x1x1x32xf32> to vector<1x32xf32>
    %329 = vector.broadcast %328 : vector<1x32xf32> to vector<8x32xf32>
    %330 = arith.addf %326, %329 : vector<8x32xf32>
    %c1_188 = arith.constant 1 : index
    %c2_189 = arith.constant 2 : index
    %c0_190 = arith.constant 0 : index
    %c0_191 = arith.constant 0 : index
    %331 = vector.load %arg9[%c1_188, %c2_189, %c0_190, %c0_191] : memref<2x8x32x32xf32, #tpu.memory_space<vmem>>, vector<1x1x32x32xf32>
    %332 = vector.shape_cast %331 : vector<1x1x32x32xf32> to vector<32x32xf32>
    %333 = arith.truncf %311 : vector<8x32xf32> to vector<8x32xbf16>
    %334 = arith.truncf %332 : vector<32x32xf32> to vector<32x32xbf16>
    %cst_192 = arith.constant dense<0.000000e+00> : vector<8x32xf32>
    %335 = tpu.matmul %333, %334, %cst_192 {dimension_numbers = #tpu.dot_dimension_numbers<[1], [0], [0], [1], [0, 0, 1, 1], [], []>} : vector<8x32xbf16>, vector<32x32xbf16>, vector<8x32xf32> -> vector<8x32xf32>
    %c1_193 = arith.constant 1 : index
    %c2_194 = arith.constant 2 : index
    %c0_195 = arith.constant 0 : index
    %c0_196 = arith.constant 0 : index
    %336 = vector.load %arg12[%c1_193, %c2_194, %c0_195, %c0_196] : memref<2x15x1x32xf32, #tpu.memory_space<vmem>>, vector<1x1x1x32xf32>
    %337 = vector.shape_cast %336 : vector<1x1x1x32xf32> to vector<1x32xf32>
    %338 = vector.broadcast %337 : vector<1x32xf32> to vector<8x32xf32>
    %339 = arith.addf %335, %338 : vector<8x32xf32>
    %c1_197 = arith.constant 1 : index
    %c3_198 = arith.constant 3 : index
    %c0_199 = arith.constant 0 : index
    %c0_200 = arith.constant 0 : index
    %340 = vector.load %arg9[%c1_197, %c3_198, %c0_199, %c0_200] : memref<2x8x32x32xf32, #tpu.memory_space<vmem>>, vector<1x1x32x32xf32>
    %341 = vector.shape_cast %340 : vector<1x1x32x32xf32> to vector<32x32xf32>
    %c1_201 = arith.constant 1 : index
    %c3_202 = arith.constant 3 : index
    %c0_203 = arith.constant 0 : index
    %c0_204 = arith.constant 0 : index
    %342 = vector.load %arg12[%c1_201, %c3_202, %c0_203, %c0_204] : memref<2x15x1x32xf32, #tpu.memory_space<vmem>>, vector<1x1x1x32xf32>
    %343 = vector.shape_cast %342 : vector<1x1x1x32xf32> to vector<1x32xf32>
    %cst_205 = arith.constant 0.353553385 : f32
    %344 = vector.broadcast %cst_205 : f32 to vector<8x32xf32>
    %345 = arith.mulf %321, %344 : vector<8x32xf32>
    %346 = vector.shape_cast %345 : vector<8x32xf32> to vector<1x8x32xf32>
    %347 = vector.broadcast %346 : vector<1x8x32xf32> to vector<4x8x32xf32>
    %348 = vector.broadcast %76 : vector<4x1x32xf32> to vector<4x8x32xf32>
    %349 = arith.mulf %347, %348 : vector<4x8x32xf32>
    %350 = vector.shape_cast %330 : vector<8x32xf32> to vector<1x8x32xf32>
    %351 = vector.shape_cast %350 : vector<1x8x32xf32> to vector<1x8x32xf32>
    %352 = vector.broadcast %351 : vector<1x8x32xf32> to vector<4x8x32xf32>
    %353 = arith.truncf %349 : vector<4x8x32xf32> to vector<4x8x32xbf16>
    %354 = arith.truncf %352 : vector<4x8x32xf32> to vector<4x8x32xbf16>
    "tpu.trace_start"() <{level = 10 : i32, message = "hqc,hkc->hqk"}> : () -> ()
    %cst_206 = arith.constant dense<0.000000e+00> : vector<4x8x8xf32>
    %355 = tpu.matmul %353, %354, %cst_206 {dimension_numbers = #tpu.dot_dimension_numbers<[2], [2], [1], [1], [0, 0, 0, 1, 1, 1], [0], [0]>} : vector<4x8x32xbf16>, vector<4x8x32xbf16>, vector<4x8x8xf32> -> vector<4x8x8xf32>
    "tpu.trace_stop"() : () -> ()
    %cst_207 = arith.constant dense<0xFF800000> : vector<4x8xf32>
    %356 = vector.multi_reduction <maximumf>, %355, %cst_207 [2] : vector<4x8x8xf32> to vector<4x8xf32>
    %357 = vector.shape_cast %356 : vector<4x8xf32> to vector<4x8x1xf32>
    %358 = vector.broadcast %357 : vector<4x8x1xf32> to vector<4x8x8xf32>
    %359 = arith.subf %355, %358 : vector<4x8x8xf32>
    %360 = math.exp %359 : vector<4x8x8xf32>
    %cst_208 = arith.constant dense<0.000000e+00> : vector<4x8xf32>
    %361 = vector.multi_reduction <add>, %360, %cst_208 [2] : vector<4x8x8xf32> to vector<4x8xf32>
    %362 = vector.shape_cast %361 : vector<4x8xf32> to vector<4x8x1xf32>
    %363 = vector.broadcast %362 : vector<4x8x1xf32> to vector<4x8x8xf32>
    %364 = arith.divf %360, %363 : vector<4x8x8xf32>
    %365 = vector.shape_cast %339 : vector<8x32xf32> to vector<1x8x32xf32>
    %366 = vector.broadcast %365 : vector<1x8x32xf32> to vector<4x8x32xf32>
    %367 = vector.broadcast %76 : vector<4x1x32xf32> to vector<4x8x32xf32>
    %368 = arith.mulf %366, %367 : vector<4x8x32xf32>
    %369 = arith.truncf %364 : vector<4x8x8xf32> to vector<4x8x8xbf16>
    %370 = arith.truncf %368 : vector<4x8x32xf32> to vector<4x8x32xbf16>
    "tpu.trace_start"() <{level = 10 : i32, message = "hqk,hkc->hqc"}> : () -> ()
    %cst_209 = arith.constant dense<0.000000e+00> : vector<4x8x32xf32>
    %371 = tpu.matmul %369, %370, %cst_209 {dimension_numbers = #tpu.dot_dimension_numbers<[2], [1], [1], [2], [0, 0, 0, 1, 1, 2], [0], [0]>} : vector<4x8x8xbf16>, vector<4x8x32xbf16>, vector<4x8x32xf32> -> vector<4x8x32xf32>
    "tpu.trace_stop"() : () -> ()
    %cst_210 = arith.constant dense<0.000000e+00> : vector<8x32xf32>
    %372 = vector.multi_reduction <add>, %371, %cst_210 [0] : vector<4x8x32xf32> to vector<8x32xf32>
    %373 = arith.truncf %372 : vector<8x32xf32> to vector<8x32xbf16>
    %374 = arith.truncf %341 : vector<32x32xf32> to vector<32x32xbf16>
    %cst_211 = arith.constant dense<0.000000e+00> : vector<8x32xf32>
    %375 = tpu.matmul %373, %374, %cst_211 {dimension_numbers = #tpu.dot_dimension_numbers<[1], [0], [0], [1], [0, 0, 1, 1], [], []>} : vector<8x32xbf16>, vector<32x32xbf16>, vector<8x32xf32> -> vector<8x32xf32>
    %376 = vector.broadcast %343 : vector<1x32xf32> to vector<8x32xf32>
    %377 = arith.addf %375, %376 : vector<8x32xf32>
    %378 = arith.addf %311, %377 : vector<8x32xf32>
    %c1_212 = arith.constant 1 : index
    %c8_213 = arith.constant 8 : index
    %c0_214 = arith.constant 0 : index
    %c0_215 = arith.constant 0 : index
    %379 = vector.load %arg12[%c1_212, %c8_213, %c0_214, %c0_215] : memref<2x15x1x32xf32, #tpu.memory_space<vmem>>, vector<1x1x1x32xf32>
    %380 = vector.shape_cast %379 : vector<1x1x1x32xf32> to vector<1x32xf32>
    %c1_216 = arith.constant 1 : index
    %c9_217 = arith.constant 9 : index
    %c0_218 = arith.constant 0 : index
    %c0_219 = arith.constant 0 : index
    %381 = vector.load %arg12[%c1_216, %c9_217, %c0_218, %c0_219] : memref<2x15x1x32xf32, #tpu.memory_space<vmem>>, vector<1x1x1x32xf32>
    %382 = vector.shape_cast %381 : vector<1x1x1x32xf32> to vector<1x32xf32>
    %cst_220 = arith.constant dense<0.000000e+00> : vector<8xf32>
    %383 = vector.multi_reduction <add>, %378, %cst_220 [1] : vector<8x32xf32> to vector<8xf32>
    %384 = vector.shape_cast %383 : vector<8xf32> to vector<8x1xf32>
    %cst_221 = arith.constant 3.200000e+01 : f32
    %385 = vector.broadcast %cst_221 : f32 to vector<8x1xf32>
    %386 = arith.divf %384, %385 : vector<8x1xf32>
    %387 = vector.broadcast %386 : vector<8x1xf32> to vector<8x32xf32>
    %388 = arith.subf %378, %387 : vector<8x32xf32>
    %389 = arith.mulf %388, %388 : vector<8x32xf32>
    %cst_222 = arith.constant dense<0.000000e+00> : vector<8xf32>
    %390 = vector.multi_reduction <add>, %389, %cst_222 [1] : vector<8x32xf32> to vector<8xf32>
    %391 = vector.shape_cast %390 : vector<8xf32> to vector<8x1xf32>
    %cst_223 = arith.constant 3.200000e+01 : f32
    %392 = vector.broadcast %cst_223 : f32 to vector<8x1xf32>
    %393 = arith.divf %391, %392 : vector<8x1xf32>
    %394 = vector.broadcast %386 : vector<8x1xf32> to vector<8x32xf32>
    %395 = arith.subf %378, %394 : vector<8x32xf32>
    %cst_224 = arith.constant 9.99999974E-6 : f32
    %396 = vector.broadcast %cst_224 : f32 to vector<8x1xf32>
    %397 = arith.addf %393, %396 : vector<8x1xf32>
    %398 = math.rsqrt %397 : vector<8x1xf32>
    %399 = vector.broadcast %398 : vector<8x1xf32> to vector<8x32xf32>
    %400 = arith.mulf %395, %399 : vector<8x32xf32>
    %401 = vector.broadcast %380 : vector<1x32xf32> to vector<8x32xf32>
    %402 = arith.mulf %400, %401 : vector<8x32xf32>
    %403 = vector.broadcast %382 : vector<1x32xf32> to vector<8x32xf32>
    %404 = arith.addf %402, %403 : vector<8x32xf32>
    %405 = arith.addf %404, %59 : vector<8x32xf32>
    %c1_225 = arith.constant 1 : index
    %c4_226 = arith.constant 4 : index
    %c0_227 = arith.constant 0 : index
    %c0_228 = arith.constant 0 : index
    %406 = vector.load %arg9[%c1_225, %c4_226, %c0_227, %c0_228] : memref<2x8x32x32xf32, #tpu.memory_space<vmem>>, vector<1x1x32x32xf32>
    %407 = vector.shape_cast %406 : vector<1x1x32x32xf32> to vector<32x32xf32>
    %408 = arith.truncf %405 : vector<8x32xf32> to vector<8x32xbf16>
    %409 = arith.truncf %407 : vector<32x32xf32> to vector<32x32xbf16>
    %cst_229 = arith.constant dense<0.000000e+00> : vector<8x32xf32>
    %410 = tpu.matmul %408, %409, %cst_229 {dimension_numbers = #tpu.dot_dimension_numbers<[1], [0], [0], [1], [0, 0, 1, 1], [], []>} : vector<8x32xbf16>, vector<32x32xbf16>, vector<8x32xf32> -> vector<8x32xf32>
    %c1_230 = arith.constant 1 : index
    %c4_231 = arith.constant 4 : index
    %c0_232 = arith.constant 0 : index
    %c0_233 = arith.constant 0 : index
    %411 = vector.load %arg12[%c1_230, %c4_231, %c0_232, %c0_233] : memref<2x15x1x32xf32, #tpu.memory_space<vmem>>, vector<1x1x1x32xf32>
    %412 = vector.shape_cast %411 : vector<1x1x1x32xf32> to vector<1x32xf32>
    %413 = vector.broadcast %412 : vector<1x32xf32> to vector<8x32xf32>
    %414 = arith.addf %410, %413 : vector<8x32xf32>
    %c1_234 = arith.constant 1 : index
    %c5_235 = arith.constant 5 : index
    %c0_236 = arith.constant 0 : index
    %c0_237 = arith.constant 0 : index
    %415 = vector.load %arg9[%c1_234, %c5_235, %c0_236, %c0_237] : memref<2x8x32x32xf32, #tpu.memory_space<vmem>>, vector<1x1x32x32xf32>
    %416 = vector.shape_cast %415 : vector<1x1x32x32xf32> to vector<32x32xf32>
    %417 = arith.truncf %60 : vector<64x32xf32> to vector<64x32xbf16>
    %418 = arith.truncf %416 : vector<32x32xf32> to vector<32x32xbf16>
    %cst_238 = arith.constant dense<0.000000e+00> : vector<64x32xf32>
    %419 = tpu.matmul %417, %418, %cst_238 {dimension_numbers = #tpu.dot_dimension_numbers<[1], [0], [0], [1], [0, 0, 1, 1], [], []>} : vector<64x32xbf16>, vector<32x32xbf16>, vector<64x32xf32> -> vector<64x32xf32>
    %c1_239 = arith.constant 1 : index
    %c5_240 = arith.constant 5 : index
    %c0_241 = arith.constant 0 : index
    %c0_242 = arith.constant 0 : index
    %420 = vector.load %arg12[%c1_239, %c5_240, %c0_241, %c0_242] : memref<2x15x1x32xf32, #tpu.memory_space<vmem>>, vector<1x1x1x32xf32>
    %421 = vector.shape_cast %420 : vector<1x1x1x32xf32> to vector<1x32xf32>
    %422 = vector.broadcast %421 : vector<1x32xf32> to vector<64x32xf32>
    %423 = arith.addf %419, %422 : vector<64x32xf32>
    %c1_243 = arith.constant 1 : index
    %c6_244 = arith.constant 6 : index
    %c0_245 = arith.constant 0 : index
    %c0_246 = arith.constant 0 : index
    %424 = vector.load %arg9[%c1_243, %c6_244, %c0_245, %c0_246] : memref<2x8x32x32xf32, #tpu.memory_space<vmem>>, vector<1x1x32x32xf32>
    %425 = vector.shape_cast %424 : vector<1x1x32x32xf32> to vector<32x32xf32>
    %426 = arith.truncf %53 : vector<64x32xf32> to vector<64x32xbf16>
    %427 = arith.truncf %425 : vector<32x32xf32> to vector<32x32xbf16>
    %cst_247 = arith.constant dense<0.000000e+00> : vector<64x32xf32>
    %428 = tpu.matmul %426, %427, %cst_247 {dimension_numbers = #tpu.dot_dimension_numbers<[1], [0], [0], [1], [0, 0, 1, 1], [], []>} : vector<64x32xbf16>, vector<32x32xbf16>, vector<64x32xf32> -> vector<64x32xf32>
    %c1_248 = arith.constant 1 : index
    %c6_249 = arith.constant 6 : index
    %c0_250 = arith.constant 0 : index
    %c0_251 = arith.constant 0 : index
    %429 = vector.load %arg12[%c1_248, %c6_249, %c0_250, %c0_251] : memref<2x15x1x32xf32, #tpu.memory_space<vmem>>, vector<1x1x1x32xf32>
    %430 = vector.shape_cast %429 : vector<1x1x1x32xf32> to vector<1x32xf32>
    %431 = vector.broadcast %430 : vector<1x32xf32> to vector<64x32xf32>
    %432 = arith.addf %428, %431 : vector<64x32xf32>
    %c1_252 = arith.constant 1 : index
    %c7_253 = arith.constant 7 : index
    %c0_254 = arith.constant 0 : index
    %c0_255 = arith.constant 0 : index
    %433 = vector.load %arg9[%c1_252, %c7_253, %c0_254, %c0_255] : memref<2x8x32x32xf32, #tpu.memory_space<vmem>>, vector<1x1x32x32xf32>
    %434 = vector.shape_cast %433 : vector<1x1x32x32xf32> to vector<32x32xf32>
    %c1_256 = arith.constant 1 : index
    %c7_257 = arith.constant 7 : index
    %c0_258 = arith.constant 0 : index
    %c0_259 = arith.constant 0 : index
    %435 = vector.load %arg12[%c1_256, %c7_257, %c0_258, %c0_259] : memref<2x15x1x32xf32, #tpu.memory_space<vmem>>, vector<1x1x1x32xf32>
    %436 = vector.shape_cast %435 : vector<1x1x1x32xf32> to vector<1x32xf32>
    %cst_260 = arith.constant 0.353553385 : f32
    %437 = vector.broadcast %cst_260 : f32 to vector<8x32xf32>
    %438 = arith.mulf %414, %437 : vector<8x32xf32>
    %439 = vector.shape_cast %438 : vector<8x32xf32> to vector<1x8x32xf32>
    %440 = vector.broadcast %439 : vector<1x8x32xf32> to vector<4x8x32xf32>
    %441 = vector.broadcast %76 : vector<4x1x32xf32> to vector<4x8x32xf32>
    %442 = arith.mulf %440, %441 : vector<4x8x32xf32>
    %443 = vector.shape_cast %423 : vector<64x32xf32> to vector<1x64x32xf32>
    %444 = vector.shape_cast %443 : vector<1x64x32xf32> to vector<1x64x32xf32>
    %445 = vector.broadcast %444 : vector<1x64x32xf32> to vector<4x64x32xf32>
    %446 = arith.truncf %442 : vector<4x8x32xf32> to vector<4x8x32xbf16>
    %447 = arith.truncf %445 : vector<4x64x32xf32> to vector<4x64x32xbf16>
    "tpu.trace_start"() <{level = 10 : i32, message = "hqc,hkc->hqk"}> : () -> ()
    %cst_261 = arith.constant dense<0.000000e+00> : vector<4x8x64xf32>
    %448 = tpu.matmul %446, %447, %cst_261 {dimension_numbers = #tpu.dot_dimension_numbers<[2], [2], [1], [1], [0, 0, 0, 1, 1, 1], [0], [0]>} : vector<4x8x32xbf16>, vector<4x64x32xbf16>, vector<4x8x64xf32> -> vector<4x8x64xf32>
    "tpu.trace_stop"() : () -> ()
    %449 = arith.addf %448, %63 : vector<4x8x64xf32>
    %cst_262 = arith.constant dense<0xFF800000> : vector<4x8xf32>
    %450 = vector.multi_reduction <maximumf>, %449, %cst_262 [2] : vector<4x8x64xf32> to vector<4x8xf32>
    %451 = vector.shape_cast %450 : vector<4x8xf32> to vector<4x8x1xf32>
    %452 = vector.broadcast %451 : vector<4x8x1xf32> to vector<4x8x64xf32>
    %453 = arith.subf %449, %452 : vector<4x8x64xf32>
    %454 = math.exp %453 : vector<4x8x64xf32>
    %cst_263 = arith.constant dense<0.000000e+00> : vector<4x8xf32>
    %455 = vector.multi_reduction <add>, %454, %cst_263 [2] : vector<4x8x64xf32> to vector<4x8xf32>
    %456 = vector.shape_cast %455 : vector<4x8xf32> to vector<4x8x1xf32>
    %457 = vector.broadcast %456 : vector<4x8x1xf32> to vector<4x8x64xf32>
    %458 = arith.divf %454, %457 : vector<4x8x64xf32>
    %459 = vector.shape_cast %432 : vector<64x32xf32> to vector<1x64x32xf32>
    %460 = vector.broadcast %459 : vector<1x64x32xf32> to vector<4x64x32xf32>
    %461 = vector.broadcast %76 : vector<4x1x32xf32> to vector<4x64x32xf32>
    %462 = arith.mulf %460, %461 : vector<4x64x32xf32>
    %463 = arith.truncf %458 : vector<4x8x64xf32> to vector<4x8x64xbf16>
    %464 = arith.truncf %462 : vector<4x64x32xf32> to vector<4x64x32xbf16>
    "tpu.trace_start"() <{level = 10 : i32, message = "hqk,hkc->hqc"}> : () -> ()
    %cst_264 = arith.constant dense<0.000000e+00> : vector<4x8x32xf32>
    %465 = tpu.matmul %463, %464, %cst_264 {dimension_numbers = #tpu.dot_dimension_numbers<[2], [1], [1], [2], [0, 0, 0, 1, 1, 2], [0], [0]>} : vector<4x8x64xbf16>, vector<4x64x32xbf16>, vector<4x8x32xf32> -> vector<4x8x32xf32>
    "tpu.trace_stop"() : () -> ()
    %cst_265 = arith.constant dense<0.000000e+00> : vector<8x32xf32>
    %466 = vector.multi_reduction <add>, %465, %cst_265 [0] : vector<4x8x32xf32> to vector<8x32xf32>
    %467 = arith.truncf %466 : vector<8x32xf32> to vector<8x32xbf16>
    %468 = arith.truncf %434 : vector<32x32xf32> to vector<32x32xbf16>
    %cst_266 = arith.constant dense<0.000000e+00> : vector<8x32xf32>
    %469 = tpu.matmul %467, %468, %cst_266 {dimension_numbers = #tpu.dot_dimension_numbers<[1], [0], [0], [1], [0, 0, 1, 1], [], []>} : vector<8x32xbf16>, vector<32x32xbf16>, vector<8x32xf32> -> vector<8x32xf32>
    %470 = vector.broadcast %436 : vector<1x32xf32> to vector<8x32xf32>
    %471 = arith.addf %469, %470 : vector<8x32xf32>
    %472 = arith.addf %404, %471 : vector<8x32xf32>
    %c1_267 = arith.constant 1 : index
    %c10_268 = arith.constant 10 : index
    %c0_269 = arith.constant 0 : index
    %c0_270 = arith.constant 0 : index
    %473 = vector.load %arg12[%c1_267, %c10_268, %c0_269, %c0_270] : memref<2x15x1x32xf32, #tpu.memory_space<vmem>>, vector<1x1x1x32xf32>
    %474 = vector.shape_cast %473 : vector<1x1x1x32xf32> to vector<1x32xf32>
    %c1_271 = arith.constant 1 : index
    %c11_272 = arith.constant 11 : index
    %c0_273 = arith.constant 0 : index
    %c0_274 = arith.constant 0 : index
    %475 = vector.load %arg12[%c1_271, %c11_272, %c0_273, %c0_274] : memref<2x15x1x32xf32, #tpu.memory_space<vmem>>, vector<1x1x1x32xf32>
    %476 = vector.shape_cast %475 : vector<1x1x1x32xf32> to vector<1x32xf32>
    %cst_275 = arith.constant dense<0.000000e+00> : vector<8xf32>
    %477 = vector.multi_reduction <add>, %472, %cst_275 [1] : vector<8x32xf32> to vector<8xf32>
    %478 = vector.shape_cast %477 : vector<8xf32> to vector<8x1xf32>
    %cst_276 = arith.constant 3.200000e+01 : f32
    %479 = vector.broadcast %cst_276 : f32 to vector<8x1xf32>
    %480 = arith.divf %478, %479 : vector<8x1xf32>
    %481 = vector.broadcast %480 : vector<8x1xf32> to vector<8x32xf32>
    %482 = arith.subf %472, %481 : vector<8x32xf32>
    %483 = arith.mulf %482, %482 : vector<8x32xf32>
    %cst_277 = arith.constant dense<0.000000e+00> : vector<8xf32>
    %484 = vector.multi_reduction <add>, %483, %cst_277 [1] : vector<8x32xf32> to vector<8xf32>
    %485 = vector.shape_cast %484 : vector<8xf32> to vector<8x1xf32>
    %cst_278 = arith.constant 3.200000e+01 : f32
    %486 = vector.broadcast %cst_278 : f32 to vector<8x1xf32>
    %487 = arith.divf %485, %486 : vector<8x1xf32>
    %488 = vector.broadcast %480 : vector<8x1xf32> to vector<8x32xf32>
    %489 = arith.subf %472, %488 : vector<8x32xf32>
    %cst_279 = arith.constant 9.99999974E-6 : f32
    %490 = vector.broadcast %cst_279 : f32 to vector<8x1xf32>
    %491 = arith.addf %487, %490 : vector<8x1xf32>
    %492 = math.rsqrt %491 : vector<8x1xf32>
    %493 = vector.broadcast %492 : vector<8x1xf32> to vector<8x32xf32>
    %494 = arith.mulf %489, %493 : vector<8x32xf32>
    %495 = vector.broadcast %474 : vector<1x32xf32> to vector<8x32xf32>
    %496 = arith.mulf %494, %495 : vector<8x32xf32>
    %497 = vector.broadcast %476 : vector<1x32xf32> to vector<8x32xf32>
    %498 = arith.addf %496, %497 : vector<8x32xf32>
    %c1_280 = arith.constant 1 : index
    %c0_281 = arith.constant 0 : index
    %c0_282 = arith.constant 0 : index
    %499 = vector.load %arg10[%c1_280, %c0_281, %c0_282] : memref<2x32x64xf32, #tpu.memory_space<vmem>>, vector<1x32x64xf32>
    %500 = vector.shape_cast %499 : vector<1x32x64xf32> to vector<32x64xf32>
    %501 = arith.truncf %498 : vector<8x32xf32> to vector<8x32xbf16>
    %502 = arith.truncf %500 : vector<32x64xf32> to vector<32x64xbf16>
    %cst_283 = arith.constant dense<0.000000e+00> : vector<8x64xf32>
    %503 = tpu.matmul %501, %502, %cst_283 {dimension_numbers = #tpu.dot_dimension_numbers<[1], [0], [0], [1], [0, 0, 1, 1], [], []>} : vector<8x32xbf16>, vector<32x64xbf16>, vector<8x64xf32> -> vector<8x64xf32>
    %c1_284 = arith.constant 1 : index
    %c0_285 = arith.constant 0 : index
    %c0_286 = arith.constant 0 : index
    %504 = vector.load %arg13[%c1_284, %c0_285, %c0_286] : memref<2x1x64xf32, #tpu.memory_space<vmem>>, vector<1x1x64xf32>
    %505 = vector.shape_cast %504 : vector<1x1x64xf32> to vector<1x64xf32>
    %506 = vector.broadcast %505 : vector<1x64xf32> to vector<8x64xf32>
    %507 = arith.addf %503, %506 : vector<8x64xf32>
    %cst_287 = arith.constant 0.000000e+00 : f32
    %508 = vector.broadcast %cst_287 : f32 to vector<8x64xf32>
    %509 = arith.maximumf %507, %508 : vector<8x64xf32>
    %c1_288 = arith.constant 1 : index
    %c0_289 = arith.constant 0 : index
    %c0_290 = arith.constant 0 : index
    %510 = vector.load %arg11[%c1_288, %c0_289, %c0_290] : memref<2x64x32xf32, #tpu.memory_space<vmem>>, vector<1x64x32xf32>
    %511 = vector.shape_cast %510 : vector<1x64x32xf32> to vector<64x32xf32>
    %512 = arith.truncf %509 : vector<8x64xf32> to vector<8x64xbf16>
    %513 = arith.truncf %511 : vector<64x32xf32> to vector<64x32xbf16>
    %cst_291 = arith.constant dense<0.000000e+00> : vector<8x32xf32>
    %514 = tpu.matmul %512, %513, %cst_291 {dimension_numbers = #tpu.dot_dimension_numbers<[1], [0], [0], [1], [0, 0, 1, 1], [], []>} : vector<8x64xbf16>, vector<64x32xbf16>, vector<8x32xf32> -> vector<8x32xf32>
    %c1_292 = arith.constant 1 : index
    %c14_293 = arith.constant 14 : index
    %c0_294 = arith.constant 0 : index
    %c0_295 = arith.constant 0 : index
    %515 = vector.load %arg12[%c1_292, %c14_293, %c0_294, %c0_295] : memref<2x15x1x32xf32, #tpu.memory_space<vmem>>, vector<1x1x1x32xf32>
    %516 = vector.shape_cast %515 : vector<1x1x1x32xf32> to vector<1x32xf32>
    %517 = vector.broadcast %516 : vector<1x32xf32> to vector<8x32xf32>
    %518 = arith.addf %514, %517 : vector<8x32xf32>
    %519 = arith.addf %498, %518 : vector<8x32xf32>
    %c1_296 = arith.constant 1 : index
    %c12_297 = arith.constant 12 : index
    %c0_298 = arith.constant 0 : index
    %c0_299 = arith.constant 0 : index
    %520 = vector.load %arg12[%c1_296, %c12_297, %c0_298, %c0_299] : memref<2x15x1x32xf32, #tpu.memory_space<vmem>>, vector<1x1x1x32xf32>
    %521 = vector.shape_cast %520 : vector<1x1x1x32xf32> to vector<1x32xf32>
    %c1_300 = arith.constant 1 : index
    %c13_301 = arith.constant 13 : index
    %c0_302 = arith.constant 0 : index
    %c0_303 = arith.constant 0 : index
    %522 = vector.load %arg12[%c1_300, %c13_301, %c0_302, %c0_303] : memref<2x15x1x32xf32, #tpu.memory_space<vmem>>, vector<1x1x1x32xf32>
    %523 = vector.shape_cast %522 : vector<1x1x1x32xf32> to vector<1x32xf32>
    %cst_304 = arith.constant dense<0.000000e+00> : vector<8xf32>
    %524 = vector.multi_reduction <add>, %519, %cst_304 [1] : vector<8x32xf32> to vector<8xf32>
    %525 = vector.shape_cast %524 : vector<8xf32> to vector<8x1xf32>
    %cst_305 = arith.constant 3.200000e+01 : f32
    %526 = vector.broadcast %cst_305 : f32 to vector<8x1xf32>
    %527 = arith.divf %525, %526 : vector<8x1xf32>
    %528 = vector.broadcast %527 : vector<8x1xf32> to vector<8x32xf32>
    %529 = arith.subf %519, %528 : vector<8x32xf32>
    %530 = arith.mulf %529, %529 : vector<8x32xf32>
    %cst_306 = arith.constant dense<0.000000e+00> : vector<8xf32>
    %531 = vector.multi_reduction <add>, %530, %cst_306 [1] : vector<8x32xf32> to vector<8xf32>
    %532 = vector.shape_cast %531 : vector<8xf32> to vector<8x1xf32>
    %cst_307 = arith.constant 3.200000e+01 : f32
    %533 = vector.broadcast %cst_307 : f32 to vector<8x1xf32>
    %534 = arith.divf %532, %533 : vector<8x1xf32>
    %535 = vector.broadcast %527 : vector<8x1xf32> to vector<8x32xf32>
    %536 = arith.subf %519, %535 : vector<8x32xf32>
    %cst_308 = arith.constant 9.99999974E-6 : f32
    %537 = vector.broadcast %cst_308 : f32 to vector<8x1xf32>
    %538 = arith.addf %534, %537 : vector<8x1xf32>
    %539 = math.rsqrt %538 : vector<8x1xf32>
    %540 = vector.broadcast %539 : vector<8x1xf32> to vector<8x32xf32>
    %541 = arith.mulf %536, %540 : vector<8x32xf32>
    %542 = vector.broadcast %521 : vector<1x32xf32> to vector<8x32xf32>
    %543 = arith.mulf %541, %542 : vector<8x32xf32>
    %544 = vector.broadcast %523 : vector<1x32xf32> to vector<8x32xf32>
    %545 = arith.addf %543, %544 : vector<8x32xf32>
    %c0_309 = arith.constant 0 : index
    %c0_310 = arith.constant 0 : index
    %c0_311 = arith.constant 0 : index
    %546 = vector.load %arg14[%c0_309, %c0_310, %c0_311] : memref<2x1x32xf32, #tpu.memory_space<vmem>>, vector<1x1x32xf32>
    %547 = vector.shape_cast %546 : vector<1x1x32xf32> to vector<1x32xf32>
    %c1_312 = arith.constant 1 : index
    %c0_313 = arith.constant 0 : index
    %c0_314 = arith.constant 0 : index
    %548 = vector.load %arg14[%c1_312, %c0_313, %c0_314] : memref<2x1x32xf32, #tpu.memory_space<vmem>>, vector<1x1x32xf32>
    %549 = vector.shape_cast %548 : vector<1x1x32xf32> to vector<1x32xf32>
    %cst_315 = arith.constant dense<0.000000e+00> : vector<8xf32>
    %550 = vector.multi_reduction <add>, %545, %cst_315 [1] : vector<8x32xf32> to vector<8xf32>
    %551 = vector.shape_cast %550 : vector<8xf32> to vector<8x1xf32>
    %cst_316 = arith.constant 3.200000e+01 : f32
    %552 = vector.broadcast %cst_316 : f32 to vector<8x1xf32>
    %553 = arith.divf %551, %552 : vector<8x1xf32>
    %554 = vector.broadcast %553 : vector<8x1xf32> to vector<8x32xf32>
    %555 = arith.subf %545, %554 : vector<8x32xf32>
    %556 = arith.mulf %555, %555 : vector<8x32xf32>
    %cst_317 = arith.constant dense<0.000000e+00> : vector<8xf32>
    %557 = vector.multi_reduction <add>, %556, %cst_317 [1] : vector<8x32xf32> to vector<8xf32>
    %558 = vector.shape_cast %557 : vector<8xf32> to vector<8x1xf32>
    %cst_318 = arith.constant 3.200000e+01 : f32
    %559 = vector.broadcast %cst_318 : f32 to vector<8x1xf32>
    %560 = arith.divf %558, %559 : vector<8x1xf32>
    %561 = vector.broadcast %553 : vector<8x1xf32> to vector<8x32xf32>
    %562 = arith.subf %545, %561 : vector<8x32xf32>
    %cst_319 = arith.constant 9.99999974E-6 : f32
    %563 = vector.broadcast %cst_319 : f32 to vector<8x1xf32>
    %564 = arith.addf %560, %563 : vector<8x1xf32>
    %565 = math.rsqrt %564 : vector<8x1xf32>
    %566 = vector.broadcast %565 : vector<8x1xf32> to vector<8x32xf32>
    %567 = arith.mulf %562, %566 : vector<8x32xf32>
    %568 = vector.broadcast %547 : vector<1x32xf32> to vector<8x32xf32>
    %569 = arith.mulf %567, %568 : vector<8x32xf32>
    %570 = vector.broadcast %549 : vector<1x32xf32> to vector<8x32xf32>
    %571 = arith.addf %569, %570 : vector<8x32xf32>
    %c0_320 = arith.constant 0 : index
    %c0_321 = arith.constant 0 : index
    %c0_322 = arith.constant 0 : index
    %572 = vector.load %arg15[%c0_320, %c0_321, %c0_322] : memref<1x8x32xf32, #tpu.memory_space<vmem>>, vector<1x8x32xf32>
    %573 = vector.shape_cast %572 : vector<1x8x32xf32> to vector<8x32xf32>
    %574 = vector.shape_cast %571 : vector<8x32xf32> to vector<1x8x32xf32>
    tpu.vector_store %arg15[%c0_320, %c0_321, %c0_322], %574 {strides = array<i32>} : memref<1x8x32xf32, #tpu.memory_space<vmem>>, vector<1x8x32xf32>,
    return
  }
  func.func @transform_0(%arg0: i32) -> (i32, i32, i32) {
    %c0_i32 = arith.constant 0 : i32
    %c0_i32_0 = arith.constant 0 : i32
    %c0_i32_1 = arith.constant 0 : i32
    return %arg0, %c0_i32, %c0_i32_0 : i32, i32, i32
  }
  func.func @transform_1(%arg0: i32) -> (i32, i32, i32) {
    %c0_i32 = arith.constant 0 : i32
    %c0_i32_0 = arith.constant 0 : i32
    %c0_i32_1 = arith.constant 0 : i32
    return %arg0, %c0_i32, %c0_i32_0 : i32, i32, i32
  }
  func.func @transform_2(%arg0: i32) -> (i32, i32, i32) {
    %c0_i32 = arith.constant 0 : i32
    %c0_i32_0 = arith.constant 0 : i32
    %c0_i32_1 = arith.constant 0 : i32
    return %arg0, %c0_i32, %c0_i32_0 : i32, i32, i32
  }
  func.func @transform_3(%arg0: i32) -> (i32, i32) {
    %c0_i32 = arith.constant 0 : i32
    %c0_i32_0 = arith.constant 0 : i32
    %c0_i32_1 = arith.constant 0 : i32
    return %c0_i32, %c0_i32_0 : i32, i32
  }
  func.func @transform_4(%arg0: i32) -> (i32, i32, i32) {
    %c0_i32 = arith.constant 0 : i32
    %c0_i32_0 = arith.constant 0 : i32
    %c0_i32_1 = arith.constant 0 : i32
    %c0_i32_2 = arith.constant 0 : i32
    return %c0_i32, %c0_i32_0, %c0_i32_1 : i32, i32, i32
  }
  func.func @transform_5(%arg0: i32) -> (i32, i32, i32) {
    %c0_i32 = arith.constant 0 : i32
    %c0_i32_0 = arith.constant 0 : i32
    %c0_i32_1 = arith.constant 0 : i32
    %c0_i32_2 = arith.constant 0 : i32
    return %c0_i32, %c0_i32_0, %c0_i32_1 : i32, i32, i32
  }
  func.func @transform_6(%arg0: i32) -> (i32, i32) {
    %c0_i32 = arith.constant 0 : i32
    %c0_i32_0 = arith.constant 0 : i32
    %c0_i32_1 = arith.constant 0 : i32
    return %c0_i32, %c0_i32_0 : i32, i32
  }
  func.func @transform_7(%arg0: i32) -> (i32, i32) {
    %c0_i32 = arith.constant 0 : i32
    %c0_i32_0 = arith.constant 0 : i32
    %c0_i32_1 = arith.constant 0 : i32
    return %c0_i32, %c0_i32_0 : i32, i32
  }
  func.func @transform_8(%arg0: i32) -> (i32, i32, i32, i32) {
    %c0_i32 = arith.constant 0 : i32
    %c0_i32_0 = arith.constant 0 : i32
    %c0_i32_1 = arith.constant 0 : i32
    %c0_i32_2 = arith.constant 0 : i32
    %c0_i32_3 = arith.constant 0 : i32
    return %c0_i32, %c0_i32_0, %c0_i32_1, %c0_i32_2 : i32, i32, i32, i32
  }
  func.func @transform_9(%arg0: i32) -> (i32, i32, i32) {
    %c0_i32 = arith.constant 0 : i32
    %c0_i32_0 = arith.constant 0 : i32
    %c0_i32_1 = arith.constant 0 : i32
    %c0_i32_2 = arith.constant 0 : i32
    return %c0_i32, %c0_i32_0, %c0_i32_1 : i32, i32, i32
  }
  func.func @transform_10(%arg0: i32) -> (i32, i32, i32) {
    %c0_i32 = arith.constant 0 : i32
    %c0_i32_0 = arith.constant 0 : i32
    %c0_i32_1 = arith.constant 0 : i32
    %c0_i32_2 = arith.constant 0 : i32
    return %c0_i32, %c0_i32_0, %c0_i32_1 : i32, i32, i32
  }
  func.func @transform_11(%arg0: i32) -> (i32, i32, i32, i32) {
    %c0_i32 = arith.constant 0 : i32
    %c0_i32_0 = arith.constant 0 : i32
    %c0_i32_1 = arith.constant 0 : i32
    %c0_i32_2 = arith.constant 0 : i32
    %c0_i32_3 = arith.constant 0 : i32
    return %c0_i32, %c0_i32_0, %c0_i32_1, %c0_i32_2 : i32, i32, i32, i32
  }
  func.func @transform_12(%arg0: i32) -> (i32, i32, i32) {
    %c0_i32 = arith.constant 0 : i32
    %c0_i32_0 = arith.constant 0 : i32
    %c0_i32_1 = arith.constant 0 : i32
    %c0_i32_2 = arith.constant 0 : i32
    return %c0_i32, %c0_i32_0, %c0_i32_1 : i32, i32, i32
  }
  func.func @transform_13(%arg0: i32) -> (i32, i32, i32) {
    %c0_i32 = arith.constant 0 : i32
    %c0_i32_0 = arith.constant 0 : i32
    %c0_i32_1 = arith.constant 0 : i32
    %c0_i32_2 = arith.constant 0 : i32
    return %c0_i32, %c0_i32_0, %c0_i32_1 : i32, i32, i32
  }
  func.func @transform_14(%arg0: i32) -> (i32, i32, i32) {
    %c0_i32 = arith.constant 0 : i32
    %c0_i32_0 = arith.constant 0 : i32
    %c0_i32_1 = arith.constant 0 : i32
    return %arg0, %c0_i32, %c0_i32_0 : i32, i32, i32
  }
  func.func @transform_15(%arg0: i32) -> (i32, i32, i32) {
    %c0_i32 = arith.constant 0 : i32
    %c0_i32_0 = arith.constant 0 : i32
    %c0_i32_1 = arith.constant 0 : i32
    return %arg0, %c0_i32, %c0_i32_0 : i32, i32, i32
  }
}

</mosaic_0001>

<llo_original>
// kernel: nonlocal_transformer_forward.1
$region0: #{nonlocal_transformer_forward.1}
  #allocation0 [shape = 'u32[]', space=smem, size = 0x4, offset = 0x4, fixed_abs, tag = 'smem constant byte address 0x4 - core index']
  #allocation1 [shape = 'u32[72,128]{1,0:T(1,128)}', space=vmem, size = 0x9000, scoped, tag = 'internal scratch']
  %s0 = inlined_call_operand.vmem [shape: f32[2,64,32], index: 0, kind: input, shape index: {}]
  %s1 = inlined_call_operand.vmem [shape: f32[2,64,32], index: 1, kind: input, shape index: {}]
  %s2 = inlined_call_operand.vmem [shape: f32[2,1,64], index: 2, kind: input, shape index: {}]
  %s3 = inlined_call_operand.vmem [shape: f32[8,32], index: 3, kind: input, shape index: {}]
  %s4 = inlined_call_operand.vmem [shape: f32[3,32,16], index: 4, kind: input, shape index: {}]
  %s5 = inlined_call_operand.vmem [shape: f32[3,1,16], index: 5, kind: input, shape index: {}]
  %s6 = inlined_call_operand.vmem [shape: f32[16,32], index: 6, kind: input, shape index: {}]
  %s7 = inlined_call_operand.vmem [shape: f32[1,32], index: 7, kind: input, shape index: {}]
  %s8 = inlined_call_operand.hbm [shape: f32[2,8,32,32], index: 8, kind: input, shape index: {}]
  %s9 = inlined_call_operand.vmem [shape: f32[2,32,64], index: 9, kind: input, shape index: {}]
  %s10 = inlined_call_operand.vmem [shape: f32[2,64,32], index: 10, kind: input, shape index: {}]
  %s11 = inlined_call_operand.vmem [shape: f32[2,15,1,32], index: 11, kind: input, shape index: {}]
  %s12 = inlined_call_operand.vmem [shape: f32[2,1,64], index: 12, kind: input, shape index: {}]
  %s13 = inlined_call_operand.vmem [shape: f32[2,1,32], index: 13, kind: input, shape index: {}]
  %s14 = inlined_call_operand.hbm [shape: f32[2,8,32], index: 14, kind: output, shape index: {0}]
  %s15 = inlined_call_operand.hbm [shape: f32[2,64,32], index: 15, kind: output, shape index: {1}]
  %16 = xla_tuple %s14, %s15
  %s17 = sld [smem:[#allocation0]]
  $region101: #{nonlocal_transformer_forward.1} parent=0
    _
  %s19 = ssub.s32 1, %s17
  %s20 = scalar_select 0, %s19, %s17
  $region1: #{nonlocal_transformer_forward.1} parent=0
    #allocation2 [shape = 'u8[262144]{0}', space=vmem, size = 0x40000, scoped, tag = 'input window, operand 8, single buffered']
    #allocation3 [shape = 's32[2]{0}', space=sflag, size = 0x8, scoped, tag = 'scoped memory for nonlocal_transformer_forward.1']
    #allocation4 [shape = 's32[2]{0}', space=sflag, size = 0x8, scoped, tag = 'scoped memory for nonlocal_transformer_forward.1']
    #allocation5 [shape = 'u8[8192]{0}', space=vmem, size = 0x2000, scoped, tag = 'output window, operand 0']
    #allocation6 [shape = 'u8[65536]{0}', space=vmem, size = 0x10000, scoped, tag = 'output window, operand 1']
    #allocation7 [shape = 's32[2]{0}', space=sflag, size = 0x8, scoped, tag = 'scoped memory for nonlocal_transformer_forward.1']
    %21 = vsyncpa [#allocation3], 0
    %22 = vsyncpa [#allocation4], 0
    %s23 = scalar_lea.sflag [#allocation4], 1
    %24 = vsyncpa %s23, 0
    %25 = vsyncpa [#allocation7], 0
    %s26 = scalar_lea.sflag [#allocation7], 1
    %27 = vsyncpa %s26, 0
    loop: start=0, step=1, limit=4
    $region2: #{nonlocal_transformer_forward.1} parent=1 // loop_pre_header
      _
    $region3: #{nonlocal_transformer_forward.1} parent=1 // loop_header
      %s29 = sphi 0, %s33
      %p30 = scmp.ge.s32.totalorder %s29, 4
      %s39 = sphi 0, %s41
      %s42 = sphi 0, %s39
      %s43 = sphi 0, %s42
      %s59 = sphi 0, %s43
      %s65 = sphi 0, %s67
      %s68 = sphi 0, %s65
      %s69 = sphi 0, %s68
      %s85 = sphi 0, %s69
      %s91 = sphi 0, %s93
      %s94 = sphi 0, %s91
      %s95 = sphi 0, %s94
      %s111 = sphi 0, %s95
      %s115 = sphi 0, %s115
      %s117 = sphi 0, %s115
      %s118 = sphi 0, %s117
      %s132 = sphi 0, %s118
      %s136 = sphi 0, %s136
      %s138 = sphi 0, %s136
      %s139 = sphi 0, %s138
      %s153 = sphi 0, %s139
      %s157 = sphi 0, %s157
      %s159 = sphi 0, %s157
      %s160 = sphi 0, %s159
      %s174 = sphi 0, %s160
      %s178 = sphi 0, %s178
      %s180 = sphi 0, %s178
      %s181 = sphi 0, %s180
      %s195 = sphi 0, %s181
      %s199 = sphi 0, %s199
      %s201 = sphi 0, %s199
      %s202 = sphi 0, %s201
      %s216 = sphi 0, %s202
      %s220 = sphi 0, %s220
      %s222 = sphi 0, %s220
      %s223 = sphi 0, %s222
      %s237 = sphi 0, %s223
      %s241 = sphi 0, %s241
      %s243 = sphi 0, %s241
      %s244 = sphi 0, %s243
      %s258 = sphi 0, %s244
      %s262 = sphi 0, %s262
      %s264 = sphi 0, %s262
      %s265 = sphi 0, %s264
      %s279 = sphi 0, %s265
      %s283 = sphi 0, %s283
      %s285 = sphi 0, %s283
      %s286 = sphi 0, %s285
      %s300 = sphi 0, %s286
      %s304 = sphi 0, %s304
      %s306 = sphi 0, %s304
      %s307 = sphi 0, %s306
      %s321 = sphi 0, %s307
      %s325 = sphi 0, %s325
      %s327 = sphi 0, %s325
      %s328 = sphi 0, %s327
      %s342 = sphi 0, %s328
      %s348 = sphi 0, %s350
      %s351 = sphi 0, %s348
      %s352 = sphi 0, %s351
      %s368 = sphi 0, %s352
      %s374 = sphi 0, %s376
      %s377 = sphi 0, %s374
      %s378 = sphi 0, %s377
      %s394 = sphi 0, %s378
    $region4: #{nonlocal_transformer_forward.1} parent=1 // loop_header_branch
      %32 = sbr.rel (%p30) target = $region8
    $region5: #{nonlocal_transformer_forward.1} parent=1 // loop_body
      %s34 = ssub.s32 %s29, 1
      %s35 = ssub.s32 %s29, 2
      %s36 = sadd.s32 %s29, 1
      %s37 = ssub.s32 %s29, %s36
      %p38 = scmp.eq.s32.totalorder %s37, 0
      %s40 = sadd.s32 %s39, 1
      %s41 = scalar_select %p38, %s39, %s40
      %p44 = pneg %p38
      %p45 = scmp.eq.s32.totalorder %s29, 1
      %p46 = por %p44, %p45
      %p47 = scmp.ne.s32.totalorder %s39, %s42
      %p48 = scmp.eq.s32.totalorder %s29, 0
      %p49 = por %p47, %p48
      %p50 = scmp.ne.s32.totalorder %s39, %s42
      %p51 = scmp.eq.s32.totalorder %s34, 1
      %p52 = por %p50, %p51
      %p53 = scmp.ne.s32.totalorder %s42, %s43
      %p54 = scmp.eq.s32.totalorder %s34, 0
      %p55 = por %p53, %p54
      %p56 = scmp.ne.s32.totalorder %s42, %s43
      %p57 = scmp.eq.s32.totalorder %s35, 1
      %p58 = por %p56, %p57
      %p60 = scmp.ne.s32.totalorder %s43, %s59
      %p61 = scmp.eq.s32.totalorder %s35, 0
      %p62 = por %p60, %p61
      %s63 = ssub.s32 %s29, %s36
      %p64 = scmp.eq.s32.totalorder %s63, 0
      %s66 = sadd.s32 %s65, 1
      %s67 = scalar_select %p64, %s65, %s66
      %p70 = pneg %p64
      %p71 = scmp.eq.s32.totalorder %s29, 1
      %p72 = por %p70, %p71
      %p73 = scmp.ne.s32.totalorder %s65, %s68
      %p74 = scmp.eq.s32.totalorder %s29, 0
      %p75 = por %p73, %p74
      %p76 = scmp.ne.s32.totalorder %s65, %s68
      %p77 = scmp.eq.s32.totalorder %s34, 1
      %p78 = por %p76, %p77
      %p79 = scmp.ne.s32.totalorder %s68, %s69
      %p80 = scmp.eq.s32.totalorder %s34, 0
      %p81 = por %p79, %p80
      %p82 = scmp.ne.s32.totalorder %s68, %s69
      %p83 = scmp.eq.s32.totalorder %s35, 1
      %p84 = por %p82, %p83
      %p86 = scmp.ne.s32.totalorder %s69, %s85
      %p87 = scmp.eq.s32.totalorder %s35, 0
      %p88 = por %p86, %p87
      %s89 = ssub.s32 %s29, %s36
      %p90 = scmp.eq.s32.totalorder %s89, 0
      %s92 = sadd.s32 %s91, 1
      %s93 = scalar_select %p90, %s91, %s92
      %p96 = pneg %p90
      %p97 = scmp.eq.s32.totalorder %s29, 1
      %p98 = por %p96, %p97
      %p99 = scmp.ne.s32.totalorder %s91, %s94
      %p100 = scmp.eq.s32.totalorder %s29, 0
      %p101 = por %p99, %p100
      %p102 = scmp.ne.s32.totalorder %s91, %s94
      %p103 = scmp.eq.s32.totalorder %s34, 1
      %p104 = por %p102, %p103
      %p105 = scmp.ne.s32.totalorder %s94, %s95
      %p106 = scmp.eq.s32.totalorder %s34, 0
      %p107 = por %p105, %p106
      %p108 = scmp.ne.s32.totalorder %s94, %s95
      %p109 = scmp.eq.s32.totalorder %s35, 1
      %p110 = por %p108, %p109
      %p112 = scmp.ne.s32.totalorder %s95, %s111
      %p113 = scmp.eq.s32.totalorder %s35, 0
      %p114 = por %p112, %p113
      %s116 = sadd.s32 %s115, 1
      %p119 = scmp.eq.s32.totalorder %s29, 1
      %p120 = scmp.ne.s32.totalorder %s115, %s117
      %p121 = scmp.eq.s32.totalorder %s29, 0
      %p122 = por %p120, %p121
      %p123 = scmp.ne.s32.totalorder %s115, %s117
      %p124 = scmp.eq.s32.totalorder %s34, 1
      %p125 = por %p123, %p124
      %p126 = scmp.ne.s32.totalorder %s117, %s118
      %p127 = scmp.eq.s32.totalorder %s34, 0
      %p128 = por %p126, %p127
      %p129 = scmp.ne.s32.totalorder %s117, %s118
      %p130 = scmp.eq.s32.totalorder %s35, 1
      %p131 = por %p129, %p130
      %p133 = scmp.ne.s32.totalorder %s118, %s132
      %p134 = scmp.eq.s32.totalorder %s35, 0
      %p135 = por %p133, %p134
      %s137 = sadd.s32 %s136, 1
      %p140 = scmp.eq.s32.totalorder %s29, 1
      %p141 = scmp.ne.s32.totalorder %s136, %s138
      %p142 = scmp.eq.s32.totalorder %s29, 0
      %p143 = por %p141, %p142
      %p144 = scmp.ne.s32.totalorder %s136, %s138
      %p145 = scmp.eq.s32.totalorder %s34, 1
      %p146 = por %p144, %p145
      %p147 = scmp.ne.s32.totalorder %s138, %s139
      %p148 = scmp.eq.s32.totalorder %s34, 0
      %p149 = por %p147, %p148
      %p150 = scmp.ne.s32.totalorder %s138, %s139
      %p151 = scmp.eq.s32.totalorder %s35, 1
      %p152 = por %p150, %p151
      %p154 = scmp.ne.s32.totalorder %s139, %s153
      %p155 = scmp.eq.s32.totalorder %s35, 0
      %p156 = por %p154, %p155
      %s158 = sadd.s32 %s157, 1
      %p161 = scmp.eq.s32.totalorder %s29, 1
      %p162 = scmp.ne.s32.totalorder %s157, %s159
      %p163 = scmp.eq.s32.totalorder %s29, 0
      %p164 = por %p162, %p163
      %p165 = scmp.ne.s32.totalorder %s157, %s159
      %p166 = scmp.eq.s32.totalorder %s34, 1
      %p167 = por %p165, %p166
      %p168 = scmp.ne.s32.totalorder %s159, %s160
      %p169 = scmp.eq.s32.totalorder %s34, 0
      %p170 = por %p168, %p169
      %p171 = scmp.ne.s32.totalorder %s159, %s160
      %p172 = scmp.eq.s32.totalorder %s35, 1
      %p173 = por %p171, %p172
      %p175 = scmp.ne.s32.totalorder %s160, %s174
      %p176 = scmp.eq.s32.totalorder %s35, 0
      %p177 = por %p175, %p176
      %s179 = sadd.s32 %s178, 1
      %p182 = scmp.eq.s32.totalorder %s29, 1
      %p183 = scmp.ne.s32.totalorder %s178, %s180
      %p184 = scmp.eq.s32.totalorder %s29, 0
      %p185 = por %p183, %p184
      %p186 = scmp.ne.s32.totalorder %s178, %s180
      %p187 = scmp.eq.s32.totalorder %s34, 1
      %p188 = por %p186, %p187
      %p189 = scmp.ne.s32.totalorder %s180, %s181
      %p190 = scmp.eq.s32.totalorder %s34, 0
      %p191 = por %p189, %p190
      %p192 = scmp.ne.s32.totalorder %s180, %s181
      %p193 = scmp.eq.s32.totalorder %s35, 1
      %p194 = por %p192, %p193
      %p196 = scmp.ne.s32.totalorder %s181, %s195
      %p197 = scmp.eq.s32.totalorder %s35, 0
      %p198 = por %p196, %p197
      %s200 = sadd.s32 %s199, 1
      %p203 = scmp.eq.s32.totalorder %s29, 1
      %p204 = scmp.ne.s32.totalorder %s199, %s201
      %p205 = scmp.eq.s32.totalorder %s29, 0
      %p206 = por %p204, %p205
      %p207 = scmp.ne.s32.totalorder %s199, %s201
      %p208 = scmp.eq.s32.totalorder %s34, 1
      %p209 = por %p207, %p208
      %p210 = scmp.ne.s32.totalorder %s201, %s202
      %p211 = scmp.eq.s32.totalorder %s34, 0
      %p212 = por %p210, %p211
      %p213 = scmp.ne.s32.totalorder %s201, %s202
      %p214 = scmp.eq.s32.totalorder %s35, 1
      %p215 = por %p213, %p214
      %p217 = scmp.ne.s32.totalorder %s202, %s216
      %p218 = scmp.eq.s32.totalorder %s35, 0
      %p219 = por %p217, %p218
      %s221 = sadd.s32 %s220, 1
      %p224 = scmp.eq.s32.totalorder %s29, 1
      %p225 = scmp.ne.s32.totalorder %s220, %s222
      %p226 = scmp.eq.s32.totalorder %s29, 0
      %p227 = por %p225, %p226
      %p228 = scmp.ne.s32.totalorder %s220, %s222
      %p229 = scmp.eq.s32.totalorder %s34, 1
      %p230 = por %p228, %p229
      %p231 = scmp.ne.s32.totalorder %s222, %s223
      %p232 = scmp.eq.s32.totalorder %s34, 0
      %p233 = por %p231, %p232
      %p234 = scmp.ne.s32.totalorder %s222, %s223
      %p235 = scmp.eq.s32.totalorder %s35, 1
      %p236 = por %p234, %p235
      %p238 = scmp.ne.s32.totalorder %s223, %s237
      %p239 = scmp.eq.s32.totalorder %s35, 0
      %p240 = por %p238, %p239
      %s242 = sadd.s32 %s241, 1
      %p245 = scmp.eq.s32.totalorder %s29, 1
      %p246 = scmp.ne.s32.totalorder %s241, %s243
      %p247 = scmp.eq.s32.totalorder %s29, 0
      %p248 = por %p246, %p247
      %p249 = scmp.ne.s32.totalorder %s241, %s243
      %p250 = scmp.eq.s32.totalorder %s34, 1
      %p251 = por %p249, %p250
      %p252 = scmp.ne.s32.totalorder %s243, %s244
      %p253 = scmp.eq.s32.totalorder %s34, 0
      %p254 = por %p252, %p253
      %p255 = scmp.ne.s32.totalorder %s243, %s244
      %p256 = scmp.eq.s32.totalorder %s35, 1
      %p257 = por %p255, %p256
      %p259 = scmp.ne.s32.totalorder %s244, %s258
      %p260 = scmp.eq.s32.totalorder %s35, 0
      %p261 = por %p259, %p260
      %s263 = sadd.s32 %s262, 1
      %p266 = scmp.eq.s32.totalorder %s29, 1
      %p267 = scmp.ne.s32.totalorder %s262, %s264
      %p268 = scmp.eq.s32.totalorder %s29, 0
      %p269 = por %p267, %p268
      %p270 = scmp.ne.s32.totalorder %s262, %s264
      %p271 = scmp.eq.s32.totalorder %s34, 1
      %p272 = por %p270, %p271
      %p273 = scmp.ne.s32.totalorder %s264, %s265
      %p274 = scmp.eq.s32.totalorder %s34, 0
      %p275 = por %p273, %p274
      %p276 = scmp.ne.s32.totalorder %s264, %s265
      %p277 = scmp.eq.s32.totalorder %s35, 1
      %p278 = por %p276, %p277
      %p280 = scmp.ne.s32.totalorder %s265, %s279
      %p281 = scmp.eq.s32.totalorder %s35, 0
      %p282 = por %p280, %p281
      %s284 = sadd.s32 %s283, 1
      %p287 = scmp.eq.s32.totalorder %s29, 1
      %p288 = scmp.ne.s32.totalorder %s283, %s285
      %p289 = scmp.eq.s32.totalorder %s29, 0
      %p290 = por %p288, %p289
      %p291 = scmp.ne.s32.totalorder %s283, %s285
      %p292 = scmp.eq.s32.totalorder %s34, 1
      %p293 = por %p291, %p292
      %p294 = scmp.ne.s32.totalorder %s285, %s286
      %p295 = scmp.eq.s32.totalorder %s34, 0
      %p296 = por %p294, %p295
      %p297 = scmp.ne.s32.totalorder %s285, %s286
      %p298 = scmp.eq.s32.totalorder %s35, 1
      %p299 = por %p297, %p298
      %p301 = scmp.ne.s32.totalorder %s286, %s300
      %p302 = scmp.eq.s32.totalorder %s35, 0
      %p303 = por %p301, %p302
      %s305 = sadd.s32 %s304, 1
      %p308 = scmp.eq.s32.totalorder %s29, 1
      %p309 = scmp.ne.s32.totalorder %s304, %s306
      %p310 = scmp.eq.s32.totalorder %s29, 0
      %p311 = por %p309, %p310
      %p312 = scmp.ne.s32.totalorder %s304, %s306
      %p313 = scmp.eq.s32.totalorder %s34, 1
      %p314 = por %p312, %p313
      %p315 = scmp.ne.s32.totalorder %s306, %s307
      %p316 = scmp.eq.s32.totalorder %s34, 0
      %p317 = por %p315, %p316
      %p318 = scmp.ne.s32.totalorder %s306, %s307
      %p319 = scmp.eq.s32.totalorder %s35, 1
      %p320 = por %p318, %p319
      %p322 = scmp.ne.s32.totalorder %s307, %s321
      %p323 = scmp.eq.s32.totalorder %s35, 0
      %p324 = por %p322, %p323
      %s326 = sadd.s32 %s325, 1
      %p329 = scmp.eq.s32.totalorder %s29, 1
      %p330 = scmp.ne.s32.totalorder %s325, %s327
      %p331 = scmp.eq.s32.totalorder %s29, 0
      %p332 = por %p330, %p331
      %p333 = scmp.ne.s32.totalorder %s325, %s327
      %p334 = scmp.eq.s32.totalorder %s34, 1
      %p335 = por %p333, %p334
      %p336 = scmp.ne.s32.totalorder %s327, %s328
      %p337 = scmp.eq.s32.totalorder %s34, 0
      %p338 = por %p336, %p337
      %p339 = scmp.ne.s32.totalorder %s327, %s328
      %p340 = scmp.eq.s32.totalorder %s35, 1
      %p341 = por %p339, %p340
      %p343 = scmp.ne.s32.totalorder %s328, %s342
      %p344 = scmp.eq.s32.totalorder %s35, 0
      %p345 = por %p343, %p344
      %s346 = ssub.s32 %s29, %s36
      %p347 = scmp.eq.s32.totalorder %s346, 0
      %s349 = sadd.s32 %s348, 1
      %s350 = scalar_select %p347, %s348, %s349
      %p353 = pneg %p347
      %p354 = scmp.eq.s32.totalorder %s29, 1
      %p355 = por %p353, %p354
      %p356 = scmp.ne.s32.totalorder %s348, %s351
      %p357 = scmp.eq.s32.totalorder %s29, 0
      %p358 = por %p356, %p357
      %p359 = scmp.ne.s32.totalorder %s348, %s351
      %p360 = scmp.eq.s32.totalorder %s34, 1
      %p361 = por %p359, %p360
      %p362 = scmp.ne.s32.totalorder %s351, %s352
      %p363 = scmp.eq.s32.totalorder %s34, 0
      %p364 = por %p362, %p363
      %p365 = scmp.ne.s32.totalorder %s351, %s352
      %p366 = scmp.eq.s32.totalorder %s35, 1
      %p367 = por %p365, %p366
      %p369 = scmp.ne.s32.totalorder %s352, %s368
      %p370 = scmp.eq.s32.totalorder %s35, 0
      %p371 = por %p369, %p370
      %s372 = ssub.s32 %s29, %s36
      %p373 = scmp.eq.s32.totalorder %s372, 0
      %s375 = sadd.s32 %s374, 1
      %s376 = scalar_select %p373, %s374, %s375
      %p379 = pneg %p373
      %p380 = scmp.eq.s32.totalorder %s29, 1
      %p381 = por %p379, %p380
      %p382 = scmp.ne.s32.totalorder %s374, %s377
      %p383 = scmp.eq.s32.totalorder %s29, 0
      %p384 = por %p382, %p383
      %p385 = scmp.ne.s32.totalorder %s374, %s377
      %p386 = scmp.eq.s32.totalorder %s34, 1
      %p387 = por %p385, %p386
      %p388 = scmp.ne.s32.totalorder %s377, %s378
      %p389 = scmp.eq.s32.totalorder %s34, 0
      %p390 = por %p388, %p389
      %p391 = scmp.ne.s32.totalorder %s377, %s378
      %p392 = scmp.eq.s32.totalorder %s35, 1
      %p393 = por %p391, %p392
      %p395 = scmp.ne.s32.totalorder %s378, %s394
      %p396 = scmp.eq.s32.totalorder %s35, 0
      %p397 = por %p395, %p396
      %p398 = scmp.le.s32.totalorder 1, %s29
      %p399 = scmp.lt.s32.totalorder %s29, 3
      %p400 = pnand %p398, %p399
      %p401 = pneg %p400
      // Predicated region
      $region9: #{nonlocal_transformer_forward.1} parent=5 // pred_check
        _
      $region10: #{nonlocal_transformer_forward.1} parent=5 // pred_check_branch
        %403 = sbr.rel (%p400) target = $region12
      $region11: #{nonlocal_transformer_forward.1} parent=5 // pred_region
        %s404 = ssub.s32 %s29, 1
        // Predicated region
        $region13: #{nonlocal_transformer_forward.1} parent=11 // pred_check
          %p405 = pneg %p128
        $region14: #{nonlocal_transformer_forward.1} parent=11 // pred_check_branch
          %407 = sbr.rel (%p405) target = $region16
        $region15: #{nonlocal_transformer_forward.1} parent=11 // pred_region
          _
        $region16: #{nonlocal_transformer_forward.1} parent=11 // pred_fallthru
          _
        // Predicated region
        $region17: #{nonlocal_transformer_forward.1} parent=11 // pred_check
          %p408 = pneg %p149
        $region18: #{nonlocal_transformer_forward.1} parent=11 // pred_check_branch
          %410 = sbr.rel (%p408) target = $region20
        $region19: #{nonlocal_transformer_forward.1} parent=11 // pred_region
          _
        $region20: #{nonlocal_transformer_forward.1} parent=11 // pred_fallthru
          _
        // Predicated region
        $region21: #{nonlocal_transformer_forward.1} parent=11 // pred_check
          %p411 = pneg %p170
        $region22: #{nonlocal_transformer_forward.1} parent=11 // pred_check_branch
          %413 = sbr.rel (%p411) target = $region24
        $region23: #{nonlocal_transformer_forward.1} parent=11 // pred_region
          _
        $region24: #{nonlocal_transformer_forward.1} parent=11 // pred_fallthru
          _
        // Predicated region
        $region25: #{nonlocal_transformer_forward.1} parent=11 // pred_check
          %p414 = pneg %p191
        $region26: #{nonlocal_transformer_forward.1} parent=11 // pred_check_branch
          %416 = sbr.rel (%p414) target = $region28
        $region27: #{nonlocal_transformer_forward.1} parent=11 // pred_region
          _
        $region28: #{nonlocal_transformer_forward.1} parent=11 // pred_fallthru
          _
        // Predicated region
        $region29: #{nonlocal_transformer_forward.1} parent=11 // pred_check
          %p417 = pneg %p212
        $region30: #{nonlocal_transformer_forward.1} parent=11 // pred_check_branch
          %419 = sbr.rel (%p417) target = $region32
        $region31: #{nonlocal_transformer_forward.1} parent=11 // pred_region
          _
        $region32: #{nonlocal_transformer_forward.1} parent=11 // pred_fallthru
          _
        // Predicated region
        $region33: #{nonlocal_transformer_forward.1} parent=11 // pred_check
          %p420 = pneg %p233
        $region34: #{nonlocal_transformer_forward.1} parent=11 // pred_check_branch
          %422 = sbr.rel (%p420) target = $region36
        $region35: #{nonlocal_transformer_forward.1} parent=11 // pred_region
          %424 = vsyncadd [#allocation3], 0
          %s425 = sshll.u32 %s8, 4
          %s426 = int_to_ptr.hbm [resolvable:$true] %s425
          %s427 = sshll.u32 [#allocation2], 4
          %s428 = int_to_ptr.vmem [resolvable:$true] %s427
          %433 = dma.hbm_to_vmem [thread:$0]  %s426, 8192, %s428, [#allocation3], 128, 128, 8
        $region36: #{nonlocal_transformer_forward.1} parent=11 // pred_fallthru
          _
        // Predicated region
        $region37: #{nonlocal_transformer_forward.1} parent=11 // pred_check
          %p434 = pneg %p254
        $region38: #{nonlocal_transformer_forward.1} parent=11 // pred_check_branch
          %436 = sbr.rel (%p434) target = $region40
        $region39: #{nonlocal_transformer_forward.1} parent=11 // pred_region
          _
        $region40: #{nonlocal_transformer_forward.1} parent=11 // pred_fallthru
          _
        // Predicated region
        $region41: #{nonlocal_transformer_forward.1} parent=11 // pred_check
          %p437 = pneg %p275
        $region42: #{nonlocal_transformer_forward.1} parent=11 // pred_check_branch
          %439 = sbr.rel (%p437) target = $region44
        $region43: #{nonlocal_transformer_forward.1} parent=11 // pred_region
          _
        $region44: #{nonlocal_transformer_forward.1} parent=11 // pred_fallthru
          _
        // Predicated region
        $region45: #{nonlocal_transformer_forward.1} parent=11 // pred_check
          %p440 = pneg %p296
        $region46: #{nonlocal_transformer_forward.1} parent=11 // pred_check_branch
          %442 = sbr.rel (%p440) target = $region48
        $region47: #{nonlocal_transformer_forward.1} parent=11 // pred_region
          _
        $region48: #{nonlocal_transformer_forward.1} parent=11 // pred_fallthru
          _
        // Predicated region
        $region49: #{nonlocal_transformer_forward.1} parent=11 // pred_check
          %p443 = pneg %p317
        $region50: #{nonlocal_transformer_forward.1} parent=11 // pred_check_branch
          %445 = sbr.rel (%p443) target = $region52
        $region51: #{nonlocal_transformer_forward.1} parent=11 // pred_region
          _
        $region52: #{nonlocal_transformer_forward.1} parent=11 // pred_fallthru
          _
        // Predicated region
        $region53: #{nonlocal_transformer_forward.1} parent=11 // pred_check
          %p446 = pneg %p338
        $region54: #{nonlocal_transformer_forward.1} parent=11 // pred_check_branch
          %448 = sbr.rel (%p446) target = $region56
        $region55: #{nonlocal_transformer_forward.1} parent=11 // pred_region
          _
        $region56: #{nonlocal_transformer_forward.1} parent=11 // pred_fallthru
          _
      $region12: #{nonlocal_transformer_forward.1} parent=5 // pred_fallthru
        _
      %p449 = scmp.lt.s32.totalorder %s29, 2
      // Predicated region
      $region57: #{nonlocal_transformer_forward.1} parent=5 // pred_check
        %p450 = pneg %p449
      $region58: #{nonlocal_transformer_forward.1} parent=5 // pred_check_branch
        %452 = sbr.rel (%p450) target = $region60
      $region59: #{nonlocal_transformer_forward.1} parent=5 // pred_region
        // Predicated region
        $region61: #{nonlocal_transformer_forward.1} parent=59 // pred_check
          %p453 = pneg %p49
        $region62: #{nonlocal_transformer_forward.1} parent=59 // pred_check_branch
          %455 = sbr.rel (%p453) target = $region64
        $region63: #{nonlocal_transformer_forward.1} parent=59 // pred_region
          %p456 = scmp.lt.s32.totalorder %s29, 1
          %s457 = scalar_select %p456, %s29, 1
          %s458 = smul.addr %s457, 8
          %s459 = smul.addr %s458, 8
          %s460 = scalar_lea.vmem %s0, %s459
        $region64: #{nonlocal_transformer_forward.1} parent=59 // pred_fallthru
          _
        // Predicated region
        $region65: #{nonlocal_transformer_forward.1} parent=59 // pred_check
          %p461 = pneg %p75
        $region66: #{nonlocal_transformer_forward.1} parent=59 // pred_check_branch
          %463 = sbr.rel (%p461) target = $region68
        $region67: #{nonlocal_transformer_forward.1} parent=59 // pred_region
          %p464 = scmp.lt.s32.totalorder %s29, 1
          %s465 = scalar_select %p464, %s29, 1
          %s466 = smul.addr %s465, 8
          %s467 = smul.addr %s466, 8
          %s468 = scalar_lea.vmem %s1, %s467
        $region68: #{nonlocal_transformer_forward.1} parent=59 // pred_fallthru
          _
        // Predicated region
        $region69: #{nonlocal_transformer_forward.1} parent=59 // pred_check
          %p469 = pneg %p101
        $region70: #{nonlocal_transformer_forward.1} parent=59 // pred_check_branch
          %471 = sbr.rel (%p469) target = $region72
        $region71: #{nonlocal_transformer_forward.1} parent=59 // pred_region
          %p472 = scmp.lt.s32.totalorder %s29, 1
          %s473 = scalar_select %p472, %s29, 1
          %s474 = scalar_lea.vmem %s2, %s473
        $region72: #{nonlocal_transformer_forward.1} parent=59 // pred_fallthru
          _
      $region60: #{nonlocal_transformer_forward.1} parent=5 // pred_fallthru
        _
      %p475 = scmp.le.s32.totalorder 1, %s29
      %p476 = scmp.lt.s32.totalorder %s29, 3
      %p477 = pnand %p475, %p476
      %p478 = pneg %p477
      // Predicated region
      $region73: #{nonlocal_transformer_forward.1} parent=5 // pred_check
        _
      $region74: #{nonlocal_transformer_forward.1} parent=5 // pred_check_branch
        %480 = sbr.rel (%p477) target = $region76
      $region75: #{nonlocal_transformer_forward.1} parent=5 // pred_region
        %s481 = ssub.s32 %s29, 1
        // Predicated region
        $region77: #{nonlocal_transformer_forward.1} parent=75 // pred_check
          %p482 = pneg %p233
        $region78: #{nonlocal_transformer_forward.1} parent=75 // pred_check_branch
          %484 = sbr.rel (%p482) target = $region80
        $region79: #{nonlocal_transformer_forward.1} parent=75 // pred_region
          %486 = dma.done [#allocation3], 8192
        $region80: #{nonlocal_transformer_forward.1} parent=75 // pred_fallthru
          _
        %p487 = scmp.lt.s32.totalorder %s34, 1
        %s488 = scalar_select %p487, %s34, 1
        %s489 = smul.addr %s488, 8
        %s490 = smul.addr %s489, 8
        %s491 = scalar_lea.vmem %s0, %s490
        %p492 = pneg %p55
        %p493 = pneg %p52
        %p494 = scmp.lt.s32.totalorder %s34, 1
        %s495 = scalar_select %p494, %s34, 1
        %s496 = smul.addr %s495, 8
        %s497 = smul.addr %s496, 8
        %s498 = scalar_lea.vmem %s1, %s497
        %p499 = pneg %p81
        %p500 = pneg %p78
        %p501 = scmp.lt.s32.totalorder %s34, 1
        %s502 = scalar_select %p501, %s34, 1
        %s503 = scalar_lea.vmem %s2, %s502
        %p504 = pneg %p107
        %p505 = pneg %p104
        %p506 = pneg %p128
        %p507 = pneg %p125
        %p508 = pneg %p149
        %p509 = pneg %p146
        %p510 = pneg %p170
        %p511 = pneg %p167
        %p512 = pneg %p191
        %p513 = pneg %p188
        %p514 = pneg %p212
        %p515 = pneg %p209
        %p516 = pneg %p233
        %p517 = pneg %p230
        %p518 = pneg %p254
        %p519 = pneg %p251
        %p520 = pneg %p275
        %p521 = pneg %p272
        %p522 = pneg %p296
        %p523 = pneg %p293
        %p524 = pneg %p317
        %p525 = pneg %p314
        %p526 = pneg %p338
        %p527 = pneg %p335
        %p528 = pneg %p364
        %p529 = pneg %p361
        %s530 = sand.u32 %s351, 1
        %s531 = scalar_lea.sflag [#allocation4], %s530
        %s532 = sand.u32 %s351, 1
        %s533 = smul.addr %s532, 8
        %s534 = scalar_lea.vmem [#allocation5], %s533
        %p535 = pneg %p390
        %p536 = pneg %p387
        %s537 = sand.u32 %s377, 1
        %s538 = scalar_lea.sflag [#allocation7], %s537
        %s539 = sand.u32 %s377, 1
        %s540 = smul.addr %s539, 64
        %s541 = scalar_lea.vmem [#allocation6], %s540
        %p542 = scmp.lt.s32.totalorder %s34, 1
        %s543 = scalar_select %p542, %s34, 1
        %s544 = smul.addr %s543, 8
        %s545 = smul.addr %s544, 8
        %s546 = scalar_lea.vmem %s0, %s545
        %p547 = scmp.lt.s32.totalorder %s34, 1
        %s548 = scalar_select %p547, %s34, 1
        %s549 = smul.addr %s548, 8
        %s550 = smul.addr %s549, 8
        %s551 = scalar_lea.vmem %s1, %s550
        %p552 = scmp.lt.s32.totalorder %s34, 1
        %s553 = scalar_select %p552, %s34, 1
        %s554 = scalar_lea.vmem %s2, %s553
        %v556 = vld [vmem:[%s546] sm:$0xff]
        %v557 = vld [vmem:[%s546 + $0x8] sm:$0xff]
        %v558 = vld [vmem:[%s546 + $0x10] sm:$0xff]
        %v559 = vld [vmem:[%s546 + $0x18] sm:$0xff]
        %v560 = vld [vmem:[%s546 + $0x20] sm:$0xff]
        %v561 = vld [vmem:[%s546 + $0x28] sm:$0xff]
        %v562 = vld [vmem:[%s546 + $0x30] sm:$0xff]
        %v563 = vld [vmem:[%s546 + $0x38] sm:$0xff]
        %v564 = vld [vmem:[%s4] sm:$0xff]
        %v565 = vld [vmem:[%s4 + $0x8] sm:$0xff]
        %v566 = vld [vmem:[%s4 + $0x10] sm:$0xff]
        %v567 = vld [vmem:[%s4 + $0x18] sm:$0xff]
        %v568 = vpack.c.bf16 %v557, %v556
        %v569 = vpack.c.bf16 %v559, %v558
        %v570 = vpack.c.bf16 %v561, %v560
        %v571 = vpack.c.bf16 %v563, %v562
        %v572 = vpack.c.bf16 %v565, %v564
        %v573 = vpack.c.bf16 %v567, %v566
        %v574 = vld [vmem:[%s5] sm:$0x1]
        %v576 = vperm.slane %v574, 0
        %vm578 = vcmask 261120
        %v580 = vsel %vm578, %v568, 0
        %v583 = vsel %vm578, %v569, 0
        %v586 = vsel %vm578, %v570, 0
        %v589 = vsel %vm578, %v571, 0
        %591 = vmatpush.bf16.msra.mxu0 0
        %592 = vmatpush.bf16.msra.mxu0 0
        %593 = vmatpush.bf16.msra.mxu0 0
        %594 = vmatpush.bf16.msra.mxu0 0
        %595 = vmatpush.bf16.msra.mxu0 0
        %596 = vmatpush.bf16.msra.mxu0 0
        %597 = vmatpush.bf16.msra.mxu0 %v573
        %598 = vmatpush.bf16.msra.mxu0 %v572
        %599 = vmatmul.bf16.gmra.mxu0 %v580
        %v600 = vpop.f32.mrf.mxu0
        %v601 = vadd.f32 %v576, %v600
        %v602 = vpop.f32.mrf.mxu0
        %v603 = vadd.f32 %v576, %v602
        %604 = vmatmul.bf16.gmra.mxu0 %v583
        %v605 = vpop.f32.mrf.mxu0
        %v606 = vadd.f32 %v576, %v605
        %v607 = vpop.f32.mrf.mxu0
        %v608 = vadd.f32 %v576, %v607
        %609 = vmatmul.bf16.gmra.mxu0 %v586
        %v610 = vpop.f32.mrf.mxu0
        %v611 = vadd.f32 %v576, %v610
        %v612 = vpop.f32.mrf.mxu0
        %v613 = vadd.f32 %v576, %v612
        %614 = vmatmul.bf16.gmra.mxu0 %v589
        %v615 = vpop.f32.mrf.mxu0
        %v616 = vadd.f32 %v576, %v615
        %v617 = vpop.f32.mrf.mxu0
        %v618 = vadd.f32 %v576, %v617
        %619 = vdwg.mxu0
        %s620 = scalar_lea.vmem %s4, 32
        %v621 = vld [vmem:[%s620] sm:$0xff]
        %v622 = vld [vmem:[%s620 + $0x8] sm:$0xff]
        %v623 = vld [vmem:[%s620 + $0x10] sm:$0xff]
        %v624 = vld [vmem:[%s620 + $0x18] sm:$0xff]
        %v625 = vpack.c.bf16 %v622, %v621
        %v626 = vpack.c.bf16 %v624, %v623
        %s627 = scalar_lea.vmem %s5, 1
        %v628 = vld [vmem:[%s627] sm:$0x1]
        %v630 = vperm.slane %v628, 0
        %632 = vmatpush.bf16.msra.mxu0 0
        %633 = vmatpush.bf16.msra.mxu0 0
        %634 = vmatpush.bf16.msra.mxu0 0
        %635 = vmatpush.bf16.msra.mxu0 0
        %636 = vmatpush.bf16.msra.mxu0 0
        %637 = vmatpush.bf16.msra.mxu0 0
        %638 = vmatpush.bf16.msra.mxu0 %v626
        %639 = vmatpush.bf16.msra.mxu0 %v625
        %640 = vmatmul.bf16.gmra.mxu0 %v580
        %v641 = vpop.f32.mrf.mxu0
        %v642 = vadd.f32 %v630, %v641
        %v643 = vpop.f32.mrf.mxu0
        %v644 = vadd.f32 %v630, %v643
        %645 = vmatmul.bf16.gmra.mxu0 %v583
        %v646 = vpop.f32.mrf.mxu0
        %v647 = vadd.f32 %v630, %v646
        %v648 = vpop.f32.mrf.mxu0
        %v649 = vadd.f32 %v630, %v648
        %650 = vmatmul.bf16.gmra.mxu0 %v586
        %v651 = vpop.f32.mrf.mxu0
        %v652 = vadd.f32 %v630, %v651
        %v653 = vpop.f32.mrf.mxu0
        %v654 = vadd.f32 %v630, %v653
        %655 = vmatmul.bf16.gmra.mxu0 %v589
        %v656 = vpop.f32.mrf.mxu0
        %v657 = vadd.f32 %v630, %v656
        %v658 = vpop.f32.mrf.mxu0
        %v659 = vadd.f32 %v630, %v658
        %660 = vdwg.mxu0
        %s661 = scalar_lea.vmem %s4, 64
        %v662 = vld [vmem:[%s661] sm:$0xff]
        %v663 = vld [vmem:[%s661 + $0x8] sm:$0xff]
        %v664 = vld [vmem:[%s661 + $0x10] sm:$0xff]
        %v665 = vld [vmem:[%s661 + $0x18] sm:$0xff]
        %v666 = vpack.c.bf16 %v663, %v662
        %v667 = vpack.c.bf16 %v665, %v664
        %s668 = scalar_lea.vmem %s5, 2
        %v669 = vld [vmem:[%s668] sm:$0x1]
        %v671 = vperm.slane %v669, 0
        %673 = vmatpush.bf16.msra.mxu0 0
        %674 = vmatpush.bf16.msra.mxu0 0
        %675 = vmatpush.bf16.msra.mxu0 0
        %676 = vmatpush.bf16.msra.mxu0 0
        %677 = vmatpush.bf16.msra.mxu0 0
        %678 = vmatpush.bf16.msra.mxu0 0
        %679 = vmatpush.bf16.msra.mxu0 %v667
        %680 = vmatpush.bf16.msra.mxu0 %v666
        %681 = vmatmul.bf16.gmra.mxu0 %v580
        %v682 = vpop.f32.mrf.mxu0
        %v683 = vadd.f32 %v671, %v682
        %v684 = vpop.f32.mrf.mxu0
        %v685 = vadd.f32 %v671, %v684
        %686 = vmatmul.bf16.gmra.mxu0 %v583
        %v687 = vpop.f32.mrf.mxu0
        %v688 = vadd.f32 %v671, %v687
        %v689 = vpop.f32.mrf.mxu0
        %v690 = vadd.f32 %v671, %v689
        %691 = vmatmul.bf16.gmra.mxu0 %v586
        %v692 = vpop.f32.mrf.mxu0
        %v693 = vadd.f32 %v671, %v692
        %v694 = vpop.f32.mrf.mxu0
        %v695 = vadd.f32 %v671, %v694
        %696 = vmatmul.bf16.gmra.mxu0 %v589
        %v697 = vpop.f32.mrf.mxu0
        %v698 = vadd.f32 %v671, %v697
        %v699 = vpop.f32.mrf.mxu0
        %v700 = vadd.f32 %v671, %v699
        %701 = vdwg.mxu0
        %v702 = vpack.c.bf16 %v644, %v642
        %v703 = vpack.c.bf16 %v649, %v647
        %v704 = vpack.c.bf16 %v654, %v652
        %v705 = vpack.c.bf16 %v659, %v657
        %v706 = vpack.c.bf16 %v685, %v683
        %v707 = vpack.c.bf16 %v690, %v688
        %v708 = vpack.c.bf16 %v695, %v693
        %v709 = vpack.c.bf16 %v700, %v698
        %vm710 = vcmask 130048
        %v712 = vsel %vm710, %v702, 0
        %v715 = vsel %vm710, %v703, 0
        %v718 = vsel %vm710, %v704, 0
        %v721 = vsel %vm710, %v705, 0
        %v724 = vsel %vm710, %v706, 0
        %v727 = vsel %vm710, %v707, 0
        %v730 = vsel %vm710, %v708, 0
        %v733 = vsel %vm710, %v709, 0
        %735 = vmatpush.bf16.xpose.msra.mxu0 0
        %736 = vmatpush.bf16.xpose.msra.mxu0 0
        %737 = vmatpush.bf16.xpose.msra.mxu0 0
        %738 = vmatpush.bf16.xpose.msra.mxu0 0
        %739 = vmatpush.bf16.xpose.msra.mxu0 %v733
        %740 = vmatpush.bf16.xpose.msra.mxu0 %v730
        %741 = vmatpush.bf16.xpose.msra.mxu0 %v727
        %742 = vmatpush.bf16.xpose.msra.mxu0 %v724
        %743 = vmatmul.bf16.gmra.mxu0 %v712
        %v744 = vpop.f32.mrf.mxu0
        %v745 = vadd.f32 0.0, %v744
        %v746 = vpop.f32.mrf.mxu0
        %v747 = vadd.f32 0.0, %v746
        %748 = vmatmul.bf16.gmra.mxu0 %v715
        %v749 = vpop.f32.mrf.mxu0
        %v750 = vadd.f32 0.0, %v749
        %v751 = vpop.f32.mrf.mxu0
        %v752 = vadd.f32 0.0, %v751
        %753 = vmatmul.bf16.gmra.mxu0 %v718
        %v754 = vpop.f32.mrf.mxu0
        %v755 = vadd.f32 0.0, %v754
        %v756 = vpop.f32.mrf.mxu0
        %v757 = vadd.f32 0.0, %v756
        %758 = vmatmul.bf16.gmra.mxu0 %v721
        %v759 = vpop.f32.mrf.mxu0
        %v760 = vadd.f32 0.0, %v759
        %v761 = vpop.f32.mrf.mxu0
        %v762 = vadd.f32 0.0, %v761
        %763 = vdwg.mxu0
        %v764 = vmul.f32 %v745, 0.25
        %v765 = vmul.f32 %v747, 0.25
        %v766 = vmul.f32 %v750, 0.25
        %v767 = vmul.f32 %v752, 0.25
        %v768 = vmul.f32 %v755, 0.25
        %v769 = vmul.f32 %v757, 0.25
        %v770 = vmul.f32 %v760, 0.25
        %v771 = vmul.f32 %v762, 0.25
        %vm772 = vcmask 523264
        %v773 = vsel %vm772, %v764, -inf
        %774 = vmax.xlane.f32.xlu0 %v773
        %v775 = vpop.xlane.xlu0 %774
        %v776 = vsel %vm772, %v765, -inf
        %777 = vmax.xlane.f32.xlu0 %v776
        %v778 = vpop.xlane.xlu0 %777
        %v779 = vsel %vm772, %v766, -inf
        %780 = vmax.xlane.f32.xlu0 %v779
        %v781 = vpop.xlane.xlu0 %780
        %v782 = vsel %vm772, %v767, -inf
        %783 = vmax.xlane.f32.xlu0 %v782
        %v784 = vpop.xlane.xlu0 %783
        %v785 = vsel %vm772, %v768, -inf
        %786 = vmax.xlane.f32.xlu0 %v785
        %v787 = vpop.xlane.xlu0 %786
        %v788 = vsel %vm772, %v769, -inf
        %789 = vmax.xlane.f32.xlu0 %v788
        %v790 = vpop.xlane.xlu0 %789
        %v791 = vsel %vm772, %v770, -inf
        %792 = vmax.xlane.f32.xlu0 %v791
        %v793 = vpop.xlane.xlu0 %792
        %v794 = vsel %vm772, %v771, -inf
        %795 = vmax.xlane.f32.xlu0 %v794
        %v796 = vpop.xlane.xlu0 %795
        %v797 = vsub.f32 %v764, %v775
        %v798 = vsub.f32 %v765, %v778
        %v799 = vsub.f32 %v766, %v781
        %v800 = vsub.f32 %v767, %v784
        %v801 = vsub.f32 %v768, %v787
        %v802 = vsub.f32 %v769, %v790
        %v803 = vsub.f32 %v770, %v793
        %v804 = vsub.f32 %v771, %v796
        %v805 = vmul.f32 %v797, 1.442695
        %v806 = vpow.pop %v805
        %v807 = vmul.f32 %v798, 1.442695
        %v808 = vpow.pop %v807
        %v809 = vmul.f32 %v799, 1.442695
        %v810 = vpow.pop %v809
        %v811 = vmul.f32 %v800, 1.442695
        %v812 = vpow.pop %v811
        %v813 = vmul.f32 %v801, 1.442695
        %v814 = vpow.pop %v813
        %v815 = vmul.f32 %v802, 1.442695
        %v816 = vpow.pop %v815
        %v817 = vmul.f32 %v803, 1.442695
        %v818 = vpow.pop %v817
        %v819 = vmul.f32 %v804, 1.442695
        %v820 = vpow.pop %v819
        %v821 = vsel %vm772, %v806, 0.0
        %822 = vadd.xlane.f32.xlu0 %v821
        %v823 = vpop.xlane.xlu0 %822
        %v824 = vsel %vm772, %v808, 0.0
        %825 = vadd.xlane.f32.xlu0 %v824
        %v826 = vpop.xlane.xlu0 %825
        %v827 = vsel %vm772, %v810, 0.0
        %828 = vadd.xlane.f32.xlu0 %v827
        %v829 = vpop.xlane.xlu0 %828
        %v830 = vsel %vm772, %v812, 0.0
        %831 = vadd.xlane.f32.xlu0 %v830
        %v832 = vpop.xlane.xlu0 %831
        %v833 = vsel %vm772, %v814, 0.0
        %834 = vadd.xlane.f32.xlu0 %v833
        %v835 = vpop.xlane.xlu0 %834
        %v836 = vsel %vm772, %v816, 0.0
        %837 = vadd.xlane.f32.xlu0 %v836
        %v838 = vpop.xlane.xlu0 %837
        %v839 = vsel %vm772, %v818, 0.0
        %840 = vadd.xlane.f32.xlu0 %v839
        %v841 = vpop.xlane.xlu0 %840
        %v842 = vsel %vm772, %v820, 0.0
        %843 = vadd.xlane.f32.xlu0 %v842
        %v844 = vpop.xlane.xlu0 %843
        %v845 = vrcp.pop %v823
        %v846 = vmul.f32 %v823, %v845
        %v847 = vsub.f32 1.0, %v846
        %v848 = vmul.f32 %v845, %v847
        %v849 = vadd.f32 %v845, %v848
        %vm850 = vweird.f32 %v823
        %vm851 = vweird.f32 %v845
        %vm852 = vmor %vm850, %vm851
        %v853 = vsel %vm852, %v845, %v849
        %v854 = vand.u32 2147483647, %v823
        %vm855 = vcmp.eq.f32.partialorder %v854, 8.507059e+37
        %v856 = vand.u32 %v823, 2147483648
        %v857 = vor.u32 1.1754944e-38, %v856
        %v858 = vsel %vm855, %v857, %v853
        %v859 = vmul.f32 %v806, %v858
        %v860 = vrcp.pop %v826
        %v861 = vmul.f32 %v826, %v860
        %v862 = vsub.f32 1.0, %v861
        %v863 = vmul.f32 %v860, %v862
        %v864 = vadd.f32 %v860, %v863
        %vm865 = vweird.f32 %v826
        %vm866 = vweird.f32 %v860
        %vm867 = vmor %vm865, %vm866
        %v868 = vsel %vm867, %v860, %v864
        %v869 = vand.u32 2147483647, %v826
        %vm870 = vcmp.eq.f32.partialorder %v869, 8.507059e+37
        %v871 = vand.u32 %v826, 2147483648
        %v872 = vor.u32 1.1754944e-38, %v871
        %v873 = vsel %vm870, %v872, %v868
        %v874 = vmul.f32 %v808, %v873
        %v875 = vrcp.pop %v829
        %v876 = vmul.f32 %v829, %v875
        %v877 = vsub.f32 1.0, %v876
        %v878 = vmul.f32 %v875, %v877
        %v879 = vadd.f32 %v875, %v878
        %vm880 = vweird.f32 %v829
        %vm881 = vweird.f32 %v875
        %vm882 = vmor %vm880, %vm881
        %v883 = vsel %vm882, %v875, %v879
        %v884 = vand.u32 2147483647, %v829
        %vm885 = vcmp.eq.f32.partialorder %v884, 8.507059e+37
        %v886 = vand.u32 %v829, 2147483648
        %v887 = vor.u32 1.1754944e-38, %v886
        %v888 = vsel %vm885, %v887, %v883
        %v889 = vmul.f32 %v810, %v888
        %v890 = vrcp.pop %v832
        %v891 = vmul.f32 %v832, %v890
        %v892 = vsub.f32 1.0, %v891
        %v893 = vmul.f32 %v890, %v892
        %v894 = vadd.f32 %v890, %v893
        %vm895 = vweird.f32 %v832
        %vm896 = vweird.f32 %v890
        %vm897 = vmor %vm895, %vm896
        %v898 = vsel %vm897, %v890, %v894
        %v899 = vand.u32 2147483647, %v832
        %vm900 = vcmp.eq.f32.partialorder %v899, 8.507059e+37
        %v901 = vand.u32 %v832, 2147483648
        %v902 = vor.u32 1.1754944e-38, %v901
        %v903 = vsel %vm900, %v902, %v898
        %v904 = vmul.f32 %v812, %v903
        %v905 = vrcp.pop %v835
        %v906 = vmul.f32 %v835, %v905
        %v907 = vsub.f32 1.0, %v906
        %v908 = vmul.f32 %v905, %v907
        %v909 = vadd.f32 %v905, %v908
        %vm910 = vweird.f32 %v835
        %vm911 = vweird.f32 %v905
        %vm912 = vmor %vm910, %vm911
        %v913 = vsel %vm912, %v905, %v909
        %v914 = vand.u32 2147483647, %v835
        %vm915 = vcmp.eq.f32.partialorder %v914, 8.507059e+37
        %v916 = vand.u32 %v835, 2147483648
        %v917 = vor.u32 1.1754944e-38, %v916
        %v918 = vsel %vm915, %v917, %v913
        %v919 = vmul.f32 %v814, %v918
        %v920 = vrcp.pop %v838
        %v921 = vmul.f32 %v838, %v920
        %v922 = vsub.f32 1.0, %v921
        %v923 = vmul.f32 %v920, %v922
        %v924 = vadd.f32 %v920, %v923
        %vm925 = vweird.f32 %v838
        %vm926 = vweird.f32 %v920
        %vm927 = vmor %vm925, %vm926
        %v928 = vsel %vm927, %v920, %v924
        %v929 = vand.u32 2147483647, %v838
        %vm930 = vcmp.eq.f32.partialorder %v929, 8.507059e+37
        %v931 = vand.u32 %v838, 2147483648
        %v932 = vor.u32 1.1754944e-38, %v931
        %v933 = vsel %vm930, %v932, %v928
        %v934 = vmul.f32 %v816, %v933
        %v935 = vrcp.pop %v841
        %v936 = vmul.f32 %v841, %v935
        %v937 = vsub.f32 1.0, %v936
        %v938 = vmul.f32 %v935, %v937
        %v939 = vadd.f32 %v935, %v938
        %vm940 = vweird.f32 %v841
        %vm941 = vweird.f32 %v935
        %vm942 = vmor %vm940, %vm941
        %v943 = vsel %vm942, %v935, %v939
        %v944 = vand.u32 2147483647, %v841
        %vm945 = vcmp.eq.f32.partialorder %v944, 8.507059e+37
        %v946 = vand.u32 %v841, 2147483648
        %v947 = vor.u32 1.1754944e-38, %v946
        %v948 = vsel %vm945, %v947, %v943
        %v949 = vmul.f32 %v818, %v948
        %v950 = vrcp.pop %v844
        %v951 = vmul.f32 %v844, %v950
        %v952 = vsub.f32 1.0, %v951
        %v953 = vmul.f32 %v950, %v952
        %v954 = vadd.f32 %v950, %v953
        %vm955 = vweird.f32 %v844
        %vm956 = vweird.f32 %v950
        %vm957 = vmor %vm955, %vm956
        %v958 = vsel %vm957, %v950, %v954
        %v959 = vand.u32 2147483647, %v844
        %vm960 = vcmp.eq.f32.partialorder %v959, 8.507059e+37
        %v961 = vand.u32 %v844, 2147483648
        %v962 = vor.u32 1.1754944e-38, %v961
        %v963 = vsel %vm960, %v962, %v958
        %v964 = vmul.f32 %v820, %v963
        %v965 = vpack.c.bf16 %v874, %v859
        %v966 = vpack.c.bf16 %v904, %v889
        %v967 = vpack.c.bf16 %v934, %v919
        %v968 = vpack.c.bf16 %v964, %v949
        %v969 = vpack.c.bf16 %v603, %v601
        %v970 = vpack.c.bf16 %v608, %v606
        %v971 = vpack.c.bf16 %v613, %v611
        %v972 = vpack.c.bf16 %v618, %v616
        %v974 = vsel %vm772, %v965, 0
        %v977 = vsel %vm772, %v966, 0
        %v980 = vsel %vm772, %v967, 0
        %v983 = vsel %vm772, %v968, 0
        %985 = vmatpush.bf16.msra.mxu0 0
        %986 = vmatpush.bf16.msra.mxu0 0
        %987 = vmatpush.bf16.msra.mxu0 0
        %988 = vmatpush.bf16.msra.mxu0 0
        %989 = vmatpush.bf16.msra.mxu0 %v972
        %990 = vmatpush.bf16.msra.mxu0 %v971
        %991 = vmatpush.bf16.msra.mxu0 %v970
        %992 = vmatpush.bf16.msra.mxu0 %v969
        %993 = vmatmul.bf16.gmra.mxu0 %v974
        %v994 = vpop.f32.mrf.mxu0
        %v995 = vadd.f32 0.0, %v994
        %v996 = vpop.f32.mrf.mxu0
        %v997 = vadd.f32 0.0, %v996
        %998 = vmatmul.bf16.gmra.mxu0 %v977
        %v999 = vpop.f32.mrf.mxu0
        %v1000 = vadd.f32 0.0, %v999
        %v1001 = vpop.f32.mrf.mxu0
        %v1002 = vadd.f32 0.0, %v1001
        %1003 = vmatmul.bf16.gmra.mxu0 %v980
        %v1004 = vpop.f32.mrf.mxu0
        %v1005 = vadd.f32 0.0, %v1004
        %v1006 = vpop.f32.mrf.mxu0
        %v1007 = vadd.f32 0.0, %v1006
        %1008 = vmatmul.bf16.gmra.mxu0 %v983
        %v1009 = vpop.f32.mrf.mxu0
        %v1010 = vadd.f32 0.0, %v1009
        %v1011 = vpop.f32.mrf.mxu0
        %v1012 = vadd.f32 0.0, %v1011
        %1013 = vdwg.mxu0
        %v1014 = vld [vmem:[%s6] sm:$0xff]
        %v1015 = vld [vmem:[%s6 + $0x8] sm:$0xff]
        %v1016 = vpack.c.bf16 %v997, %v995
        %v1017 = vpack.c.bf16 %v1002, %v1000
        %v1018 = vpack.c.bf16 %v1007, %v1005
        %v1019 = vpack.c.bf16 %v1012, %v1010
        %v1020 = vpack.c.bf16 %v1015, %v1014
        %v1022 = vsel %vm710, %v1016, 0
        %v1025 = vsel %vm710, %v1017, 0
        %v1028 = vsel %vm710, %v1018, 0
        %v1031 = vsel %vm710, %v1019, 0
        %1033 = vmatpush.bf16.msra.mxu0 0
        %1034 = vmatpush.bf16.msra.mxu0 0
        %1035 = vmatpush.bf16.msra.mxu0 0
        %1036 = vmatpush.bf16.msra.mxu0 0
        %1037 = vmatpush.bf16.msra.mxu0 0
        %1038 = vmatpush.bf16.msra.mxu0 0
        %1039 = vmatpush.bf16.msra.mxu0 0
        %1040 = vmatpush.bf16.msra.mxu0 %v1020
        %1041 = vmatmul.bf16.gmra.mxu0 %v1022
        %v1042 = vpop.f32.mrf.mxu0
        %v1043 = vadd.f32 0.0, %v1042
        %v1044 = vpop.f32.mrf.mxu0
        %v1045 = vadd.f32 0.0, %v1044
        %1046 = vmatmul.bf16.gmra.mxu0 %v1025
        %v1047 = vpop.f32.mrf.mxu0
        %v1048 = vadd.f32 0.0, %v1047
        %v1049 = vpop.f32.mrf.mxu0
        %v1050 = vadd.f32 0.0, %v1049
        %1051 = vmatmul.bf16.gmra.mxu0 %v1028
        %v1052 = vpop.f32.mrf.mxu0
        %v1053 = vadd.f32 0.0, %v1052
        %v1054 = vpop.f32.mrf.mxu0
        %v1055 = vadd.f32 0.0, %v1054
        %1056 = vmatmul.bf16.gmra.mxu0 %v1031
        %v1057 = vpop.f32.mrf.mxu0
        %v1058 = vadd.f32 0.0, %v1057
        %v1059 = vpop.f32.mrf.mxu0
        %v1060 = vadd.f32 0.0, %v1059
        %1061 = vdwg.mxu0
        %v1062 = vadd.f32 %v556, %v1043
        %v1063 = vadd.f32 %v557, %v1045
        %v1064 = vadd.f32 %v558, %v1048
        %v1065 = vadd.f32 %v559, %v1050
        %v1066 = vadd.f32 %v560, %v1053
        %v1067 = vadd.f32 %v561, %v1055
        %v1068 = vadd.f32 %v562, %v1058
        %v1069 = vadd.f32 %v563, %v1060
        %v1070 = vld [vmem:[%s7] sm:$0x1]
        %v1072 = vperm.slane %v1070, 0
        %v1074 = vadd.f32 %v1062, %v1072
        %v1075 = vadd.f32 %v1063, %v1072
        %v1076 = vadd.f32 %v1064, %v1072
        %v1077 = vadd.f32 %v1065, %v1072
        %v1078 = vadd.f32 %v1066, %v1072
        %v1079 = vadd.f32 %v1067, %v1072
        %v1080 = vadd.f32 %v1068, %v1072
        %v1081 = vadd.f32 %v1069, %v1072
        %1082 = vst.msk [vmem:[%s541] sm:$0xff] %vm578, %v1074
        %1083 = vst.msk [vmem:[%s541 + $0x8] sm:$0xff] %vm578, %v1075
        %1084 = vst.msk [vmem:[%s541 + $0x10] sm:$0xff] %vm578, %v1076
        %1085 = vst.msk [vmem:[%s541 + $0x18] sm:$0xff] %vm578, %v1077
        %1086 = vst.msk [vmem:[%s541 + $0x20] sm:$0xff] %vm578, %v1078
        %1087 = vst.msk [vmem:[%s541 + $0x28] sm:$0xff] %vm578, %v1079
        %1088 = vst.msk [vmem:[%s541 + $0x30] sm:$0xff] %vm578, %v1080
        %1089 = vst.msk [vmem:[%s541 + $0x38] sm:$0xff] %vm578, %v1081
        %v1090 = vld [vmem:[%s551] sm:$0xff]
        %v1091 = vld [vmem:[%s551 + $0x8] sm:$0xff]
        %v1092 = vld [vmem:[%s551 + $0x10] sm:$0xff]
        %v1093 = vld [vmem:[%s551 + $0x18] sm:$0xff]
        %v1094 = vld [vmem:[%s551 + $0x20] sm:$0xff]
        %v1095 = vld [vmem:[%s551 + $0x28] sm:$0xff]
        %v1096 = vld [vmem:[%s551 + $0x30] sm:$0xff]
        %v1097 = vld [vmem:[%s551 + $0x38] sm:$0xff]
        %v1098 = vld [vmem:[%s3] sm:$0xff]
        %v1099 = vadd.f32 %v1074, %v1090
        %v1100 = vadd.f32 %v1075, %v1091
        %v1101 = vadd.f32 %v1076, %v1092
        %v1102 = vadd.f32 %v1077, %v1093
        %v1103 = vadd.f32 %v1078, %v1094
        %v1104 = vadd.f32 %v1079, %v1095
        %v1105 = vadd.f32 %v1080, %v1096
        %v1106 = vadd.f32 %v1081, %v1097
        %v1107 = vld [vmem:[%s554] sm:$0x1]
        %v1109 = vperm.slane %v1107, 0
        %v1111 = vlaneseq
        %v1112 = vand.u32 %v1111, 127
        %vm1113 = vcmp.ge.s32.totalorder %v1112, 0
        %vm1114 = vcmp.ge.s32.totalorder %v1112, 8
        %vm1115 = vcmp.ge.s32.totalorder %v1112, 16
        %vm1116 = vcmp.ge.s32.totalorder %v1112, 24
        %vm1117 = vcmp.lt.s32.totalorder %v1112, 8
        %vm1118 = vcmp.lt.s32.totalorder %v1112, 16
        %vm1119 = vcmp.lt.s32.totalorder %v1112, 24
        %vm1120 = vcmp.lt.s32.totalorder %v1112, 32
        %vm1121 = vmand %vm1113, %vm1117
        %vm1122 = vmand %vm1114, %vm1118
        %vm1123 = vmand %vm1115, %vm1119
        %vm1124 = vmand %vm1116, %vm1120
        %v1125 = vsel %vm1121, 1, 0
        %v1126 = vsel %vm1122, 1, 0
        %v1127 = vsel %vm1123, 1, 0
        %v1128 = vsel %vm1124, 1, 0
        %v1129 = vcvt.s32.f32 %v1125
        %v1130 = vcvt.s32.f32 %v1126
        %v1131 = vcvt.s32.f32 %v1127
        %v1132 = vcvt.s32.f32 %v1128
        %v1133 = vadd.f32 %v1098, 0.0
        %v1134 = vld [vmem:[#allocation2] sm:$0xff]
        %v1135 = vld [vmem:[#allocation2 + $0x8] sm:$0xff]
        %v1136 = vld [vmem:[#allocation2 + $0x10] sm:$0xff]
        %v1137 = vld [vmem:[#allocation2 + $0x18] sm:$0xff]
        %v1138 = vpack.c.bf16 %v1133, %v1133
        %v1139 = vpack.c.bf16 %v1135, %v1134
        %v1140 = vpack.c.bf16 %v1137, %v1136
        %v1141 = vld [vmem:[%s11] sm:$0x1]
        %v1143 = vperm.slane %v1141, 0
        %v1146 = vsel %vm578, %v1138, 0
        %1148 = vmatpush.bf16.msra.mxu0 0
        %1149 = vmatpush.bf16.msra.mxu0 0
        %1150 = vmatpush.bf16.msra.mxu0 0
        %1151 = vmatpush.bf16.msra.mxu0 0
        %1152 = vmatpush.bf16.msra.mxu0 0
        %1153 = vmatpush.bf16.msra.mxu0 0
        %1154 = vmatpush.bf16.msra.mxu0 %v1140
        %1155 = vmatpush.bf16.msra.mxu0 %v1139
        %1156 = vmatmul.bf16.gmra.mxu0 %v1146
        %v1157 = vpop.f32.mrf.mxu0
        %v1158 = vadd.f32 %v1143, %v1157
        %v1159 = vpop.f32.mrf.mxu0
        %1160 = vdwg.mxu0
        %s1161 = scalar_lea.vmem [#allocation2], 32
        %v1162 = vld [vmem:[%s1161] sm:$0xff]
        %v1163 = vld [vmem:[%s1161 + $0x8] sm:$0xff]
        %v1164 = vld [vmem:[%s1161 + $0x10] sm:$0xff]
        %v1165 = vld [vmem:[%s1161 + $0x18] sm:$0xff]
        %v1166 = vpack.c.bf16 %v1163, %v1162
        %v1167 = vpack.c.bf16 %v1165, %v1164
        %s1168 = scalar_lea.vmem %s11, 1
        %v1169 = vld [vmem:[%s1168] sm:$0x1]
        %v1171 = vperm.slane %v1169, 0
        %1173 = vmatpush.bf16.msra.mxu0 0
        %1174 = vmatpush.bf16.msra.mxu0 0
        %1175 = vmatpush.bf16.msra.mxu0 0
        %1176 = vmatpush.bf16.msra.mxu0 0
        %1177 = vmatpush.bf16.msra.mxu0 0
        %1178 = vmatpush.bf16.msra.mxu0 0
        %1179 = vmatpush.bf16.msra.mxu0 %v1167
        %1180 = vmatpush.bf16.msra.mxu0 %v1166
        %1181 = vmatmul.bf16.gmra.mxu0 %v1146
        %v1182 = vpop.f32.mrf.mxu0
        %v1183 = vadd.f32 %v1171, %v1182
        %v1184 = vpop.f32.mrf.mxu0
        %1185 = vdwg.mxu0
        %s1186 = scalar_lea.vmem [#allocation2], 64
        %v1187 = vld [vmem:[%s1186] sm:$0xff]
        %v1188 = vld [vmem:[%s1186 + $0x8] sm:$0xff]
        %v1189 = vld [vmem:[%s1186 + $0x10] sm:$0xff]
        %v1190 = vld [vmem:[%s1186 + $0x18] sm:$0xff]
        %v1191 = vpack.c.bf16 %v1188, %v1187
        %v1192 = vpack.c.bf16 %v1190, %v1189
        %s1193 = scalar_lea.vmem %s11, 2
        %v1194 = vld [vmem:[%s1193] sm:$0x1]
        %v1196 = vperm.slane %v1194, 0
        %v1199 = vsel %vm578, 0, 0
        %1201 = vmatpush.bf16.msra.mxu0 0
        %1202 = vmatpush.bf16.msra.mxu0 0
        %1203 = vmatpush.bf16.msra.mxu0 0
        %1204 = vmatpush.bf16.msra.mxu0 0
        %1205 = vmatpush.bf16.msra.mxu0 0
        %1206 = vmatpush.bf16.msra.mxu0 0
        %1207 = vmatpush.bf16.msra.mxu0 %v1192
        %1208 = vmatpush.bf16.msra.mxu0 %v1191
        %1209 = vmatmul.bf16.gmra.mxu0 %v1199
        %v1210 = vpop.f32.mrf.mxu0
        %v1211 = vadd.f32 %v1196, %v1210
        %v1212 = vpop.f32.mrf.mxu0
        %1213 = vdwg.mxu0
        %s1214 = scalar_lea.vmem [#allocation2], 96
        %v1215 = vld [vmem:[%s1214] sm:$0xff]
        %v1216 = vld [vmem:[%s1214 + $0x8] sm:$0xff]
        %v1217 = vld [vmem:[%s1214 + $0x10] sm:$0xff]
        %v1218 = vld [vmem:[%s1214 + $0x18] sm:$0xff]
        %s1219 = scalar_lea.vmem %s11, 3
        %v1220 = vld [vmem:[%s1219] sm:$0x1]
        %v1221 = vmul.f32 %v1158, 0.35355338
        %v1222 = vmul.f32 %v1221, %v1129
        %v1223 = vmul.f32 %v1221, %v1130
        %v1224 = vmul.f32 %v1221, %v1131
        %v1225 = vmul.f32 %v1221, %v1132
        %v1226 = vpack.c.bf16 %v1222, %v1222
        %v1227 = vpack.c.bf16 %v1223, %v1223
        %v1228 = vpack.c.bf16 %v1224, %v1224
        %v1229 = vpack.c.bf16 %v1225, %v1225
        %v1230 = vpack.c.bf16 %v1183, %v1183
        %v1232 = vsel %vm578, %v1226, 0
        %v1235 = vsel %vm578, %v1230, 0
        %1237 = vmatpush.bf16.xpose.msra.mxu0 0
        %1238 = vmatpush.bf16.xpose.msra.mxu0 0
        %1239 = vmatpush.bf16.xpose.msra.mxu0 0
        %1240 = vmatpush.bf16.xpose.msra.mxu0 0
        %1241 = vmatpush.bf16.xpose.msra.mxu0 0
        %1242 = vmatpush.bf16.xpose.msra.mxu0 0
        %1243 = vmatpush.bf16.xpose.msra.mxu0 0
        %1244 = vmatpush.bf16.xpose.msra.mxu0 %v1235
        %1245 = vmatmul.bf16.gmra.mxu0 %v1232
        %v1246 = vpop.f32.mrf.mxu0
        %v1247 = vadd.f32 0.0, %v1246
        %v1248 = vpop.f32.mrf.mxu0
        %1249 = vdwg.mxu0
        %v1251 = vsel %vm578, %v1227, 0
        %1253 = vmatpush.bf16.xpose.msra.mxu0 0
        %1254 = vmatpush.bf16.xpose.msra.mxu0 0
        %1255 = vmatpush.bf16.xpose.msra.mxu0 0
        %1256 = vmatpush.bf16.xpose.msra.mxu0 0
        %1257 = vmatpush.bf16.xpose.msra.mxu0 0
        %1258 = vmatpush.bf16.xpose.msra.mxu0 0
        %1259 = vmatpush.bf16.xpose.msra.mxu0 0
        %1260 = vmatpush.bf16.xpose.msra.mxu0 %v1235
        %1261 = vmatmul.bf16.gmra.mxu0 %v1251
        %v1262 = vpop.f32.mrf.mxu0
        %v1263 = vadd.f32 0.0, %v1262
        %v1264 = vpop.f32.mrf.mxu0
        %1265 = vdwg.mxu0
        %v1267 = vsel %vm578, %v1228, 0
        %1269 = vmatpush.bf16.xpose.msra.mxu0 0
        %1270 = vmatpush.bf16.xpose.msra.mxu0 0
        %1271 = vmatpush.bf16.xpose.msra.mxu0 0
        %1272 = vmatpush.bf16.xpose.msra.mxu0 0
        %1273 = vmatpush.bf16.xpose.msra.mxu0 0
        %1274 = vmatpush.bf16.xpose.msra.mxu0 0
        %1275 = vmatpush.bf16.xpose.msra.mxu0 0
        %1276 = vmatpush.bf16.xpose.msra.mxu0 %v1235
        %1277 = vmatmul.bf16.gmra.mxu0 %v1267
        %v1278 = vpop.f32.mrf.mxu0
        %v1279 = vadd.f32 0.0, %v1278
        %v1280 = vpop.f32.mrf.mxu0
        %1281 = vdwg.mxu0
        %v1283 = vsel %vm578, %v1229, 0
        %1285 = vmatpush.bf16.xpose.msra.mxu0 0
        %1286 = vmatpush.bf16.xpose.msra.mxu0 0
        %1287 = vmatpush.bf16.xpose.msra.mxu0 0
        %1288 = vmatpush.bf16.xpose.msra.mxu0 0
        %1289 = vmatpush.bf16.xpose.msra.mxu0 0
        %1290 = vmatpush.bf16.xpose.msra.mxu0 0
        %1291 = vmatpush.bf16.xpose.msra.mxu0 0
        %1292 = vmatpush.bf16.xpose.msra.mxu0 %v1235
        %1293 = vmatmul.bf16.gmra.mxu0 %v1283
        %v1294 = vpop.f32.mrf.mxu0
        %v1295 = vadd.f32 0.0, %v1294
        %v1296 = vpop.f32.mrf.mxu0
        %1297 = vdwg.mxu0
        %vm1298 = vcmask 64512
        %v1299 = vsel %vm1298, %v1247, -inf
        %1300 = vmax.xlane.f32.xlu0 %v1299
        %v1301 = vpop.xlane.xlu0 %1300
        %v1302 = vsel %vm1298, %v1263, -inf
        %1303 = vmax.xlane.f32.xlu0 %v1302
        %v1304 = vpop.xlane.xlu0 %1303
        %v1305 = vsel %vm1298, %v1279, -inf
        %1306 = vmax.xlane.f32.xlu0 %v1305
        %v1307 = vpop.xlane.xlu0 %1306
        %v1308 = vsel %vm1298, %v1295, -inf
        %1309 = vmax.xlane.f32.xlu0 %v1308
        %v1310 = vpop.xlane.xlu0 %1309
        %v1311 = vsub.f32 %v1247, %v1301
        %v1312 = vsub.f32 %v1263, %v1304
        %v1313 = vsub.f32 %v1279, %v1307
        %v1314 = vsub.f32 %v1295, %v1310
        %v1315 = vmul.f32 %v1311, 1.442695
        %v1316 = vpow.pop %v1315
        %v1317 = vmul.f32 %v1312, 1.442695
        %v1318 = vpow.pop %v1317
        %v1319 = vmul.f32 %v1313, 1.442695
        %v1320 = vpow.pop %v1319
        %v1321 = vmul.f32 %v1314, 1.442695
        %v1322 = vpow.pop %v1321
        %v1323 = vsel %vm1298, %v1316, 0.0
        %1324 = vadd.xlane.f32.xlu0 %v1323
        %v1325 = vpop.xlane.xlu0 %1324
        %v1326 = vsel %vm1298, %v1318, 0.0
        %1327 = vadd.xlane.f32.xlu0 %v1326
        %v1328 = vpop.xlane.xlu0 %1327
        %v1329 = vsel %vm1298, %v1320, 0.0
        %1330 = vadd.xlane.f32.xlu0 %v1329
        %v1331 = vpop.xlane.xlu0 %1330
        %v1332 = vsel %vm1298, %v1322, 0.0
        %1333 = vadd.xlane.f32.xlu0 %v1332
        %v1334 = vpop.xlane.xlu0 %1333
        %v1335 = vrcp.pop %v1325
        %v1336 = vmul.f32 %v1325, %v1335
        %v1337 = vsub.f32 1.0, %v1336
        %v1338 = vmul.f32 %v1335, %v1337
        %v1339 = vadd.f32 %v1335, %v1338
        %vm1340 = vweird.f32 %v1325
        %vm1341 = vweird.f32 %v1335
        %vm1342 = vmor %vm1340, %vm1341
        %v1343 = vsel %vm1342, %v1335, %v1339
        %v1344 = vand.u32 2147483647, %v1325
        %vm1345 = vcmp.eq.f32.partialorder %v1344, 8.507059e+37
        %v1346 = vand.u32 %v1325, 2147483648
        %v1347 = vor.u32 1.1754944e-38, %v1346
        %v1348 = vsel %vm1345, %v1347, %v1343
        %v1349 = vmul.f32 %v1316, %v1348
        %v1350 = vrcp.pop %v1328
        %v1351 = vmul.f32 %v1328, %v1350
        %v1352 = vsub.f32 1.0, %v1351
        %v1353 = vmul.f32 %v1350, %v1352
        %v1354 = vadd.f32 %v1350, %v1353
        %vm1355 = vweird.f32 %v1328
        %vm1356 = vweird.f32 %v1350
        %vm1357 = vmor %vm1355, %vm1356
        %v1358 = vsel %vm1357, %v1350, %v1354
        %v1359 = vand.u32 2147483647, %v1328
        %vm1360 = vcmp.eq.f32.partialorder %v1359, 8.507059e+37
        %v1361 = vand.u32 %v1328, 2147483648
        %v1362 = vor.u32 1.1754944e-38, %v1361
        %v1363 = vsel %vm1360, %v1362, %v1358
        %v1364 = vmul.f32 %v1318, %v1363
        %v1365 = vrcp.pop %v1331
        %v1366 = vmul.f32 %v1331, %v1365
        %v1367 = vsub.f32 1.0, %v1366
        %v1368 = vmul.f32 %v1365, %v1367
        %v1369 = vadd.f32 %v1365, %v1368
        %vm1370 = vweird.f32 %v1331
        %vm1371 = vweird.f32 %v1365
        %vm1372 = vmor %vm1370, %vm1371
        %v1373 = vsel %vm1372, %v1365, %v1369
        %v1374 = vand.u32 2147483647, %v1331
        %vm1375 = vcmp.eq.f32.partialorder %v1374, 8.507059e+37
        %v1376 = vand.u32 %v1331, 2147483648
        %v1377 = vor.u32 1.1754944e-38, %v1376
        %v1378 = vsel %vm1375, %v1377, %v1373
        %v1379 = vmul.f32 %v1320, %v1378
        %v1380 = vrcp.pop %v1334
        %v1381 = vmul.f32 %v1334, %v1380
        %v1382 = vsub.f32 1.0, %v1381
        %v1383 = vmul.f32 %v1380, %v1382
        %v1384 = vadd.f32 %v1380, %v1383
        %vm1385 = vweird.f32 %v1334
        %vm1386 = vweird.f32 %v1380
        %vm1387 = vmor %vm1385, %vm1386
        %v1388 = vsel %vm1387, %v1380, %v1384
        %v1389 = vand.u32 2147483647, %v1334
        %vm1390 = vcmp.eq.f32.partialorder %v1389, 8.507059e+37
        %v1391 = vand.u32 %v1334, 2147483648
        %v1392 = vor.u32 1.1754944e-38, %v1391
        %v1393 = vsel %vm1390, %v1392, %v1388
        %v1394 = vmul.f32 %v1322, %v1393
        %v1395 = vmul.f32 %v1211, %v1129
        %v1396 = vmul.f32 %v1211, %v1130
        %v1397 = vmul.f32 %v1211, %v1131
        %v1398 = vmul.f32 %v1211, %v1132
        %v1399 = vpack.c.bf16 %v1349, %v1349
        %v1400 = vpack.c.bf16 %v1364, %v1364
        %v1401 = vpack.c.bf16 %v1379, %v1379
        %v1402 = vpack.c.bf16 %v1394, %v1394
        %v1403 = vpack.c.bf16 %v1395, %v1395
        %v1404 = vpack.c.bf16 %v1396, %v1396
        %v1405 = vpack.c.bf16 %v1397, %v1397
        %v1406 = vpack.c.bf16 %v1398, %v1398
        %v1408 = vsel %vm1298, %v1399, 0
        %vm1410 = vcmask 1043456
        %v1412 = vsel %vm1410, %v1403, 0
        %1414 = vmatpush.bf16.msra.mxu0 0
        %1415 = vmatpush.bf16.msra.mxu0 0
        %1416 = vmatpush.bf16.msra.mxu0 0
        %1417 = vmatpush.bf16.msra.mxu0 0
        %1418 = vmatpush.bf16.msra.mxu0 0
        %1419 = vmatpush.bf16.msra.mxu0 0
        %1420 = vmatpush.bf16.msra.mxu0 0
        %1421 = vmatpush.bf16.msra.mxu0 %v1412
        %1422 = vmatmul.bf16.gmra.mxu0 %v1408
        %v1423 = vpop.f32.mrf.mxu0
        %v1424 = vadd.f32 0.0, %v1423
        %v1425 = vpop.f32.mrf.mxu0
        %1426 = vdwg.mxu0
        %v1428 = vsel %vm1298, %v1400, 0
        %v1431 = vsel %vm1410, %v1404, 0
        %1433 = vmatpush.bf16.msra.mxu0 0
        %1434 = vmatpush.bf16.msra.mxu0 0
        %1435 = vmatpush.bf16.msra.mxu0 0
        %1436 = vmatpush.bf16.msra.mxu0 0
        %1437 = vmatpush.bf16.msra.mxu0 0
        %1438 = vmatpush.bf16.msra.mxu0 0
        %1439 = vmatpush.bf16.msra.mxu0 0
        %1440 = vmatpush.bf16.msra.mxu0 %v1431
        %1441 = vmatmul.bf16.gmra.mxu0 %v1428
        %v1442 = vpop.f32.mrf.mxu0
        %v1443 = vadd.f32 0.0, %v1442
        %v1444 = vpop.f32.mrf.mxu0
        %1445 = vdwg.mxu0
        %v1447 = vsel %vm1298, %v1401, 0
        %v1450 = vsel %vm1410, %v1405, 0
        %1452 = vmatpush.bf16.msra.mxu0 0
        %1453 = vmatpush.bf16.msra.mxu0 0
        %1454 = vmatpush.bf16.msra.mxu0 0
        %1455 = vmatpush.bf16.msra.mxu0 0
        %1456 = vmatpush.bf16.msra.mxu0 0
        %1457 = vmatpush.bf16.msra.mxu0 0
        %1458 = vmatpush.bf16.msra.mxu0 0
        %1459 = vmatpush.bf16.msra.mxu0 %v1450
        %1460 = vmatmul.bf16.gmra.mxu0 %v1447
        %v1461 = vpop.f32.mrf.mxu0
        %v1462 = vadd.f32 0.0, %v1461
        %v1463 = vpop.f32.mrf.mxu0
        %1464 = vdwg.mxu0
        %v1466 = vsel %vm1298, %v1402, 0
        %v1469 = vsel %vm1410, %v1406, 0
        %1471 = vmatpush.bf16.msra.mxu0 0
        %1472 = vmatpush.bf16.msra.mxu0 0
        %1473 = vmatpush.bf16.msra.mxu0 0
        %1474 = vmatpush.bf16.msra.mxu0 0
        %1475 = vmatpush.bf16.msra.mxu0 0
        %1476 = vmatpush.bf16.msra.mxu0 0
        %1477 = vmatpush.bf16.msra.mxu0 0
        %1478 = vmatpush.bf16.msra.mxu0 %v1469
        %1479 = vmatmul.bf16.gmra.mxu0 %v1466
        %v1480 = vpop.f32.mrf.mxu0
        %v1481 = vadd.f32 0.0, %v1480
        %v1482 = vpop.f32.mrf.mxu0
        %1483 = vdwg.mxu0
        %v1484 = vsel %vm578, %v1424, 0.0
        %v1485 = vsel %vm578, %v1443, 0.0
        %v1486 = vadd.f32 %v1484, %v1485
        %v1487 = vsel %vm578, %v1462, 0.0
        %v1488 = vadd.f32 %v1486, %v1487
        %v1489 = vsel %vm578, %v1481, 0.0
        %v1490 = vadd.f32 %v1488, %v1489
        %v1491 = vpack.c.bf16 %v1490, %v1490
        %v1492 = vpack.c.bf16 %v1216, %v1215
        %v1493 = vpack.c.bf16 %v1218, %v1217
        %v1495 = vperm.slane %v1220, 0
        %v1498 = vsel %vm578, %v1491, 0
        %1500 = vmatpush.bf16.msra.mxu0 0
        %1501 = vmatpush.bf16.msra.mxu0 0
        %1502 = vmatpush.bf16.msra.mxu0 0
        %1503 = vmatpush.bf16.msra.mxu0 0
        %1504 = vmatpush.bf16.msra.mxu0 0
        %1505 = vmatpush.bf16.msra.mxu0 0
        %1506 = vmatpush.bf16.msra.mxu0 %v1493
        %1507 = vmatpush.bf16.msra.mxu0 %v1492
        %1508 = vmatmul.bf16.gmra.mxu0 %v1498
        %v1509 = vpop.f32.mrf.mxu0
        %v1510 = vadd.f32 %v1495, %v1509
        %v1511 = vpop.f32.mrf.mxu0
        %1512 = vdwg.mxu0
        %v1513 = vadd.f32 %v1510, 0.0
        %s1514 = scalar_lea.vmem %s11, 8
        %v1515 = vld [vmem:[%s1514] sm:$0x1]
        %s1516 = scalar_lea.vmem %s11, 9
        %v1517 = vld [vmem:[%s1516] sm:$0x1]
        %v1518 = vsel %vm578, %v1513, 0.0
        %1519 = vadd.xlane.f32.xlu0 %v1518
        %v1520 = vpop.xlane.xlu0 %1519
        %v1521 = vrcp.pop 32.0
        %v1522 = vmul.f32 32.0, %v1521
        %v1523 = vsub.f32 1.0, %v1522
        %v1524 = vmul.f32 %v1521, %v1523
        %v1525 = vadd.f32 %v1521, %v1524
        %vm1526 = vweird.f32 %v1521
        %v1527 = vsel %vm1526, %v1521, %v1525
        %v1528 = vmul.f32 %v1520, %v1527
        %v1529 = vsub.f32 %v1513, %v1528
        %v1530 = vmul.f32 %v1529, %v1529
        %v1531 = vsel %vm578, %v1530, 0.0
        %1532 = vadd.xlane.f32.xlu0 %v1531
        %v1533 = vpop.xlane.xlu0 %1532
        %v1534 = vmul.f32 %v1533, %v1527
        %v1535 = vadd.f32 %v1534, 1e-05
        %v1536 = vrsqrt.pop %v1535
        %v1537 = vmul.f32 %v1536, %v1535
        %v1538 = vmul.f32 %v1537, %v1536
        %v1539 = vmul.f32 0.5, %v1538
        %v1540 = vsub.f32 1.5, %v1539
        %v1541 = vmul.f32 %v1536, %v1540
        %vm1542 = vweird.f32 %v1535
        %vm1543 = vweird.f32 %v1536
        %vm1544 = vmor %vm1542, %vm1543
        %v1545 = vsel %vm1544, %v1536, %v1541
        %v1546 = vmul.f32 %v1529, %v1545
        %v1548 = vperm.slane %v1515, 0
        %v1550 = vmul.f32 %v1546, %v1548
        %v1552 = vperm.slane %v1517, 0
        %v1554 = vadd.f32 %v1550, %v1552
        %v1555 = vadd.f32 %v1554, %v1098
        %s1556 = scalar_lea.vmem [#allocation2], 128
        %v1557 = vld [vmem:[%s1556] sm:$0xff]
        %v1558 = vld [vmem:[%s1556 + $0x8] sm:$0xff]
        %v1559 = vld [vmem:[%s1556 + $0x10] sm:$0xff]
        %v1560 = vld [vmem:[%s1556 + $0x18] sm:$0xff]
        %v1561 = vpack.c.bf16 %v1555, %v1555
        %v1562 = vpack.c.bf16 %v1558, %v1557
        %v1563 = vpack.c.bf16 %v1560, %v1559
        %s1564 = scalar_lea.vmem %s11, 4
        %v1565 = vld [vmem:[%s1564] sm:$0x1]
        %v1567 = vperm.slane %v1565, 0
        %v1570 = vsel %vm578, %v1561, 0
        %1572 = vmatpush.bf16.msra.mxu0 0
        %1573 = vmatpush.bf16.msra.mxu0 0
        %1574 = vmatpush.bf16.msra.mxu0 0
        %1575 = vmatpush.bf16.msra.mxu0 0
        %1576 = vmatpush.bf16.msra.mxu0 0
        %1577 = vmatpush.bf16.msra.mxu0 0
        %1578 = vmatpush.bf16.msra.mxu0 %v1563
        %1579 = vmatpush.bf16.msra.mxu0 %v1562
        %1580 = vmatmul.bf16.gmra.mxu0 %v1570
        %v1581 = vpop.f32.mrf.mxu0
        %v1582 = vadd.f32 %v1567, %v1581
        %v1583 = vpop.f32.mrf.mxu0
        %1584 = vdwg.mxu0
        %s1585 = scalar_lea.vmem [#allocation2], 160
        %v1586 = vld [vmem:[%s1585] sm:$0xff]
        %v1587 = vld [vmem:[%s1585 + $0x8] sm:$0xff]
        %v1588 = vld [vmem:[%s1585 + $0x10] sm:$0xff]
        %v1589 = vld [vmem:[%s1585 + $0x18] sm:$0xff]
        %v1590 = vpack.c.bf16 %v1100, %v1099
        %v1591 = vpack.c.bf16 %v1102, %v1101
        %v1592 = vpack.c.bf16 %v1104, %v1103
        %v1593 = vpack.c.bf16 %v1106, %v1105
        %v1594 = vpack.c.bf16 %v1587, %v1586
        %v1595 = vpack.c.bf16 %v1589, %v1588
        %s1596 = scalar_lea.vmem %s11, 5
        %v1597 = vld [vmem:[%s1596] sm:$0x1]
        %v1599 = vperm.slane %v1597, 0
        %v1602 = vsel %vm578, %v1590, 0
        %v1605 = vsel %vm578, %v1591, 0
        %v1608 = vsel %vm578, %v1592, 0
        %v1611 = vsel %vm578, %v1593, 0
        %1613 = vmatpush.bf16.msra.mxu0 0
        %1614 = vmatpush.bf16.msra.mxu0 0
        %1615 = vmatpush.bf16.msra.mxu0 0
        %1616 = vmatpush.bf16.msra.mxu0 0
        %1617 = vmatpush.bf16.msra.mxu0 0
        %1618 = vmatpush.bf16.msra.mxu0 0
        %1619 = vmatpush.bf16.msra.mxu0 %v1595
        %1620 = vmatpush.bf16.msra.mxu0 %v1594
        %1621 = vmatmul.bf16.gmra.mxu0 %v1602
        %v1622 = vpop.f32.mrf.mxu0
        %v1623 = vadd.f32 %v1599, %v1622
        %v1624 = vpop.f32.mrf.mxu0
        %v1625 = vadd.f32 %v1599, %v1624
        %1626 = vmatmul.bf16.gmra.mxu0 %v1605
        %v1627 = vpop.f32.mrf.mxu0
        %v1628 = vadd.f32 %v1599, %v1627
        %v1629 = vpop.f32.mrf.mxu0
        %v1630 = vadd.f32 %v1599, %v1629
        %1631 = vmatmul.bf16.gmra.mxu0 %v1608
        %v1632 = vpop.f32.mrf.mxu0
        %v1633 = vadd.f32 %v1599, %v1632
        %v1634 = vpop.f32.mrf.mxu0
        %v1635 = vadd.f32 %v1599, %v1634
        %1636 = vmatmul.bf16.gmra.mxu0 %v1611
        %v1637 = vpop.f32.mrf.mxu0
        %v1638 = vadd.f32 %v1599, %v1637
        %v1639 = vpop.f32.mrf.mxu0
        %v1640 = vadd.f32 %v1599, %v1639
        %1641 = vdwg.mxu0
        %s1642 = scalar_lea.vmem [#allocation2], 192
        %v1643 = vld [vmem:[%s1642] sm:$0xff]
        %v1644 = vld [vmem:[%s1642 + $0x8] sm:$0xff]
        %v1645 = vld [vmem:[%s1642 + $0x10] sm:$0xff]
        %v1646 = vld [vmem:[%s1642 + $0x18] sm:$0xff]
        %v1647 = vpack.c.bf16 %v1075, %v1074
        %v1648 = vpack.c.bf16 %v1077, %v1076
        %v1649 = vpack.c.bf16 %v1079, %v1078
        %v1650 = vpack.c.bf16 %v1081, %v1080
        %v1651 = vpack.c.bf16 %v1644, %v1643
        %v1652 = vpack.c.bf16 %v1646, %v1645
        %s1653 = scalar_lea.vmem %s11, 6
        %v1654 = vld [vmem:[%s1653] sm:$0x1]
        %v1656 = vperm.slane %v1654, 0
        %v1659 = vsel %vm578, %v1647, 0
        %v1662 = vsel %vm578, %v1648, 0
        %v1665 = vsel %vm578, %v1649, 0
        %v1668 = vsel %vm578, %v1650, 0
        %1670 = vmatpush.bf16.msra.mxu0 0
        %1671 = vmatpush.bf16.msra.mxu0 0
        %1672 = vmatpush.bf16.msra.mxu0 0
        %1673 = vmatpush.bf16.msra.mxu0 0
        %1674 = vmatpush.bf16.msra.mxu0 0
        %1675 = vmatpush.bf16.msra.mxu0 0
        %1676 = vmatpush.bf16.msra.mxu0 %v1652
        %1677 = vmatpush.bf16.msra.mxu0 %v1651
        %1678 = vmatmul.bf16.gmra.mxu0 %v1659
        %v1679 = vpop.f32.mrf.mxu0
        %v1680 = vadd.f32 %v1656, %v1679
        %v1681 = vpop.f32.mrf.mxu0
        %v1682 = vadd.f32 %v1656, %v1681
        %1683 = vmatmul.bf16.gmra.mxu0 %v1662
        %v1684 = vpop.f32.mrf.mxu0
        %v1685 = vadd.f32 %v1656, %v1684
        %v1686 = vpop.f32.mrf.mxu0
        %v1687 = vadd.f32 %v1656, %v1686
        %1688 = vmatmul.bf16.gmra.mxu0 %v1665
        %v1689 = vpop.f32.mrf.mxu0
        %v1690 = vadd.f32 %v1656, %v1689
        %v1691 = vpop.f32.mrf.mxu0
        %v1692 = vadd.f32 %v1656, %v1691
        %1693 = vmatmul.bf16.gmra.mxu0 %v1668
        %v1694 = vpop.f32.mrf.mxu0
        %v1695 = vadd.f32 %v1656, %v1694
        %v1696 = vpop.f32.mrf.mxu0
        %v1697 = vadd.f32 %v1656, %v1696
        %1698 = vdwg.mxu0
        %s1699 = scalar_lea.vmem [#allocation2], 224
        %v1700 = vld [vmem:[%s1699] sm:$0xff]
        %v1701 = vld [vmem:[%s1699 + $0x8] sm:$0xff]
        %v1702 = vld [vmem:[%s1699 + $0x10] sm:$0xff]
        %v1703 = vld [vmem:[%s1699 + $0x18] sm:$0xff]
        %s1704 = scalar_lea.vmem %s11, 7
        %v1705 = vld [vmem:[%s1704] sm:$0x1]
        %v1706 = vmul.f32 %v1582, 0.35355338
        %v1707 = vmul.f32 %v1706, %v1129
        %v1708 = vmul.f32 %v1706, %v1130
        %v1709 = vmul.f32 %v1706, %v1131
        %v1710 = vmul.f32 %v1706, %v1132
        %v1711 = vpack.c.bf16 %v1707, %v1707
        %v1712 = vpack.c.bf16 %v1708, %v1708
        %v1713 = vpack.c.bf16 %v1709, %v1709
        %v1714 = vpack.c.bf16 %v1710, %v1710
        %v1715 = vpack.c.bf16 %v1623, %v1623
        %v1716 = vpack.c.bf16 %v1625, %v1625
        %v1717 = vpack.c.bf16 %v1628, %v1628
        %v1718 = vpack.c.bf16 %v1630, %v1630
        %v1719 = vpack.c.bf16 %v1633, %v1633
        %v1720 = vpack.c.bf16 %v1635, %v1635
        %v1721 = vpack.c.bf16 %v1638, %v1638
        %v1722 = vpack.c.bf16 %v1640, %v1640
        %v1731 = vunpack.c.l.b16 %v1715
        %v1732 = vunpack.c.l.b16 %v1716
        %v1733 = vunpack.c.l.b16 %v1717
        %v1734 = vunpack.c.l.b16 %v1718
        %v1735 = vunpack.c.l.b16 %v1719
        %v1736 = vunpack.c.l.b16 %v1720
        %v1737 = vunpack.c.l.b16 %v1721
        %v1738 = vunpack.c.l.b16 %v1722
        %v1739 = vpack.c.b16 %v1732, %v1731
        %v1740 = vpack.c.b16 %v1734, %v1733
        %v1741 = vpack.c.b16 %v1736, %v1735
        %v1742 = vpack.c.b16 %v1738, %v1737
        %v1744 = vsel %vm578, %v1711, 0
        %v1747 = vsel %vm578, %v1739, 0
        %v1750 = vsel %vm578, %v1740, 0
        %v1753 = vsel %vm578, %v1741, 0
        %v1756 = vsel %vm578, %v1742, 0
        %1758 = vmatpush.bf16.xpose.msra.mxu0 0
        %1759 = vmatpush.bf16.xpose.msra.mxu0 0
        %1760 = vmatpush.bf16.xpose.msra.mxu0 0
        %1761 = vmatpush.bf16.xpose.msra.mxu0 0
        %1762 = vmatpush.bf16.xpose.msra.mxu0 %v1756
        %1763 = vmatpush.bf16.xpose.msra.mxu0 %v1753
        %1764 = vmatpush.bf16.xpose.msra.mxu0 %v1750
        %1765 = vmatpush.bf16.xpose.msra.mxu0 %v1747
        %1766 = vmatmul.bf16.gmra.mxu0 %v1744
        %v1767 = vpop.f32.mrf.mxu0
        %v1768 = vadd.f32 %v1109, %v1767
        %v1769 = vpop.f32.mrf.mxu0
        %1770 = vdwg.mxu0
        %v1772 = vsel %vm578, %v1712, 0
        %1774 = vmatpush.bf16.xpose.msra.mxu0 0
        %1775 = vmatpush.bf16.xpose.msra.mxu0 0
        %1776 = vmatpush.bf16.xpose.msra.mxu0 0
        %1777 = vmatpush.bf16.xpose.msra.mxu0 0
        %1778 = vmatpush.bf16.xpose.msra.mxu0 %v1756
        %1779 = vmatpush.bf16.xpose.msra.mxu0 %v1753
        %1780 = vmatpush.bf16.xpose.msra.mxu0 %v1750
        %1781 = vmatpush.bf16.xpose.msra.mxu0 %v1747
        %1782 = vmatmul.bf16.gmra.mxu0 %v1772
        %v1783 = vpop.f32.mrf.mxu0
        %v1784 = vadd.f32 %v1109, %v1783
        %v1785 = vpop.f32.mrf.mxu0
        %1786 = vdwg.mxu0
        %v1788 = vsel %vm578, %v1713, 0
        %1790 = vmatpush.bf16.xpose.msra.mxu0 0
        %1791 = vmatpush.bf16.xpose.msra.mxu0 0
        %1792 = vmatpush.bf16.xpose.msra.mxu0 0
        %1793 = vmatpush.bf16.xpose.msra.mxu0 0
        %1794 = vmatpush.bf16.xpose.msra.mxu0 %v1756
        %1795 = vmatpush.bf16.xpose.msra.mxu0 %v1753
        %1796 = vmatpush.bf16.xpose.msra.mxu0 %v1750
        %1797 = vmatpush.bf16.xpose.msra.mxu0 %v1747
        %1798 = vmatmul.bf16.gmra.mxu0 %v1788
        %v1799 = vpop.f32.mrf.mxu0
        %v1800 = vadd.f32 %v1109, %v1799
        %v1801 = vpop.f32.mrf.mxu0
        %1802 = vdwg.mxu0
        %v1804 = vsel %vm578, %v1714, 0
        %1806 = vmatpush.bf16.xpose.msra.mxu0 0
        %1807 = vmatpush.bf16.xpose.msra.mxu0 0
        %1808 = vmatpush.bf16.xpose.msra.mxu0 0
        %1809 = vmatpush.bf16.xpose.msra.mxu0 0
        %1810 = vmatpush.bf16.xpose.msra.mxu0 %v1756
        %1811 = vmatpush.bf16.xpose.msra.mxu0 %v1753
        %1812 = vmatpush.bf16.xpose.msra.mxu0 %v1750
        %1813 = vmatpush.bf16.xpose.msra.mxu0 %v1747
        %1814 = vmatmul.bf16.gmra.mxu0 %v1804
        %v1815 = vpop.f32.mrf.mxu0
        %v1816 = vadd.f32 %v1109, %v1815
        %v1817 = vpop.f32.mrf.mxu0
        %1818 = vdwg.mxu0
        %v1819 = vsel %vm772, %v1768, -inf
        %1820 = vmax.xlane.f32.xlu0 %v1819
        %v1821 = vpop.xlane.xlu0 %1820
        %v1822 = vsel %vm772, %v1784, -inf
        %1823 = vmax.xlane.f32.xlu0 %v1822
        %v1824 = vpop.xlane.xlu0 %1823
        %v1825 = vsel %vm772, %v1800, -inf
        %1826 = vmax.xlane.f32.xlu0 %v1825
        %v1827 = vpop.xlane.xlu0 %1826
        %v1828 = vsel %vm772, %v1816, -inf
        %1829 = vmax.xlane.f32.xlu0 %v1828
        %v1830 = vpop.xlane.xlu0 %1829
        %v1831 = vsub.f32 %v1768, %v1821
        %v1832 = vsub.f32 %v1784, %v1824
        %v1833 = vsub.f32 %v1800, %v1827
        %v1834 = vsub.f32 %v1816, %v1830
        %v1835 = vmul.f32 %v1831, 1.442695
        %v1836 = vpow.pop %v1835
        %v1837 = vmul.f32 %v1832, 1.442695
        %v1838 = vpow.pop %v1837
        %v1839 = vmul.f32 %v1833, 1.442695
        %v1840 = vpow.pop %v1839
        %v1841 = vmul.f32 %v1834, 1.442695
        %v1842 = vpow.pop %v1841
        %v1843 = vsel %vm772, %v1836, 0.0
        %1844 = vadd.xlane.f32.xlu0 %v1843
        %v1845 = vpop.xlane.xlu0 %1844
        %v1846 = vsel %vm772, %v1838, 0.0
        %1847 = vadd.xlane.f32.xlu0 %v1846
        %v1848 = vpop.xlane.xlu0 %1847
        %v1849 = vsel %vm772, %v1840, 0.0
        %1850 = vadd.xlane.f32.xlu0 %v1849
        %v1851 = vpop.xlane.xlu0 %1850
        %v1852 = vsel %vm772, %v1842, 0.0
        %1853 = vadd.xlane.f32.xlu0 %v1852
        %v1854 = vpop.xlane.xlu0 %1853
        %v1855 = vrcp.pop %v1845
        %v1856 = vmul.f32 %v1845, %v1855
        %v1857 = vsub.f32 1.0, %v1856
        %v1858 = vmul.f32 %v1855, %v1857
        %v1859 = vadd.f32 %v1855, %v1858
        %vm1860 = vweird.f32 %v1845
        %vm1861 = vweird.f32 %v1855
        %vm1862 = vmor %vm1860, %vm1861
        %v1863 = vsel %vm1862, %v1855, %v1859
        %v1864 = vand.u32 2147483647, %v1845
        %vm1865 = vcmp.eq.f32.partialorder %v1864, 8.507059e+37
        %v1866 = vand.u32 %v1845, 2147483648
        %v1867 = vor.u32 1.1754944e-38, %v1866
        %v1868 = vsel %vm1865, %v1867, %v1863
        %v1869 = vmul.f32 %v1836, %v1868
        %v1870 = vrcp.pop %v1848
        %v1871 = vmul.f32 %v1848, %v1870
        %v1872 = vsub.f32 1.0, %v1871
        %v1873 = vmul.f32 %v1870, %v1872
        %v1874 = vadd.f32 %v1870, %v1873
        %vm1875 = vweird.f32 %v1848
        %vm1876 = vweird.f32 %v1870
        %vm1877 = vmor %vm1875, %vm1876
        %v1878 = vsel %vm1877, %v1870, %v1874
        %v1879 = vand.u32 2147483647, %v1848
        %vm1880 = vcmp.eq.f32.partialorder %v1879, 8.507059e+37
        %v1881 = vand.u32 %v1848, 2147483648
        %v1882 = vor.u32 1.1754944e-38, %v1881
        %v1883 = vsel %vm1880, %v1882, %v1878
        %v1884 = vmul.f32 %v1838, %v1883
        %v1885 = vrcp.pop %v1851
        %v1886 = vmul.f32 %v1851, %v1885
        %v1887 = vsub.f32 1.0, %v1886
        %v1888 = vmul.f32 %v1885, %v1887
        %v1889 = vadd.f32 %v1885, %v1888
        %vm1890 = vweird.f32 %v1851
        %vm1891 = vweird.f32 %v1885
        %vm1892 = vmor %vm1890, %vm1891
        %v1893 = vsel %vm1892, %v1885, %v1889
        %v1894 = vand.u32 2147483647, %v1851
        %vm1895 = vcmp.eq.f32.partialorder %v1894, 8.507059e+37
        %v1896 = vand.u32 %v1851, 2147483648
        %v1897 = vor.u32 1.1754944e-38, %v1896
        %v1898 = vsel %vm1895, %v1897, %v1893
        %v1899 = vmul.f32 %v1840, %v1898
        %v1900 = vrcp.pop %v1854
        %v1901 = vmul.f32 %v1854, %v1900
        %v1902 = vsub.f32 1.0, %v1901
        %v1903 = vmul.f32 %v1900, %v1902
        %v1904 = vadd.f32 %v1900, %v1903
        %vm1905 = vweird.f32 %v1854
        %vm1906 = vweird.f32 %v1900
        %vm1907 = vmor %vm1905, %vm1906
        %v1908 = vsel %vm1907, %v1900, %v1904
        %v1909 = vand.u32 2147483647, %v1854
        %vm1910 = vcmp.eq.f32.partialorder %v1909, 8.507059e+37
        %v1911 = vand.u32 %v1854, 2147483648
        %v1912 = vor.u32 1.1754944e-38, %v1911
        %v1913 = vsel %vm1910, %v1912, %v1908
        %v1914 = vmul.f32 %v1842, %v1913
        %v1915 = vmul.f32 %v1680, %v1129
        %v1916 = vmul.f32 %v1682, %v1129
        %v1917 = vmul.f32 %v1685, %v1129
        %v1918 = vmul.f32 %v1687, %v1129
        %v1919 = vmul.f32 %v1690, %v1129
        %v1920 = vmul.f32 %v1692, %v1129
        %v1921 = vmul.f32 %v1695, %v1129
        %v1922 = vmul.f32 %v1697, %v1129
        %v1923 = vmul.f32 %v1680, %v1130
        %v1924 = vmul.f32 %v1682, %v1130
        %v1925 = vmul.f32 %v1685, %v1130
        %v1926 = vmul.f32 %v1687, %v1130
        %v1927 = vmul.f32 %v1690, %v1130
        %v1928 = vmul.f32 %v1692, %v1130
        %v1929 = vmul.f32 %v1695, %v1130
        %v1930 = vmul.f32 %v1697, %v1130
        %v1931 = vmul.f32 %v1680, %v1131
        %v1932 = vmul.f32 %v1682, %v1131
        %v1933 = vmul.f32 %v1685, %v1131
        %v1934 = vmul.f32 %v1687, %v1131
        %v1935 = vmul.f32 %v1690, %v1131
        %v1936 = vmul.f32 %v1692, %v1131
        %v1937 = vmul.f32 %v1695, %v1131
        %v1938 = vmul.f32 %v1697, %v1131
        %v1939 = vmul.f32 %v1680, %v1132
        %v1940 = vmul.f32 %v1682, %v1132
        %v1941 = vmul.f32 %v1685, %v1132
        %v1942 = vmul.f32 %v1687, %v1132
        %v1943 = vmul.f32 %v1690, %v1132
        %v1944 = vmul.f32 %v1692, %v1132
        %v1945 = vmul.f32 %v1695, %v1132
        %v1946 = vmul.f32 %v1697, %v1132
        %v1947 = vpack.c.bf16 %v1869, %v1869
        %v1948 = vpack.c.bf16 %v1884, %v1884
        %v1949 = vpack.c.bf16 %v1899, %v1899
        %v1950 = vpack.c.bf16 %v1914, %v1914
        %v1951 = vpack.c.bf16 %v1915, %v1915
        %v1952 = vpack.c.bf16 %v1916, %v1916
        %v1953 = vpack.c.bf16 %v1917, %v1917
        %v1954 = vpack.c.bf16 %v1918, %v1918
        %v1955 = vpack.c.bf16 %v1919, %v1919
        %v1956 = vpack.c.bf16 %v1920, %v1920
        %v1957 = vpack.c.bf16 %v1921, %v1921
        %v1958 = vpack.c.bf16 %v1922, %v1922
        %v1959 = vpack.c.bf16 %v1923, %v1923
        %v1960 = vpack.c.bf16 %v1924, %v1924
        %v1961 = vpack.c.bf16 %v1925, %v1925
        %v1962 = vpack.c.bf16 %v1926, %v1926
        %v1963 = vpack.c.bf16 %v1927, %v1927
        %v1964 = vpack.c.bf16 %v1928, %v1928
        %v1965 = vpack.c.bf16 %v1929, %v1929
        %v1966 = vpack.c.bf16 %v1930, %v1930
        %v1967 = vpack.c.bf16 %v1931, %v1931
        %v1968 = vpack.c.bf16 %v1932, %v1932
        %v1969 = vpack.c.bf16 %v1933, %v1933
        %v1970 = vpack.c.bf16 %v1934, %v1934
        %v1971 = vpack.c.bf16 %v1935, %v1935
        %v1972 = vpack.c.bf16 %v1936, %v1936
        %v1973 = vpack.c.bf16 %v1937, %v1937
        %v1974 = vpack.c.bf16 %v1938, %v1938
        %v1975 = vpack.c.bf16 %v1939, %v1939
        %v1976 = vpack.c.bf16 %v1940, %v1940
        %v1977 = vpack.c.bf16 %v1941, %v1941
        %v1978 = vpack.c.bf16 %v1942, %v1942
        %v1979 = vpack.c.bf16 %v1943, %v1943
        %v1980 = vpack.c.bf16 %v1944, %v1944
        %v1981 = vpack.c.bf16 %v1945, %v1945
        %v1982 = vpack.c.bf16 %v1946, %v1946
        %v1991 = vunpack.c.l.b16 %v1951
        %v1992 = vunpack.c.l.b16 %v1952
        %v1993 = vunpack.c.l.b16 %v1953
        %v1994 = vunpack.c.l.b16 %v1954
        %v1995 = vunpack.c.l.b16 %v1955
        %v1996 = vunpack.c.l.b16 %v1956
        %v1997 = vunpack.c.l.b16 %v1957
        %v1998 = vunpack.c.l.b16 %v1958
        %v1999 = vpack.c.b16 %v1992, %v1991
        %v2000 = vpack.c.b16 %v1994, %v1993
        %v2001 = vpack.c.b16 %v1996, %v1995
        %v2002 = vpack.c.b16 %v1998, %v1997
        %v2008 = vsel %vm772, %v1947, 0
        %2010 = vmatpush.bf16.msra.mxu0 0
        %2011 = vmatpush.bf16.msra.mxu0 0
        %2012 = vmatpush.bf16.msra.mxu0 0
        %2013 = vmatpush.bf16.msra.mxu0 0
        %2014 = vmatpush.bf16.msra.mxu0 %v2002
        %2015 = vmatpush.bf16.msra.mxu0 %v2001
        %2016 = vmatpush.bf16.msra.mxu0 %v2000
        %2017 = vmatpush.bf16.msra.mxu0 %v1999
        %2018 = vmatmul.bf16.gmra.mxu0 %v2008
        %v2019 = vpop.f32.mrf.mxu0
        %v2020 = vadd.f32 0.0, %v2019
        %v2021 = vpop.f32.mrf.mxu0
        %2022 = vdwg.mxu0
        %v2031 = vunpack.c.l.b16 %v1959
        %v2032 = vunpack.c.l.b16 %v1960
        %v2033 = vunpack.c.l.b16 %v1961
        %v2034 = vunpack.c.l.b16 %v1962
        %v2035 = vunpack.c.l.b16 %v1963
        %v2036 = vunpack.c.l.b16 %v1964
        %v2037 = vunpack.c.l.b16 %v1965
        %v2038 = vunpack.c.l.b16 %v1966
        %v2039 = vpack.c.b16 %v2032, %v2031
        %v2040 = vpack.c.b16 %v2034, %v2033
        %v2041 = vpack.c.b16 %v2036, %v2035
        %v2042 = vpack.c.b16 %v2038, %v2037
        %v2048 = vsel %vm772, %v1948, 0
        %2050 = vmatpush.bf16.msra.mxu0 0
        %2051 = vmatpush.bf16.msra.mxu0 0
        %2052 = vmatpush.bf16.msra.mxu0 0
        %2053 = vmatpush.bf16.msra.mxu0 0
        %2054 = vmatpush.bf16.msra.mxu0 %v2042
        %2055 = vmatpush.bf16.msra.mxu0 %v2041
        %2056 = vmatpush.bf16.msra.mxu0 %v2040
        %2057 = vmatpush.bf16.msra.mxu0 %v2039
        %2058 = vmatmul.bf16.gmra.mxu0 %v2048
        %v2059 = vpop.f32.mrf.mxu0
        %v2060 = vadd.f32 0.0, %v2059
        %v2061 = vpop.f32.mrf.mxu0
        %2062 = vdwg.mxu0
        %v2071 = vunpack.c.l.b16 %v1967
        %v2072 = vunpack.c.l.b16 %v1968
        %v2073 = vunpack.c.l.b16 %v1969
        %v2074 = vunpack.c.l.b16 %v1970
        %v2075 = vunpack.c.l.b16 %v1971
        %v2076 = vunpack.c.l.b16 %v1972
        %v2077 = vunpack.c.l.b16 %v1973
        %v2078 = vunpack.c.l.b16 %v1974
        %v2079 = vpack.c.b16 %v2072, %v2071
        %v2080 = vpack.c.b16 %v2074, %v2073
        %v2081 = vpack.c.b16 %v2076, %v2075
        %v2082 = vpack.c.b16 %v2078, %v2077
        %v2088 = vsel %vm772, %v1949, 0
        %2090 = vmatpush.bf16.msra.mxu0 0
        %2091 = vmatpush.bf16.msra.mxu0 0
        %2092 = vmatpush.bf16.msra.mxu0 0
        %2093 = vmatpush.bf16.msra.mxu0 0
        %2094 = vmatpush.bf16.msra.mxu0 %v2082
        %2095 = vmatpush.bf16.msra.mxu0 %v2081
        %2096 = vmatpush.bf16.msra.mxu0 %v2080
        %2097 = vmatpush.bf16.msra.mxu0 %v2079
        %2098 = vmatmul.bf16.gmra.mxu0 %v2088
        %v2099 = vpop.f32.mrf.mxu0
        %v2100 = vadd.f32 0.0, %v2099
        %v2101 = vpop.f32.mrf.mxu0
        %2102 = vdwg.mxu0
        %v2111 = vunpack.c.l.b16 %v1975
        %v2112 = vunpack.c.l.b16 %v1976
        %v2113 = vunpack.c.l.b16 %v1977
        %v2114 = vunpack.c.l.b16 %v1978
        %v2115 = vunpack.c.l.b16 %v1979
        %v2116 = vunpack.c.l.b16 %v1980
        %v2117 = vunpack.c.l.b16 %v1981
        %v2118 = vunpack.c.l.b16 %v1982
        %v2119 = vpack.c.b16 %v2112, %v2111
        %v2120 = vpack.c.b16 %v2114, %v2113
        %v2121 = vpack.c.b16 %v2116, %v2115
        %v2122 = vpack.c.b16 %v2118, %v2117
        %v2128 = vsel %vm772, %v1950, 0
        %2130 = vmatpush.bf16.msra.mxu0 0
        %2131 = vmatpush.bf16.msra.mxu0 0
        %2132 = vmatpush.bf16.msra.mxu0 0
        %2133 = vmatpush.bf16.msra.mxu0 0
        %2134 = vmatpush.bf16.msra.mxu0 %v2122
        %2135 = vmatpush.bf16.msra.mxu0 %v2121
        %2136 = vmatpush.bf16.msra.mxu0 %v2120
        %2137 = vmatpush.bf16.msra.mxu0 %v2119
        %2138 = vmatmul.bf16.gmra.mxu0 %v2128
        %v2139 = vpop.f32.mrf.mxu0
        %v2140 = vadd.f32 0.0, %v2139
        %v2141 = vpop.f32.mrf.mxu0
        %2142 = vdwg.mxu0
        %v2143 = vsel %vm578, %v2020, 0.0
        %v2144 = vsel %vm578, %v2060, 0.0
        %v2145 = vadd.f32 %v2143, %v2144
        %v2146 = vsel %vm578, %v2100, 0.0
        %v2147 = vadd.f32 %v2145, %v2146
        %v2148 = vsel %vm578, %v2140, 0.0
        %v2149 = vadd.f32 %v2147, %v2148
        %v2150 = vpack.c.bf16 %v2149, %v2149
        %v2151 = vpack.c.bf16 %v1701, %v1700
        %v2152 = vpack.c.bf16 %v1703, %v1702
        %v2154 = vperm.slane %v1705, 0
        %v2157 = vsel %vm578, %v2150, 0
        %2159 = vmatpush.bf16.msra.mxu0 0
        %2160 = vmatpush.bf16.msra.mxu0 0
        %2161 = vmatpush.bf16.msra.mxu0 0
        %2162 = vmatpush.bf16.msra.mxu0 0
        %2163 = vmatpush.bf16.msra.mxu0 0
        %2164 = vmatpush.bf16.msra.mxu0 0
        %2165 = vmatpush.bf16.msra.mxu0 %v2152
        %2166 = vmatpush.bf16.msra.mxu0 %v2151
        %2167 = vmatmul.bf16.gmra.mxu0 %v2157
        %v2168 = vpop.f32.mrf.mxu0
        %v2169 = vadd.f32 %v2154, %v2168
        %v2170 = vpop.f32.mrf.mxu0
        %2171 = vdwg.mxu0
        %v2172 = vadd.f32 %v1554, %v2169
        %s2173 = scalar_lea.vmem %s11, 10
        %v2174 = vld [vmem:[%s2173] sm:$0x1]
        %s2175 = scalar_lea.vmem %s11, 11
        %v2176 = vld [vmem:[%s2175] sm:$0x1]
        %v2177 = vsel %vm578, %v2172, 0.0
        %2178 = vadd.xlane.f32.xlu0 %v2177
        %v2179 = vpop.xlane.xlu0 %2178
        %v2180 = vmul.f32 %v2179, %v1527
        %v2181 = vsub.f32 %v2172, %v2180
        %v2182 = vmul.f32 %v2181, %v2181
        %v2183 = vsel %vm578, %v2182, 0.0
        %2184 = vadd.xlane.f32.xlu0 %v2183
        %v2185 = vpop.xlane.xlu0 %2184
        %v2186 = vmul.f32 %v2185, %v1527
        %v2187 = vadd.f32 %v2186, 1e-05
        %v2188 = vrsqrt.pop %v2187
        %v2189 = vmul.f32 %v2188, %v2187
        %v2190 = vmul.f32 %v2189, %v2188
        %v2191 = vmul.f32 0.5, %v2190
        %v2192 = vsub.f32 1.5, %v2191
        %v2193 = vmul.f32 %v2188, %v2192
        %vm2194 = vweird.f32 %v2187
        %vm2195 = vweird.f32 %v2188
        %vm2196 = vmor %vm2194, %vm2195
        %v2197 = vsel %vm2196, %v2188, %v2193
        %v2198 = vmul.f32 %v2181, %v2197
        %v2200 = vperm.slane %v2174, 0
        %v2202 = vmul.f32 %v2198, %v2200
        %v2204 = vperm.slane %v2176, 0
        %v2206 = vadd.f32 %v2202, %v2204
        %v2207 = vld [vmem:[%s9] sm:$0xff]
        %v2208 = vld [vmem:[%s9 + $0x8] sm:$0xff]
        %v2209 = vld [vmem:[%s9 + $0x10] sm:$0xff]
        %v2210 = vld [vmem:[%s9 + $0x18] sm:$0xff]
        %v2211 = vpack.c.bf16 %v2206, %v2206
        %v2212 = vpack.c.bf16 %v2208, %v2207
        %v2213 = vpack.c.bf16 %v2210, %v2209
        %v2214 = vld [vmem:[%s12] sm:$0x1]
        %v2216 = vperm.slane %v2214, 0
        %v2219 = vsel %vm578, %v2211, 0
        %2221 = vmatpush.bf16.msra.mxu0 0
        %2222 = vmatpush.bf16.msra.mxu0 0
        %2223 = vmatpush.bf16.msra.mxu0 0
        %2224 = vmatpush.bf16.msra.mxu0 0
        %2225 = vmatpush.bf16.msra.mxu0 0
        %2226 = vmatpush.bf16.msra.mxu0 0
        %2227 = vmatpush.bf16.msra.mxu0 %v2213
        %2228 = vmatpush.bf16.msra.mxu0 %v2212
        %2229 = vmatmul.bf16.gmra.mxu0 %v2219
        %v2230 = vpop.f32.mrf.mxu0
        %v2231 = vadd.f32 %v2216, %v2230
        %v2232 = vpop.f32.mrf.mxu0
        %2233 = vdwg.mxu0
        %v2234 = vmax.f32 %v2231, 0.0
        %v2235 = vld [vmem:[%s10] sm:$0xff]
        %v2236 = vld [vmem:[%s10 + $0x8] sm:$0xff]
        %v2237 = vld [vmem:[%s10 + $0x10] sm:$0xff]
        %v2238 = vld [vmem:[%s10 + $0x18] sm:$0xff]
        %v2239 = vld [vmem:[%s10 + $0x20] sm:$0xff]
        %v2240 = vld [vmem:[%s10 + $0x28] sm:$0xff]
        %v2241 = vld [vmem:[%s10 + $0x30] sm:$0xff]
        %v2242 = vld [vmem:[%s10 + $0x38] sm:$0xff]
        %v2243 = vpack.c.bf16 %v2234, %v2234
        %v2244 = vpack.c.bf16 %v2236, %v2235
        %v2245 = vpack.c.bf16 %v2238, %v2237
        %v2246 = vpack.c.bf16 %v2240, %v2239
        %v2247 = vpack.c.bf16 %v2242, %v2241
        %s2248 = scalar_lea.vmem %s11, 14
        %v2249 = vld [vmem:[%s2248] sm:$0x1]
        %v2251 = vperm.slane %v2249, 0
        %v2254 = vsel %vm772, %v2243, 0
        %2256 = vmatpush.bf16.msra.mxu0 0
        %2257 = vmatpush.bf16.msra.mxu0 0
        %2258 = vmatpush.bf16.msra.mxu0 0
        %2259 = vmatpush.bf16.msra.mxu0 0
        %2260 = vmatpush.bf16.msra.mxu0 %v2247
        %2261 = vmatpush.bf16.msra.mxu0 %v2246
        %2262 = vmatpush.bf16.msra.mxu0 %v2245
        %2263 = vmatpush.bf16.msra.mxu0 %v2244
        %2264 = vmatmul.bf16.gmra.mxu0 %v2254
        %v2265 = vpop.f32.mrf.mxu0
        %v2266 = vadd.f32 %v2251, %v2265
        %v2267 = vpop.f32.mrf.mxu0
        %2268 = vdwg.mxu0
        %v2269 = vadd.f32 %v2206, %v2266
        %s2270 = scalar_lea.vmem %s11, 12
        %v2271 = vld [vmem:[%s2270] sm:$0x1]
        %s2272 = scalar_lea.vmem %s11, 13
        %v2273 = vld [vmem:[%s2272] sm:$0x1]
        %v2274 = vsel %vm578, %v2269, 0.0
        %2275 = vadd.xlane.f32.xlu0 %v2274
        %v2276 = vpop.xlane.xlu0 %2275
        %v2277 = vmul.f32 %v2276, %v1527
        %v2278 = vsub.f32 %v2269, %v2277
        %v2279 = vmul.f32 %v2278, %v2278
        %v2280 = vsel %vm578, %v2279, 0.0
        %2281 = vadd.xlane.f32.xlu0 %v2280
        %v2282 = vpop.xlane.xlu0 %2281
        %v2283 = vmul.f32 %v2282, %v1527
        %v2284 = vadd.f32 %v2283, 1e-05
        %v2285 = vrsqrt.pop %v2284
        %v2286 = vmul.f32 %v2285, %v2284
        %v2287 = vmul.f32 %v2286, %v2285
        %v2288 = vmul.f32 0.5, %v2287
        %v2289 = vsub.f32 1.5, %v2288
        %v2290 = vmul.f32 %v2285, %v2289
        %vm2291 = vweird.f32 %v2284
        %vm2292 = vweird.f32 %v2285
        %vm2293 = vmor %vm2291, %vm2292
        %v2294 = vsel %vm2293, %v2285, %v2290
        %v2295 = vmul.f32 %v2278, %v2294
        %v2297 = vperm.slane %v2271, 0
        %v2299 = vmul.f32 %v2295, %v2297
        %v2301 = vperm.slane %v2273, 0
        %v2303 = vadd.f32 %v2299, %v2301
        %v2304 = vadd.f32 %v2303, %v1098
        %s2305 = scalar_lea.vmem [#allocation2], 256
        %v2306 = vld [vmem:[%s2305] sm:$0xff]
        %v2307 = vld [vmem:[%s2305 + $0x8] sm:$0xff]
        %v2308 = vld [vmem:[%s2305 + $0x10] sm:$0xff]
        %v2309 = vld [vmem:[%s2305 + $0x18] sm:$0xff]
        %v2310 = vpack.c.bf16 %v2304, %v2304
        %v2311 = vpack.c.bf16 %v2307, %v2306
        %v2312 = vpack.c.bf16 %v2309, %v2308
        %s2313 = scalar_lea.vmem %s11, 15
        %v2314 = vld [vmem:[%s2313] sm:$0x1]
        %v2316 = vperm.slane %v2314, 0
        %v2319 = vsel %vm578, %v2310, 0
        %2321 = vmatpush.bf16.msra.mxu0 0
        %2322 = vmatpush.bf16.msra.mxu0 0
        %2323 = vmatpush.bf16.msra.mxu0 0
        %2324 = vmatpush.bf16.msra.mxu0 0
        %2325 = vmatpush.bf16.msra.mxu0 0
        %2326 = vmatpush.bf16.msra.mxu0 0
        %2327 = vmatpush.bf16.msra.mxu0 %v2312
        %2328 = vmatpush.bf16.msra.mxu0 %v2311
        %2329 = vmatmul.bf16.gmra.mxu0 %v2319
        %v2330 = vpop.f32.mrf.mxu0
        %v2331 = vadd.f32 %v2316, %v2330
        %v2332 = vpop.f32.mrf.mxu0
        %2333 = vdwg.mxu0
        %s2334 = scalar_lea.vmem [#allocation2], 288
        %v2335 = vld [vmem:[%s2334] sm:$0xff]
        %v2336 = vld [vmem:[%s2334 + $0x8] sm:$0xff]
        %v2337 = vld [vmem:[%s2334 + $0x10] sm:$0xff]
        %v2338 = vld [vmem:[%s2334 + $0x18] sm:$0xff]
        %v2339 = vpack.c.bf16 %v2336, %v2335
        %v2340 = vpack.c.bf16 %v2338, %v2337
        %s2341 = scalar_lea.vmem %s11, 16
        %v2342 = vld [vmem:[%s2341] sm:$0x1]
        %v2344 = vperm.slane %v2342, 0
        %2346 = vmatpush.bf16.msra.mxu0 0
        %2347 = vmatpush.bf16.msra.mxu0 0
        %2348 = vmatpush.bf16.msra.mxu0 0
        %2349 = vmatpush.bf16.msra.mxu0 0
        %2350 = vmatpush.bf16.msra.mxu0 0
        %2351 = vmatpush.bf16.msra.mxu0 0
        %2352 = vmatpush.bf16.msra.mxu0 %v2340
        %2353 = vmatpush.bf16.msra.mxu0 %v2339
        %2354 = vmatmul.bf16.gmra.mxu0 %v2319
        %v2355 = vpop.f32.mrf.mxu0
        %v2356 = vadd.f32 %v2344, %v2355
        %v2357 = vpop.f32.mrf.mxu0
        %2358 = vdwg.mxu0
        %s2359 = scalar_lea.vmem [#allocation2], 320
        %v2360 = vld [vmem:[%s2359] sm:$0xff]
        %v2361 = vld [vmem:[%s2359 + $0x8] sm:$0xff]
        %v2362 = vld [vmem:[%s2359 + $0x10] sm:$0xff]
        %v2363 = vld [vmem:[%s2359 + $0x18] sm:$0xff]
        %v2364 = vpack.c.bf16 %v2303, %v2303
        %v2365 = vpack.c.bf16 %v2361, %v2360
        %v2366 = vpack.c.bf16 %v2363, %v2362
        %s2367 = scalar_lea.vmem %s11, 17
        %v2368 = vld [vmem:[%s2367] sm:$0x1]
        %v2370 = vperm.slane %v2368, 0
        %v2373 = vsel %vm578, %v2364, 0
        %2375 = vmatpush.bf16.msra.mxu0 0
        %2376 = vmatpush.bf16.msra.mxu0 0
        %2377 = vmatpush.bf16.msra.mxu0 0
        %2378 = vmatpush.bf16.msra.mxu0 0
        %2379 = vmatpush.bf16.msra.mxu0 0
        %2380 = vmatpush.bf16.msra.mxu0 0
        %2381 = vmatpush.bf16.msra.mxu0 %v2366
        %2382 = vmatpush.bf16.msra.mxu0 %v2365
        %2383 = vmatmul.bf16.gmra.mxu0 %v2373
        %v2384 = vpop.f32.mrf.mxu0
        %v2385 = vadd.f32 %v2370, %v2384
        %v2386 = vpop.f32.mrf.mxu0
        %2387 = vdwg.mxu0
        %s2388 = scalar_lea.vmem [#allocation2], 352
        %v2389 = vld [vmem:[%s2388] sm:$0xff]
        %v2390 = vld [vmem:[%s2388 + $0x8] sm:$0xff]
        %v2391 = vld [vmem:[%s2388 + $0x10] sm:$0xff]
        %v2392 = vld [vmem:[%s2388 + $0x18] sm:$0xff]
        %s2393 = scalar_lea.vmem %s11, 18
        %v2394 = vld [vmem:[%s2393] sm:$0x1]
        %v2395 = vmul.f32 %v2331, 0.35355338
        %v2396 = vmul.f32 %v2395, %v1129
        %v2397 = vmul.f32 %v2395, %v1130
        %v2398 = vmul.f32 %v2395, %v1131
        %v2399 = vmul.f32 %v2395, %v1132
        %v2400 = vpack.c.bf16 %v2396, %v2396
        %v2401 = vpack.c.bf16 %v2397, %v2397
        %v2402 = vpack.c.bf16 %v2398, %v2398
        %v2403 = vpack.c.bf16 %v2399, %v2399
        %v2404 = vpack.c.bf16 %v2356, %v2356
        %v2406 = vsel %vm578, %v2400, 0
        %v2409 = vsel %vm578, %v2404, 0
        %2411 = vmatpush.bf16.xpose.msra.mxu0 0
        %2412 = vmatpush.bf16.xpose.msra.mxu0 0
        %2413 = vmatpush.bf16.xpose.msra.mxu0 0
        %2414 = vmatpush.bf16.xpose.msra.mxu0 0
        %2415 = vmatpush.bf16.xpose.msra.mxu0 0
        %2416 = vmatpush.bf16.xpose.msra.mxu0 0
        %2417 = vmatpush.bf16.xpose.msra.mxu0 0
        %2418 = vmatpush.bf16.xpose.msra.mxu0 %v2409
        %2419 = vmatmul.bf16.gmra.mxu0 %v2406
        %v2420 = vpop.f32.mrf.mxu0
        %v2421 = vadd.f32 0.0, %v2420
        %v2422 = vpop.f32.mrf.mxu0
        %2423 = vdwg.mxu0
        %v2425 = vsel %vm578, %v2401, 0
        %2427 = vmatpush.bf16.xpose.msra.mxu0 0
        %2428 = vmatpush.bf16.xpose.msra.mxu0 0
        %2429 = vmatpush.bf16.xpose.msra.mxu0 0
        %2430 = vmatpush.bf16.xpose.msra.mxu0 0
        %2431 = vmatpush.bf16.xpose.msra.mxu0 0
        %2432 = vmatpush.bf16.xpose.msra.mxu0 0
        %2433 = vmatpush.bf16.xpose.msra.mxu0 0
        %2434 = vmatpush.bf16.xpose.msra.mxu0 %v2409
        %2435 = vmatmul.bf16.gmra.mxu0 %v2425
        %v2436 = vpop.f32.mrf.mxu0
        %v2437 = vadd.f32 0.0, %v2436
        %v2438 = vpop.f32.mrf.mxu0
        %2439 = vdwg.mxu0
        %v2441 = vsel %vm578, %v2402, 0
        %2443 = vmatpush.bf16.xpose.msra.mxu0 0
        %2444 = vmatpush.bf16.xpose.msra.mxu0 0
        %2445 = vmatpush.bf16.xpose.msra.mxu0 0
        %2446 = vmatpush.bf16.xpose.msra.mxu0 0
        %2447 = vmatpush.bf16.xpose.msra.mxu0 0
        %2448 = vmatpush.bf16.xpose.msra.mxu0 0
        %2449 = vmatpush.bf16.xpose.msra.mxu0 0
        %2450 = vmatpush.bf16.xpose.msra.mxu0 %v2409
        %2451 = vmatmul.bf16.gmra.mxu0 %v2441
        %v2452 = vpop.f32.mrf.mxu0
        %v2453 = vadd.f32 0.0, %v2452
        %v2454 = vpop.f32.mrf.mxu0
        %2455 = vdwg.mxu0
        %v2457 = vsel %vm578, %v2403, 0
        %2459 = vmatpush.bf16.xpose.msra.mxu0 0
        %2460 = vmatpush.bf16.xpose.msra.mxu0 0
        %2461 = vmatpush.bf16.xpose.msra.mxu0 0
        %2462 = vmatpush.bf16.xpose.msra.mxu0 0
        %2463 = vmatpush.bf16.xpose.msra.mxu0 0
        %2464 = vmatpush.bf16.xpose.msra.mxu0 0
        %2465 = vmatpush.bf16.xpose.msra.mxu0 0
        %2466 = vmatpush.bf16.xpose.msra.mxu0 %v2409
        %2467 = vmatmul.bf16.gmra.mxu0 %v2457
        %v2468 = vpop.f32.mrf.mxu0
        %v2469 = vadd.f32 0.0, %v2468
        %v2470 = vpop.f32.mrf.mxu0
        %2471 = vdwg.mxu0
        %v2472 = vsel %vm1298, %v2421, -inf
        %2473 = vmax.xlane.f32.xlu0 %v2472
        %v2474 = vpop.xlane.xlu0 %2473
        %v2475 = vsel %vm1298, %v2437, -inf
        %2476 = vmax.xlane.f32.xlu0 %v2475
        %v2477 = vpop.xlane.xlu0 %2476
        %v2478 = vsel %vm1298, %v2453, -inf
        %2479 = vmax.xlane.f32.xlu0 %v2478
        %v2480 = vpop.xlane.xlu0 %2479
        %v2481 = vsel %vm1298, %v2469, -inf
        %2482 = vmax.xlane.f32.xlu0 %v2481
        %v2483 = vpop.xlane.xlu0 %2482
        %v2484 = vsub.f32 %v2421, %v2474
        %v2485 = vsub.f32 %v2437, %v2477
        %v2486 = vsub.f32 %v2453, %v2480
        %v2487 = vsub.f32 %v2469, %v2483
        %v2488 = vmul.f32 %v2484, 1.442695
        %v2489 = vpow.pop %v2488
        %v2490 = vmul.f32 %v2485, 1.442695
        %v2491 = vpow.pop %v2490
        %v2492 = vmul.f32 %v2486, 1.442695
        %v2493 = vpow.pop %v2492
        %v2494 = vmul.f32 %v2487, 1.442695
        %v2495 = vpow.pop %v2494
        %v2496 = vsel %vm1298, %v2489, 0.0
        %2497 = vadd.xlane.f32.xlu0 %v2496
        %v2498 = vpop.xlane.xlu0 %2497
        %v2499 = vsel %vm1298, %v2491, 0.0
        %2500 = vadd.xlane.f32.xlu0 %v2499
        %v2501 = vpop.xlane.xlu0 %2500
        %v2502 = vsel %vm1298, %v2493, 0.0
        %2503 = vadd.xlane.f32.xlu0 %v2502
        %v2504 = vpop.xlane.xlu0 %2503
        %v2505 = vsel %vm1298, %v2495, 0.0
        %2506 = vadd.xlane.f32.xlu0 %v2505
        %v2507 = vpop.xlane.xlu0 %2506
        %v2508 = vrcp.pop %v2498
        %v2509 = vmul.f32 %v2498, %v2508
        %v2510 = vsub.f32 1.0, %v2509
        %v2511 = vmul.f32 %v2508, %v2510
        %v2512 = vadd.f32 %v2508, %v2511
        %vm2513 = vweird.f32 %v2498
        %vm2514 = vweird.f32 %v2508
        %vm2515 = vmor %vm2513, %vm2514
        %v2516 = vsel %vm2515, %v2508, %v2512
        %v2517 = vand.u32 2147483647, %v2498
        %vm2518 = vcmp.eq.f32.partialorder %v2517, 8.507059e+37
        %v2519 = vand.u32 %v2498, 2147483648
        %v2520 = vor.u32 1.1754944e-38, %v2519
        %v2521 = vsel %vm2518, %v2520, %v2516
        %v2522 = vmul.f32 %v2489, %v2521
        %v2523 = vrcp.pop %v2501
        %v2524 = vmul.f32 %v2501, %v2523
        %v2525 = vsub.f32 1.0, %v2524
        %v2526 = vmul.f32 %v2523, %v2525
        %v2527 = vadd.f32 %v2523, %v2526
        %vm2528 = vweird.f32 %v2501
        %vm2529 = vweird.f32 %v2523
        %vm2530 = vmor %vm2528, %vm2529
        %v2531 = vsel %vm2530, %v2523, %v2527
        %v2532 = vand.u32 2147483647, %v2501
        %vm2533 = vcmp.eq.f32.partialorder %v2532, 8.507059e+37
        %v2534 = vand.u32 %v2501, 2147483648
        %v2535 = vor.u32 1.1754944e-38, %v2534
        %v2536 = vsel %vm2533, %v2535, %v2531
        %v2537 = vmul.f32 %v2491, %v2536
        %v2538 = vrcp.pop %v2504
        %v2539 = vmul.f32 %v2504, %v2538
        %v2540 = vsub.f32 1.0, %v2539
        %v2541 = vmul.f32 %v2538, %v2540
        %v2542 = vadd.f32 %v2538, %v2541
        %vm2543 = vweird.f32 %v2504
        %vm2544 = vweird.f32 %v2538
        %vm2545 = vmor %vm2543, %vm2544
        %v2546 = vsel %vm2545, %v2538, %v2542
        %v2547 = vand.u32 2147483647, %v2504
        %vm2548 = vcmp.eq.f32.partialorder %v2547, 8.507059e+37
        %v2549 = vand.u32 %v2504, 2147483648
        %v2550 = vor.u32 1.1754944e-38, %v2549
        %v2551 = vsel %vm2548, %v2550, %v2546
        %v2552 = vmul.f32 %v2493, %v2551
        %v2553 = vrcp.pop %v2507
        %v2554 = vmul.f32 %v2507, %v2553
        %v2555 = vsub.f32 1.0, %v2554
        %v2556 = vmul.f32 %v2553, %v2555
        %v2557 = vadd.f32 %v2553, %v2556
        %vm2558 = vweird.f32 %v2507
        %vm2559 = vweird.f32 %v2553
        %vm2560 = vmor %vm2558, %vm2559
        %v2561 = vsel %vm2560, %v2553, %v2557
        %v2562 = vand.u32 2147483647, %v2507
        %vm2563 = vcmp.eq.f32.partialorder %v2562, 8.507059e+37
        %v2564 = vand.u32 %v2507, 2147483648
        %v2565 = vor.u32 1.1754944e-38, %v2564
        %v2566 = vsel %vm2563, %v2565, %v2561
        %v2567 = vmul.f32 %v2495, %v2566
        %v2568 = vmul.f32 %v2385, %v1129
        %v2569 = vmul.f32 %v2385, %v1130
        %v2570 = vmul.f32 %v2385, %v1131
        %v2571 = vmul.f32 %v2385, %v1132
        %v2572 = vpack.c.bf16 %v2522, %v2522
        %v2573 = vpack.c.bf16 %v2537, %v2537
        %v2574 = vpack.c.bf16 %v2552, %v2552
        %v2575 = vpack.c.bf16 %v2567, %v2567
        %v2576 = vpack.c.bf16 %v2568, %v2568
        %v2577 = vpack.c.bf16 %v2569, %v2569
        %v2578 = vpack.c.bf16 %v2570, %v2570
        %v2579 = vpack.c.bf16 %v2571, %v2571
        %v2581 = vsel %vm1298, %v2572, 0
        %v2584 = vsel %vm1410, %v2576, 0
        %2586 = vmatpush.bf16.msra.mxu0 0
        %2587 = vmatpush.bf16.msra.mxu0 0
        %2588 = vmatpush.bf16.msra.mxu0 0
        %2589 = vmatpush.bf16.msra.mxu0 0
        %2590 = vmatpush.bf16.msra.mxu0 0
        %2591 = vmatpush.bf16.msra.mxu0 0
        %2592 = vmatpush.bf16.msra.mxu0 0
        %2593 = vmatpush.bf16.msra.mxu0 %v2584
        %2594 = vmatmul.bf16.gmra.mxu0 %v2581
        %v2595 = vpop.f32.mrf.mxu0
        %v2596 = vadd.f32 0.0, %v2595
        %v2597 = vpop.f32.mrf.mxu0
        %2598 = vdwg.mxu0
        %v2600 = vsel %vm1298, %v2573, 0
        %v2603 = vsel %vm1410, %v2577, 0
        %2605 = vmatpush.bf16.msra.mxu0 0
        %2606 = vmatpush.bf16.msra.mxu0 0
        %2607 = vmatpush.bf16.msra.mxu0 0
        %2608 = vmatpush.bf16.msra.mxu0 0
        %2609 = vmatpush.bf16.msra.mxu0 0
        %2610 = vmatpush.bf16.msra.mxu0 0
        %2611 = vmatpush.bf16.msra.mxu0 0
        %2612 = vmatpush.bf16.msra.mxu0 %v2603
        %2613 = vmatmul.bf16.gmra.mxu0 %v2600
        %v2614 = vpop.f32.mrf.mxu0
        %v2615 = vadd.f32 0.0, %v2614
        %v2616 = vpop.f32.mrf.mxu0
        %2617 = vdwg.mxu0
        %v2619 = vsel %vm1298, %v2574, 0
        %v2622 = vsel %vm1410, %v2578, 0
        %2624 = vmatpush.bf16.msra.mxu0 0
        %2625 = vmatpush.bf16.msra.mxu0 0
        %2626 = vmatpush.bf16.msra.mxu0 0
        %2627 = vmatpush.bf16.msra.mxu0 0
        %2628 = vmatpush.bf16.msra.mxu0 0
        %2629 = vmatpush.bf16.msra.mxu0 0
        %2630 = vmatpush.bf16.msra.mxu0 0
        %2631 = vmatpush.bf16.msra.mxu0 %v2622
        %2632 = vmatmul.bf16.gmra.mxu0 %v2619
        %v2633 = vpop.f32.mrf.mxu0
        %v2634 = vadd.f32 0.0, %v2633
        %v2635 = vpop.f32.mrf.mxu0
        %2636 = vdwg.mxu0
        %v2638 = vsel %vm1298, %v2575, 0
        %v2641 = vsel %vm1410, %v2579, 0
        %2643 = vmatpush.bf16.msra.mxu0 0
        %2644 = vmatpush.bf16.msra.mxu0 0
        %2645 = vmatpush.bf16.msra.mxu0 0
        %2646 = vmatpush.bf16.msra.mxu0 0
        %2647 = vmatpush.bf16.msra.mxu0 0
        %2648 = vmatpush.bf16.msra.mxu0 0
        %2649 = vmatpush.bf16.msra.mxu0 0
        %2650 = vmatpush.bf16.msra.mxu0 %v2641
        %2651 = vmatmul.bf16.gmra.mxu0 %v2638
        %v2652 = vpop.f32.mrf.mxu0
        %v2653 = vadd.f32 0.0, %v2652
        %v2654 = vpop.f32.mrf.mxu0
        %2655 = vdwg.mxu0
        %v2656 = vsel %vm578, %v2596, 0.0
        %v2657 = vsel %vm578, %v2615, 0.0
        %v2658 = vadd.f32 %v2656, %v2657
        %v2659 = vsel %vm578, %v2634, 0.0
        %v2660 = vadd.f32 %v2658, %v2659
        %v2661 = vsel %vm578, %v2653, 0.0
        %v2662 = vadd.f32 %v2660, %v2661
        %v2663 = vpack.c.bf16 %v2662, %v2662
        %v2664 = vpack.c.bf16 %v2390, %v2389
        %v2665 = vpack.c.bf16 %v2392, %v2391
        %v2667 = vperm.slane %v2394, 0
        %v2670 = vsel %vm578, %v2663, 0
        %2672 = vmatpush.bf16.msra.mxu0 0
        %2673 = vmatpush.bf16.msra.mxu0 0
        %2674 = vmatpush.bf16.msra.mxu0 0
        %2675 = vmatpush.bf16.msra.mxu0 0
        %2676 = vmatpush.bf16.msra.mxu0 0
        %2677 = vmatpush.bf16.msra.mxu0 0
        %2678 = vmatpush.bf16.msra.mxu0 %v2665
        %2679 = vmatpush.bf16.msra.mxu0 %v2664
        %2680 = vmatmul.bf16.gmra.mxu0 %v2670
        %v2681 = vpop.f32.mrf.mxu0
        %v2682 = vadd.f32 %v2667, %v2681
        %v2683 = vpop.f32.mrf.mxu0
        %2684 = vdwg.mxu0
        %v2685 = vadd.f32 %v2303, %v2682
        %s2686 = scalar_lea.vmem %s11, 23
        %v2687 = vld [vmem:[%s2686] sm:$0x1]
        %s2688 = scalar_lea.vmem %s11, 24
        %v2689 = vld [vmem:[%s2688] sm:$0x1]
        %v2690 = vsel %vm578, %v2685, 0.0
        %2691 = vadd.xlane.f32.xlu0 %v2690
        %v2692 = vpop.xlane.xlu0 %2691
        %v2693 = vmul.f32 %v2692, %v1527
        %v2694 = vsub.f32 %v2685, %v2693
        %v2695 = vmul.f32 %v2694, %v2694
        %v2696 = vsel %vm578, %v2695, 0.0
        %2697 = vadd.xlane.f32.xlu0 %v2696
        %v2698 = vpop.xlane.xlu0 %2697
        %v2699 = vmul.f32 %v2698, %v1527
        %v2700 = vadd.f32 %v2699, 1e-05
        %v2701 = vrsqrt.pop %v2700
        %v2702 = vmul.f32 %v2701, %v2700
        %v2703 = vmul.f32 %v2702, %v2701
        %v2704 = vmul.f32 0.5, %v2703
        %v2705 = vsub.f32 1.5, %v2704
        %v2706 = vmul.f32 %v2701, %v2705
        %vm2707 = vweird.f32 %v2700
        %vm2708 = vweird.f32 %v2701
        %vm2709 = vmor %vm2707, %vm2708
        %v2710 = vsel %vm2709, %v2701, %v2706
        %v2711 = vmul.f32 %v2694, %v2710
        %v2713 = vperm.slane %v2687, 0
        %v2715 = vmul.f32 %v2711, %v2713
        %v2717 = vperm.slane %v2689, 0
        %v2719 = vadd.f32 %v2715, %v2717
        %v2720 = vadd.f32 %v2719, %v1098
        %s2721 = scalar_lea.vmem [#allocation2], 384
        %v2722 = vld [vmem:[%s2721] sm:$0xff]
        %v2723 = vld [vmem:[%s2721 + $0x8] sm:$0xff]
        %v2724 = vld [vmem:[%s2721 + $0x10] sm:$0xff]
        %v2725 = vld [vmem:[%s2721 + $0x18] sm:$0xff]
        %v2726 = vpack.c.bf16 %v2720, %v2720
        %v2727 = vpack.c.bf16 %v2723, %v2722
        %v2728 = vpack.c.bf16 %v2725, %v2724
        %s2729 = scalar_lea.vmem %s11, 19
        %v2730 = vld [vmem:[%s2729] sm:$0x1]
        %v2732 = vperm.slane %v2730, 0
        %v2735 = vsel %vm578, %v2726, 0
        %2737 = vmatpush.bf16.msra.mxu0 0
        %2738 = vmatpush.bf16.msra.mxu0 0
        %2739 = vmatpush.bf16.msra.mxu0 0
        %2740 = vmatpush.bf16.msra.mxu0 0
        %2741 = vmatpush.bf16.msra.mxu0 0
        %2742 = vmatpush.bf16.msra.mxu0 0
        %2743 = vmatpush.bf16.msra.mxu0 %v2728
        %2744 = vmatpush.bf16.msra.mxu0 %v2727
        %2745 = vmatmul.bf16.gmra.mxu0 %v2735
        %v2746 = vpop.f32.mrf.mxu0
        %v2747 = vadd.f32 %v2732, %v2746
        %v2748 = vpop.f32.mrf.mxu0
        %2749 = vdwg.mxu0
        %s2750 = scalar_lea.vmem [#allocation2], 416
        %v2751 = vld [vmem:[%s2750] sm:$0xff]
        %v2752 = vld [vmem:[%s2750 + $0x8] sm:$0xff]
        %v2753 = vld [vmem:[%s2750 + $0x10] sm:$0xff]
        %v2754 = vld [vmem:[%s2750 + $0x18] sm:$0xff]
        %v2755 = vpack.c.bf16 %v2752, %v2751
        %v2756 = vpack.c.bf16 %v2754, %v2753
        %s2757 = scalar_lea.vmem %s11, 20
        %v2758 = vld [vmem:[%s2757] sm:$0x1]
        %v2760 = vperm.slane %v2758, 0
        %2762 = vmatpush.bf16.msra.mxu0 0
        %2763 = vmatpush.bf16.msra.mxu0 0
        %2764 = vmatpush.bf16.msra.mxu0 0
        %2765 = vmatpush.bf16.msra.mxu0 0
        %2766 = vmatpush.bf16.msra.mxu0 0
        %2767 = vmatpush.bf16.msra.mxu0 0
        %2768 = vmatpush.bf16.msra.mxu0 %v2756
        %2769 = vmatpush.bf16.msra.mxu0 %v2755
        %2770 = vmatmul.bf16.gmra.mxu0 %v1602
        %v2771 = vpop.f32.mrf.mxu0
        %v2772 = vadd.f32 %v2760, %v2771
        %v2773 = vpop.f32.mrf.mxu0
        %v2774 = vadd.f32 %v2760, %v2773
        %2775 = vmatmul.bf16.gmra.mxu0 %v1605
        %v2776 = vpop.f32.mrf.mxu0
        %v2777 = vadd.f32 %v2760, %v2776
        %v2778 = vpop.f32.mrf.mxu0
        %v2779 = vadd.f32 %v2760, %v2778
        %2780 = vmatmul.bf16.gmra.mxu0 %v1608
        %v2781 = vpop.f32.mrf.mxu0
        %v2782 = vadd.f32 %v2760, %v2781
        %v2783 = vpop.f32.mrf.mxu0
        %v2784 = vadd.f32 %v2760, %v2783
        %2785 = vmatmul.bf16.gmra.mxu0 %v1611
        %v2786 = vpop.f32.mrf.mxu0
        %v2787 = vadd.f32 %v2760, %v2786
        %v2788 = vpop.f32.mrf.mxu0
        %v2789 = vadd.f32 %v2760, %v2788
        %2790 = vdwg.mxu0
        %s2791 = scalar_lea.vmem [#allocation2], 448
        %v2792 = vld [vmem:[%s2791] sm:$0xff]
        %v2793 = vld [vmem:[%s2791 + $0x8] sm:$0xff]
        %v2794 = vld [vmem:[%s2791 + $0x10] sm:$0xff]
        %v2795 = vld [vmem:[%s2791 + $0x18] sm:$0xff]
        %v2796 = vpack.c.bf16 %v2793, %v2792
        %v2797 = vpack.c.bf16 %v2795, %v2794
        %s2798 = scalar_lea.vmem %s11, 21
        %v2799 = vld [vmem:[%s2798] sm:$0x1]
        %v2801 = vperm.slane %v2799, 0
        %2803 = vmatpush.bf16.msra.mxu0 0
        %2804 = vmatpush.bf16.msra.mxu0 0
        %2805 = vmatpush.bf16.msra.mxu0 0
        %2806 = vmatpush.bf16.msra.mxu0 0
        %2807 = vmatpush.bf16.msra.mxu0 0
        %2808 = vmatpush.bf16.msra.mxu0 0
        %2809 = vmatpush.bf16.msra.mxu0 %v2797
        %2810 = vmatpush.bf16.msra.mxu0 %v2796
        %2811 = vmatmul.bf16.gmra.mxu0 %v1659
        %v2812 = vpop.f32.mrf.mxu0
        %v2813 = vadd.f32 %v2801, %v2812
        %v2814 = vpop.f32.mrf.mxu0
        %v2815 = vadd.f32 %v2801, %v2814
        %2816 = vmatmul.bf16.gmra.mxu0 %v1662
        %v2817 = vpop.f32.mrf.mxu0
        %v2818 = vadd.f32 %v2801, %v2817
        %v2819 = vpop.f32.mrf.mxu0
        %v2820 = vadd.f32 %v2801, %v2819
        %2821 = vmatmul.bf16.gmra.mxu0 %v1665
        %v2822 = vpop.f32.mrf.mxu0
        %v2823 = vadd.f32 %v2801, %v2822
        %v2824 = vpop.f32.mrf.mxu0
        %v2825 = vadd.f32 %v2801, %v2824
        %2826 = vmatmul.bf16.gmra.mxu0 %v1668
        %v2827 = vpop.f32.mrf.mxu0
        %v2828 = vadd.f32 %v2801, %v2827
        %v2829 = vpop.f32.mrf.mxu0
        %v2830 = vadd.f32 %v2801, %v2829
        %2831 = vdwg.mxu0
        %s2832 = scalar_lea.vmem [#allocation2], 480
        %v2833 = vld [vmem:[%s2832] sm:$0xff]
        %v2834 = vld [vmem:[%s2832 + $0x8] sm:$0xff]
        %v2835 = vld [vmem:[%s2832 + $0x10] sm:$0xff]
        %v2836 = vld [vmem:[%s2832 + $0x18] sm:$0xff]
        %s2837 = scalar_lea.vmem %s11, 22
        %v2838 = vld [vmem:[%s2837] sm:$0x1]
        %v2839 = vmul.f32 %v2747, 0.35355338
        %v2840 = vmul.f32 %v2839, %v1129
        %v2841 = vmul.f32 %v2839, %v1130
        %v2842 = vmul.f32 %v2839, %v1131
        %v2843 = vmul.f32 %v2839, %v1132
        %v2844 = vpack.c.bf16 %v2840, %v2840
        %v2845 = vpack.c.bf16 %v2841, %v2841
        %v2846 = vpack.c.bf16 %v2842, %v2842
        %v2847 = vpack.c.bf16 %v2843, %v2843
        %v2848 = vpack.c.bf16 %v2772, %v2772
        %v2849 = vpack.c.bf16 %v2774, %v2774
        %v2850 = vpack.c.bf16 %v2777, %v2777
        %v2851 = vpack.c.bf16 %v2779, %v2779
        %v2852 = vpack.c.bf16 %v2782, %v2782
        %v2853 = vpack.c.bf16 %v2784, %v2784
        %v2854 = vpack.c.bf16 %v2787, %v2787
        %v2855 = vpack.c.bf16 %v2789, %v2789
        %v2864 = vunpack.c.l.b16 %v2848
        %v2865 = vunpack.c.l.b16 %v2849
        %v2866 = vunpack.c.l.b16 %v2850
        %v2867 = vunpack.c.l.b16 %v2851
        %v2868 = vunpack.c.l.b16 %v2852
        %v2869 = vunpack.c.l.b16 %v2853
        %v2870 = vunpack.c.l.b16 %v2854
        %v2871 = vunpack.c.l.b16 %v2855
        %v2872 = vpack.c.b16 %v2865, %v2864
        %v2873 = vpack.c.b16 %v2867, %v2866
        %v2874 = vpack.c.b16 %v2869, %v2868
        %v2875 = vpack.c.b16 %v2871, %v2870
        %v2877 = vsel %vm578, %v2844, 0
        %v2880 = vsel %vm578, %v2872, 0
        %v2883 = vsel %vm578, %v2873, 0
        %v2886 = vsel %vm578, %v2874, 0
        %v2889 = vsel %vm578, %v2875, 0
        %2891 = vmatpush.bf16.xpose.msra.mxu0 0
        %2892 = vmatpush.bf16.xpose.msra.mxu0 0
        %2893 = vmatpush.bf16.xpose.msra.mxu0 0
        %2894 = vmatpush.bf16.xpose.msra.mxu0 0
        %2895 = vmatpush.bf16.xpose.msra.mxu0 %v2889
        %2896 = vmatpush.bf16.xpose.msra.mxu0 %v2886
        %2897 = vmatpush.bf16.xpose.msra.mxu0 %v2883
        %2898 = vmatpush.bf16.xpose.msra.mxu0 %v2880
        %2899 = vmatmul.bf16.gmra.mxu0 %v2877
        %v2900 = vpop.f32.mrf.mxu0
        %v2901 = vadd.f32 %v1109, %v2900
        %v2902 = vpop.f32.mrf.mxu0
        %2903 = vdwg.mxu0
        %v2905 = vsel %vm578, %v2845, 0
        %2907 = vmatpush.bf16.xpose.msra.mxu0 0
        %2908 = vmatpush.bf16.xpose.msra.mxu0 0
        %2909 = vmatpush.bf16.xpose.msra.mxu0 0
        %2910 = vmatpush.bf16.xpose.msra.mxu0 0
        %2911 = vmatpush.bf16.xpose.msra.mxu0 %v2889
        %2912 = vmatpush.bf16.xpose.msra.mxu0 %v2886
        %2913 = vmatpush.bf16.xpose.msra.mxu0 %v2883
        %2914 = vmatpush.bf16.xpose.msra.mxu0 %v2880
        %2915 = vmatmul.bf16.gmra.mxu0 %v2905
        %v2916 = vpop.f32.mrf.mxu0
        %v2917 = vadd.f32 %v1109, %v2916
        %v2918 = vpop.f32.mrf.mxu0
        %2919 = vdwg.mxu0
        %v2921 = vsel %vm578, %v2846, 0
        %2923 = vmatpush.bf16.xpose.msra.mxu0 0
        %2924 = vmatpush.bf16.xpose.msra.mxu0 0
        %2925 = vmatpush.bf16.xpose.msra.mxu0 0
        %2926 = vmatpush.bf16.xpose.msra.mxu0 0
        %2927 = vmatpush.bf16.xpose.msra.mxu0 %v2889
        %2928 = vmatpush.bf16.xpose.msra.mxu0 %v2886
        %2929 = vmatpush.bf16.xpose.msra.mxu0 %v2883
        %2930 = vmatpush.bf16.xpose.msra.mxu0 %v2880
        %2931 = vmatmul.bf16.gmra.mxu0 %v2921
        %v2932 = vpop.f32.mrf.mxu0
        %v2933 = vadd.f32 %v1109, %v2932
        %v2934 = vpop.f32.mrf.mxu0
        %2935 = vdwg.mxu0
        %v2937 = vsel %vm578, %v2847, 0
        %2939 = vmatpush.bf16.xpose.msra.mxu0 0
        %2940 = vmatpush.bf16.xpose.msra.mxu0 0
        %2941 = vmatpush.bf16.xpose.msra.mxu0 0
        %2942 = vmatpush.bf16.xpose.msra.mxu0 0
        %2943 = vmatpush.bf16.xpose.msra.mxu0 %v2889
        %2944 = vmatpush.bf16.xpose.msra.mxu0 %v2886
        %2945 = vmatpush.bf16.xpose.msra.mxu0 %v2883
        %2946 = vmatpush.bf16.xpose.msra.mxu0 %v2880
        %2947 = vmatmul.bf16.gmra.mxu0 %v2937
        %v2948 = vpop.f32.mrf.mxu0
        %v2949 = vadd.f32 %v1109, %v2948
        %v2950 = vpop.f32.mrf.mxu0
        %2951 = vdwg.mxu0
        %v2952 = vsel %vm772, %v2901, -inf
        %2953 = vmax.xlane.f32.xlu0 %v2952
        %v2954 = vpop.xlane.xlu0 %2953
        %v2955 = vsel %vm772, %v2917, -inf
        %2956 = vmax.xlane.f32.xlu0 %v2955
        %v2957 = vpop.xlane.xlu0 %2956
        %v2958 = vsel %vm772, %v2933, -inf
        %2959 = vmax.xlane.f32.xlu0 %v2958
        %v2960 = vpop.xlane.xlu0 %2959
        %v2961 = vsel %vm772, %v2949, -inf
        %2962 = vmax.xlane.f32.xlu0 %v2961
        %v2963 = vpop.xlane.xlu0 %2962
        %v2964 = vsub.f32 %v2901, %v2954
        %v2965 = vsub.f32 %v2917, %v2957
        %v2966 = vsub.f32 %v2933, %v2960
        %v2967 = vsub.f32 %v2949, %v2963
        %v2968 = vmul.f32 %v2964, 1.442695
        %v2969 = vpow.pop %v2968
        %v2970 = vmul.f32 %v2965, 1.442695
        %v2971 = vpow.pop %v2970
        %v2972 = vmul.f32 %v2966, 1.442695
        %v2973 = vpow.pop %v2972
        %v2974 = vmul.f32 %v2967, 1.442695
        %v2975 = vpow.pop %v2974
        %v2976 = vsel %vm772, %v2969, 0.0
        %2977 = vadd.xlane.f32.xlu0 %v2976
        %v2978 = vpop.xlane.xlu0 %2977
        %v2979 = vsel %vm772, %v2971, 0.0
        %2980 = vadd.xlane.f32.xlu0 %v2979
        %v2981 = vpop.xlane.xlu0 %2980
        %v2982 = vsel %vm772, %v2973, 0.0
        %2983 = vadd.xlane.f32.xlu0 %v2982
        %v2984 = vpop.xlane.xlu0 %2983
        %v2985 = vsel %vm772, %v2975, 0.0
        %2986 = vadd.xlane.f32.xlu0 %v2985
        %v2987 = vpop.xlane.xlu0 %2986
        %v2988 = vrcp.pop %v2978
        %v2989 = vmul.f32 %v2978, %v2988
        %v2990 = vsub.f32 1.0, %v2989
        %v2991 = vmul.f32 %v2988, %v2990
        %v2992 = vadd.f32 %v2988, %v2991
        %vm2993 = vweird.f32 %v2978
        %vm2994 = vweird.f32 %v2988
        %vm2995 = vmor %vm2993, %vm2994
        %v2996 = vsel %vm2995, %v2988, %v2992
        %v2997 = vand.u32 2147483647, %v2978
        %vm2998 = vcmp.eq.f32.partialorder %v2997, 8.507059e+37
        %v2999 = vand.u32 %v2978, 2147483648
        %v3000 = vor.u32 1.1754944e-38, %v2999
        %v3001 = vsel %vm2998, %v3000, %v2996
        %v3002 = vmul.f32 %v2969, %v3001
        %v3003 = vrcp.pop %v2981
        %v3004 = vmul.f32 %v2981, %v3003
        %v3005 = vsub.f32 1.0, %v3004
        %v3006 = vmul.f32 %v3003, %v3005
        %v3007 = vadd.f32 %v3003, %v3006
        %vm3008 = vweird.f32 %v2981
        %vm3009 = vweird.f32 %v3003
        %vm3010 = vmor %vm3008, %vm3009
        %v3011 = vsel %vm3010, %v3003, %v3007
        %v3012 = vand.u32 2147483647, %v2981
        %vm3013 = vcmp.eq.f32.partialorder %v3012, 8.507059e+37
        %v3014 = vand.u32 %v2981, 2147483648
        %v3015 = vor.u32 1.1754944e-38, %v3014
        %v3016 = vsel %vm3013, %v3015, %v3011
        %v3017 = vmul.f32 %v2971, %v3016
        %v3018 = vrcp.pop %v2984
        %v3019 = vmul.f32 %v2984, %v3018
        %v3020 = vsub.f32 1.0, %v3019
        %v3021 = vmul.f32 %v3018, %v3020
        %v3022 = vadd.f32 %v3018, %v3021
        %vm3023 = vweird.f32 %v2984
        %vm3024 = vweird.f32 %v3018
        %vm3025 = vmor %vm3023, %vm3024
        %v3026 = vsel %vm3025, %v3018, %v3022
        %v3027 = vand.u32 2147483647, %v2984
        %vm3028 = vcmp.eq.f32.partialorder %v3027, 8.507059e+37
        %v3029 = vand.u32 %v2984, 2147483648
        %v3030 = vor.u32 1.1754944e-38, %v3029
        %v3031 = vsel %vm3028, %v3030, %v3026
        %v3032 = vmul.f32 %v2973, %v3031
        %v3033 = vrcp.pop %v2987
        %v3034 = vmul.f32 %v2987, %v3033
        %v3035 = vsub.f32 1.0, %v3034
        %v3036 = vmul.f32 %v3033, %v3035
        %v3037 = vadd.f32 %v3033, %v3036
        %vm3038 = vweird.f32 %v2987
        %vm3039 = vweird.f32 %v3033
        %vm3040 = vmor %vm3038, %vm3039
        %v3041 = vsel %vm3040, %v3033, %v3037
        %v3042 = vand.u32 2147483647, %v2987
        %vm3043 = vcmp.eq.f32.partialorder %v3042, 8.507059e+37
        %v3044 = vand.u32 %v2987, 2147483648
        %v3045 = vor.u32 1.1754944e-38, %v3044
        %v3046 = vsel %vm3043, %v3045, %v3041
        %v3047 = vmul.f32 %v2975, %v3046
        %v3048 = vmul.f32 %v2813, %v1129
        %v3049 = vmul.f32 %v2815, %v1129
        %v3050 = vmul.f32 %v2818, %v1129
        %v3051 = vmul.f32 %v2820, %v1129
        %v3052 = vmul.f32 %v2823, %v1129
        %v3053 = vmul.f32 %v2825, %v1129
        %v3054 = vmul.f32 %v2828, %v1129
        %v3055 = vmul.f32 %v2830, %v1129
        %v3056 = vmul.f32 %v2813, %v1130
        %v3057 = vmul.f32 %v2815, %v1130
        %v3058 = vmul.f32 %v2818, %v1130
        %v3059 = vmul.f32 %v2820, %v1130
        %v3060 = vmul.f32 %v2823, %v1130
        %v3061 = vmul.f32 %v2825, %v1130
        %v3062 = vmul.f32 %v2828, %v1130
        %v3063 = vmul.f32 %v2830, %v1130
        %v3064 = vmul.f32 %v2813, %v1131
        %v3065 = vmul.f32 %v2815, %v1131
        %v3066 = vmul.f32 %v2818, %v1131
        %v3067 = vmul.f32 %v2820, %v1131
        %v3068 = vmul.f32 %v2823, %v1131
        %v3069 = vmul.f32 %v2825, %v1131
        %v3070 = vmul.f32 %v2828, %v1131
        %v3071 = vmul.f32 %v2830, %v1131
        %v3072 = vmul.f32 %v2813, %v1132
        %v3073 = vmul.f32 %v2815, %v1132
        %v3074 = vmul.f32 %v2818, %v1132
        %v3075 = vmul.f32 %v2820, %v1132
        %v3076 = vmul.f32 %v2823, %v1132
        %v3077 = vmul.f32 %v2825, %v1132
        %v3078 = vmul.f32 %v2828, %v1132
        %v3079 = vmul.f32 %v2830, %v1132
        %v3080 = vpack.c.bf16 %v3002, %v3002
        %v3081 = vpack.c.bf16 %v3017, %v3017
        %v3082 = vpack.c.bf16 %v3032, %v3032
        %v3083 = vpack.c.bf16 %v3047, %v3047
        %v3084 = vpack.c.bf16 %v3048, %v3048
        %v3085 = vpack.c.bf16 %v3049, %v3049
        %v3086 = vpack.c.bf16 %v3050, %v3050
        %v3087 = vpack.c.bf16 %v3051, %v3051
        %v3088 = vpack.c.bf16 %v3052, %v3052
        %v3089 = vpack.c.bf16 %v3053, %v3053
        %v3090 = vpack.c.bf16 %v3054, %v3054
        %v3091 = vpack.c.bf16 %v3055, %v3055
        %v3092 = vpack.c.bf16 %v3056, %v3056
        %v3093 = vpack.c.bf16 %v3057, %v3057
        %v3094 = vpack.c.bf16 %v3058, %v3058
        %v3095 = vpack.c.bf16 %v3059, %v3059
        %v3096 = vpack.c.bf16 %v3060, %v3060
        %v3097 = vpack.c.bf16 %v3061, %v3061
        %v3098 = vpack.c.bf16 %v3062, %v3062
        %v3099 = vpack.c.bf16 %v3063, %v3063
        %v3100 = vpack.c.bf16 %v3064, %v3064
        %v3101 = vpack.c.bf16 %v3065, %v3065
        %v3102 = vpack.c.bf16 %v3066, %v3066
        %v3103 = vpack.c.bf16 %v3067, %v3067
        %v3104 = vpack.c.bf16 %v3068, %v3068
        %v3105 = vpack.c.bf16 %v3069, %v3069
        %v3106 = vpack.c.bf16 %v3070, %v3070
        %v3107 = vpack.c.bf16 %v3071, %v3071
        %v3108 = vpack.c.bf16 %v3072, %v3072
        %v3109 = vpack.c.bf16 %v3073, %v3073
        %v3110 = vpack.c.bf16 %v3074, %v3074
        %v3111 = vpack.c.bf16 %v3075, %v3075
        %v3112 = vpack.c.bf16 %v3076, %v3076
        %v3113 = vpack.c.bf16 %v3077, %v3077
        %v3114 = vpack.c.bf16 %v3078, %v3078
        %v3115 = vpack.c.bf16 %v3079, %v3079
        %v3124 = vunpack.c.l.b16 %v3084
        %v3125 = vunpack.c.l.b16 %v3085
        %v3126 = vunpack.c.l.b16 %v3086
        %v3127 = vunpack.c.l.b16 %v3087
        %v3128 = vunpack.c.l.b16 %v3088
        %v3129 = vunpack.c.l.b16 %v3089
        %v3130 = vunpack.c.l.b16 %v3090
        %v3131 = vunpack.c.l.b16 %v3091
        %v3132 = vpack.c.b16 %v3125, %v3124
        %v3133 = vpack.c.b16 %v3127, %v3126
        %v3134 = vpack.c.b16 %v3129, %v3128
        %v3135 = vpack.c.b16 %v3131, %v3130
        %v3141 = vsel %vm772, %v3080, 0
        %3143 = vmatpush.bf16.msra.mxu0 0
        %3144 = vmatpush.bf16.msra.mxu0 0
        %3145 = vmatpush.bf16.msra.mxu0 0
        %3146 = vmatpush.bf16.msra.mxu0 0
        %3147 = vmatpush.bf16.msra.mxu0 %v3135
        %3148 = vmatpush.bf16.msra.mxu0 %v3134
        %3149 = vmatpush.bf16.msra.mxu0 %v3133
        %3150 = vmatpush.bf16.msra.mxu0 %v3132
        %3151 = vmatmul.bf16.gmra.mxu0 %v3141
        %v3152 = vpop.f32.mrf.mxu0
        %v3153 = vadd.f32 0.0, %v3152
        %v3154 = vpop.f32.mrf.mxu0
        %3155 = vdwg.mxu0
        %v3164 = vunpack.c.l.b16 %v3092
        %v3165 = vunpack.c.l.b16 %v3093
        %v3166 = vunpack.c.l.b16 %v3094
        %v3167 = vunpack.c.l.b16 %v3095
        %v3168 = vunpack.c.l.b16 %v3096
        %v3169 = vunpack.c.l.b16 %v3097
        %v3170 = vunpack.c.l.b16 %v3098
        %v3171 = vunpack.c.l.b16 %v3099
        %v3172 = vpack.c.b16 %v3165, %v3164
        %v3173 = vpack.c.b16 %v3167, %v3166
        %v3174 = vpack.c.b16 %v3169, %v3168
        %v3175 = vpack.c.b16 %v3171, %v3170
        %v3181 = vsel %vm772, %v3081, 0
        %3183 = vmatpush.bf16.msra.mxu0 0
        %3184 = vmatpush.bf16.msra.mxu0 0
        %3185 = vmatpush.bf16.msra.mxu0 0
        %3186 = vmatpush.bf16.msra.mxu0 0
        %3187 = vmatpush.bf16.msra.mxu0 %v3175
        %3188 = vmatpush.bf16.msra.mxu0 %v3174
        %3189 = vmatpush.bf16.msra.mxu0 %v3173
        %3190 = vmatpush.bf16.msra.mxu0 %v3172
        %3191 = vmatmul.bf16.gmra.mxu0 %v3181
        %v3192 = vpop.f32.mrf.mxu0
        %v3193 = vadd.f32 0.0, %v3192
        %v3194 = vpop.f32.mrf.mxu0
        %3195 = vdwg.mxu0
        %v3204 = vunpack.c.l.b16 %v3100
        %v3205 = vunpack.c.l.b16 %v3101
        %v3206 = vunpack.c.l.b16 %v3102
        %v3207 = vunpack.c.l.b16 %v3103
        %v3208 = vunpack.c.l.b16 %v3104
        %v3209 = vunpack.c.l.b16 %v3105
        %v3210 = vunpack.c.l.b16 %v3106
        %v3211 = vunpack.c.l.b16 %v3107
        %v3212 = vpack.c.b16 %v3205, %v3204
        %v3213 = vpack.c.b16 %v3207, %v3206
        %v3214 = vpack.c.b16 %v3209, %v3208
        %v3215 = vpack.c.b16 %v3211, %v3210
        %v3221 = vsel %vm772, %v3082, 0
        %3223 = vmatpush.bf16.msra.mxu0 0
        %3224 = vmatpush.bf16.msra.mxu0 0
        %3225 = vmatpush.bf16.msra.mxu0 0
        %3226 = vmatpush.bf16.msra.mxu0 0
        %3227 = vmatpush.bf16.msra.mxu0 %v3215
        %3228 = vmatpush.bf16.msra.mxu0 %v3214
        %3229 = vmatpush.bf16.msra.mxu0 %v3213
        %3230 = vmatpush.bf16.msra.mxu0 %v3212
        %3231 = vmatmul.bf16.gmra.mxu0 %v3221
        %v3232 = vpop.f32.mrf.mxu0
        %v3233 = vadd.f32 0.0, %v3232
        %v3234 = vpop.f32.mrf.mxu0
        %3235 = vdwg.mxu0
        %v3244 = vunpack.c.l.b16 %v3108
        %v3245 = vunpack.c.l.b16 %v3109
        %v3246 = vunpack.c.l.b16 %v3110
        %v3247 = vunpack.c.l.b16 %v3111
        %v3248 = vunpack.c.l.b16 %v3112
        %v3249 = vunpack.c.l.b16 %v3113
        %v3250 = vunpack.c.l.b16 %v3114
        %v3251 = vunpack.c.l.b16 %v3115
        %v3252 = vpack.c.b16 %v3245, %v3244
        %v3253 = vpack.c.b16 %v3247, %v3246
        %v3254 = vpack.c.b16 %v3249, %v3248
        %v3255 = vpack.c.b16 %v3251, %v3250
        %v3261 = vsel %vm772, %v3083, 0
        %3263 = vmatpush.bf16.msra.mxu0 0
        %3264 = vmatpush.bf16.msra.mxu0 0
        %3265 = vmatpush.bf16.msra.mxu0 0
        %3266 = vmatpush.bf16.msra.mxu0 0
        %3267 = vmatpush.bf16.msra.mxu0 %v3255
        %3268 = vmatpush.bf16.msra.mxu0 %v3254
        %3269 = vmatpush.bf16.msra.mxu0 %v3253
        %3270 = vmatpush.bf16.msra.mxu0 %v3252
        %3271 = vmatmul.bf16.gmra.mxu0 %v3261
        %v3272 = vpop.f32.mrf.mxu0
        %v3273 = vadd.f32 0.0, %v3272
        %v3274 = vpop.f32.mrf.mxu0
        %3275 = vdwg.mxu0
        %v3276 = vsel %vm578, %v3153, 0.0
        %v3277 = vsel %vm578, %v3193, 0.0
        %v3278 = vadd.f32 %v3276, %v3277
        %v3279 = vsel %vm578, %v3233, 0.0
        %v3280 = vadd.f32 %v3278, %v3279
        %v3281 = vsel %vm578, %v3273, 0.0
        %v3282 = vadd.f32 %v3280, %v3281
        %v3283 = vpack.c.bf16 %v3282, %v3282
        %v3284 = vpack.c.bf16 %v2834, %v2833
        %v3285 = vpack.c.bf16 %v2836, %v2835
        %v3287 = vperm.slane %v2838, 0
        %v3290 = vsel %vm578, %v3283, 0
        %3292 = vmatpush.bf16.msra.mxu0 0
        %3293 = vmatpush.bf16.msra.mxu0 0
        %3294 = vmatpush.bf16.msra.mxu0 0
        %3295 = vmatpush.bf16.msra.mxu0 0
        %3296 = vmatpush.bf16.msra.mxu0 0
        %3297 = vmatpush.bf16.msra.mxu0 0
        %3298 = vmatpush.bf16.msra.mxu0 %v3285
        %3299 = vmatpush.bf16.msra.mxu0 %v3284
        %3300 = vmatmul.bf16.gmra.mxu0 %v3290
        %v3301 = vpop.f32.mrf.mxu0
        %v3302 = vadd.f32 %v3287, %v3301
        %v3303 = vpop.f32.mrf.mxu0
        %3304 = vdwg.mxu0
        %v3305 = vadd.f32 %v2719, %v3302
        %s3306 = scalar_lea.vmem %s11, 25
        %v3307 = vld [vmem:[%s3306] sm:$0x1]
        %s3308 = scalar_lea.vmem %s11, 26
        %v3309 = vld [vmem:[%s3308] sm:$0x1]
        %v3310 = vsel %vm578, %v3305, 0.0
        %3311 = vadd.xlane.f32.xlu0 %v3310
        %v3312 = vpop.xlane.xlu0 %3311
        %v3313 = vmul.f32 %v3312, %v1527
        %v3314 = vsub.f32 %v3305, %v3313
        %v3315 = vmul.f32 %v3314, %v3314
        %v3316 = vsel %vm578, %v3315, 0.0
        %3317 = vadd.xlane.f32.xlu0 %v3316
        %v3318 = vpop.xlane.xlu0 %3317
        %v3319 = vmul.f32 %v3318, %v1527
        %v3320 = vadd.f32 %v3319, 1e-05
        %v3321 = vrsqrt.pop %v3320
        %v3322 = vmul.f32 %v3321, %v3320
        %v3323 = vmul.f32 %v3322, %v3321
        %v3324 = vmul.f32 0.5, %v3323
        %v3325 = vsub.f32 1.5, %v3324
        %v3326 = vmul.f32 %v3321, %v3325
        %vm3327 = vweird.f32 %v3320
        %vm3328 = vweird.f32 %v3321
        %vm3329 = vmor %vm3327, %vm3328
        %v3330 = vsel %vm3329, %v3321, %v3326
        %v3331 = vmul.f32 %v3314, %v3330
        %v3333 = vperm.slane %v3307, 0
        %v3335 = vmul.f32 %v3331, %v3333
        %v3337 = vperm.slane %v3309, 0
        %v3339 = vadd.f32 %v3335, %v3337
        %s3340 = scalar_lea.vmem %s9, 32
        %v3341 = vld [vmem:[%s3340] sm:$0xff]
        %v3342 = vld [vmem:[%s3340 + $0x8] sm:$0xff]
        %v3343 = vld [vmem:[%s3340 + $0x10] sm:$0xff]
        %v3344 = vld [vmem:[%s3340 + $0x18] sm:$0xff]
        %v3345 = vpack.c.bf16 %v3339, %v3339
        %v3346 = vpack.c.bf16 %v3342, %v3341
        %v3347 = vpack.c.bf16 %v3344, %v3343
        %s3348 = scalar_lea.vmem %s12, 1
        %v3349 = vld [vmem:[%s3348] sm:$0x1]
        %v3351 = vperm.slane %v3349, 0
        %v3354 = vsel %vm578, %v3345, 0
        %3356 = vmatpush.bf16.msra.mxu0 0
        %3357 = vmatpush.bf16.msra.mxu0 0
        %3358 = vmatpush.bf16.msra.mxu0 0
        %3359 = vmatpush.bf16.msra.mxu0 0
        %3360 = vmatpush.bf16.msra.mxu0 0
        %3361 = vmatpush.bf16.msra.mxu0 0
        %3362 = vmatpush.bf16.msra.mxu0 %v3347
        %3363 = vmatpush.bf16.msra.mxu0 %v3346
        %3364 = vmatmul.bf16.gmra.mxu0 %v3354
        %v3365 = vpop.f32.mrf.mxu0
        %v3366 = vadd.f32 %v3351, %v3365
        %v3367 = vpop.f32.mrf.mxu0
        %3368 = vdwg.mxu0
        %v3369 = vmax.f32 %v3366, 0.0
        %s3370 = scalar_lea.vmem %s10, 64
        %v3371 = vld [vmem:[%s3370] sm:$0xff]
        %v3372 = vld [vmem:[%s3370 + $0x8] sm:$0xff]
        %v3373 = vld [vmem:[%s3370 + $0x10] sm:$0xff]
        %v3374 = vld [vmem:[%s3370 + $0x18] sm:$0xff]
        %v3375 = vld [vmem:[%s3370 + $0x20] sm:$0xff]
        %v3376 = vld [vmem:[%s3370 + $0x28] sm:$0xff]
        %v3377 = vld [vmem:[%s3370 + $0x30] sm:$0xff]
        %v3378 = vld [vmem:[%s3370 + $0x38] sm:$0xff]
        %v3379 = vpack.c.bf16 %v3369, %v3369
        %v3380 = vpack.c.bf16 %v3372, %v3371
        %v3381 = vpack.c.bf16 %v3374, %v3373
        %v3382 = vpack.c.bf16 %v3376, %v3375
        %v3383 = vpack.c.bf16 %v3378, %v3377
        %s3384 = scalar_lea.vmem %s11, 29
        %v3385 = vld [vmem:[%s3384] sm:$0x1]
        %v3387 = vperm.slane %v3385, 0
        %v3390 = vsel %vm772, %v3379, 0
        %3392 = vmatpush.bf16.msra.mxu0 0
        %3393 = vmatpush.bf16.msra.mxu0 0
        %3394 = vmatpush.bf16.msra.mxu0 0
        %3395 = vmatpush.bf16.msra.mxu0 0
        %3396 = vmatpush.bf16.msra.mxu0 %v3383
        %3397 = vmatpush.bf16.msra.mxu0 %v3382
        %3398 = vmatpush.bf16.msra.mxu0 %v3381
        %3399 = vmatpush.bf16.msra.mxu0 %v3380
        %3400 = vmatmul.bf16.gmra.mxu0 %v3390
        %v3401 = vpop.f32.mrf.mxu0
        %v3402 = vadd.f32 %v3387, %v3401
        %v3403 = vpop.f32.mrf.mxu0
        %3404 = vdwg.mxu0
        %v3405 = vadd.f32 %v3339, %v3402
        %s3406 = scalar_lea.vmem %s11, 27
        %v3407 = vld [vmem:[%s3406] sm:$0x1]
        %s3408 = scalar_lea.vmem %s11, 28
        %v3409 = vld [vmem:[%s3408] sm:$0x1]
        %v3410 = vsel %vm578, %v3405, 0.0
        %3411 = vadd.xlane.f32.xlu0 %v3410
        %v3412 = vpop.xlane.xlu0 %3411
        %v3413 = vmul.f32 %v3412, %v1527
        %v3414 = vsub.f32 %v3405, %v3413
        %v3415 = vmul.f32 %v3414, %v3414
        %v3416 = vsel %vm578, %v3415, 0.0
        %3417 = vadd.xlane.f32.xlu0 %v3416
        %v3418 = vpop.xlane.xlu0 %3417
        %v3419 = vmul.f32 %v3418, %v1527
        %v3420 = vadd.f32 %v3419, 1e-05
        %v3421 = vrsqrt.pop %v3420
        %v3422 = vmul.f32 %v3421, %v3420
        %v3423 = vmul.f32 %v3422, %v3421
        %v3424 = vmul.f32 0.5, %v3423
        %v3425 = vsub.f32 1.5, %v3424
        %v3426 = vmul.f32 %v3421, %v3425
        %vm3427 = vweird.f32 %v3420
        %vm3428 = vweird.f32 %v3421
        %vm3429 = vmor %vm3427, %vm3428
        %v3430 = vsel %vm3429, %v3421, %v3426
        %v3431 = vmul.f32 %v3414, %v3430
        %v3433 = vperm.slane %v3407, 0
        %v3435 = vmul.f32 %v3431, %v3433
        %v3437 = vperm.slane %v3409, 0
        %v3439 = vadd.f32 %v3435, %v3437
        %v3440 = vld [vmem:[%s13] sm:$0x1]
        %s3441 = scalar_lea.vmem %s13, 1
        %v3442 = vld [vmem:[%s3441] sm:$0x1]
        %v3443 = vsel %vm578, %v3439, 0.0
        %3444 = vadd.xlane.f32.xlu0 %v3443
        %v3445 = vpop.xlane.xlu0 %3444
        %v3446 = vmul.f32 %v3445, %v1527
        %v3447 = vsub.f32 %v3439, %v3446
        %v3448 = vmul.f32 %v3447, %v3447
        %v3449 = vsel %vm578, %v3448, 0.0
        %3450 = vadd.xlane.f32.xlu0 %v3449
        %v3451 = vpop.xlane.xlu0 %3450
        %v3452 = vmul.f32 %v3451, %v1527
        %v3453 = vadd.f32 %v3452, 1e-05
        %v3454 = vrsqrt.pop %v3453
        %v3455 = vmul.f32 %v3454, %v3453
        %v3456 = vmul.f32 %v3455, %v3454
        %v3457 = vmul.f32 0.5, %v3456
        %v3458 = vsub.f32 1.5, %v3457
        %v3459 = vmul.f32 %v3454, %v3458
        %vm3460 = vweird.f32 %v3453
        %vm3461 = vweird.f32 %v3454
        %vm3462 = vmor %vm3460, %vm3461
        %v3463 = vsel %vm3462, %v3454, %v3459
        %v3464 = vmul.f32 %v3447, %v3463
        %v3466 = vperm.slane %v3440, 0
        %v3468 = vmul.f32 %v3464, %v3466
        %v3470 = vperm.slane %v3442, 0
        %v3472 = vadd.f32 %v3468, %v3470
        %3473 = vst.msk [vmem:[%s534] sm:$0xff] %vm578, %v3472
        %s3474 = sand.u32 %s351, 1
        %s3475 = scalar_lea.sflag [#allocation4], %s3474
        %s3476 = sand.u32 %s351, 1
        %s3477 = smul.addr %s3476, 8
        %s3478 = scalar_lea.vmem [#allocation5], %s3477
        %s3479 = sand.u32 %s377, 1
        %s3480 = scalar_lea.sflag [#allocation7], %s3479
        %s3481 = sand.u32 %s377, 1
        %s3482 = smul.addr %s3481, 64
        %s3483 = scalar_lea.vmem [#allocation6], %s3482
        // Predicated region
        $region81: #{nonlocal_transformer_forward.1} parent=75 // pred_check
          %p3484 = pneg %p361
        $region82: #{nonlocal_transformer_forward.1} parent=75 // pred_check_branch
          %3486 = sbr.rel (%p3484) target = $region84
        $region83: #{nonlocal_transformer_forward.1} parent=75 // pred_region
          %3488 = vsyncadd %s3475, 0
          %s3489 = smul.addr %s34, 8
          %s3490 = scalar_lea.hbm %s14, %s3489
          %s3492 = sshll.u32 %s3478, 4
          %s3493 = int_to_ptr.vmem [resolvable:$true] %s3492
          %s3494 = sshll.u32 %s3490, 4
          %s3495 = int_to_ptr.hbm [resolvable:$true] %s3494
          %3497 = dma.vmem_to_hbm [thread:$0]  %s3493, 128, %s3495, %s3475
        $region84: #{nonlocal_transformer_forward.1} parent=75 // pred_fallthru
          _
        // Predicated region
        $region85: #{nonlocal_transformer_forward.1} parent=75 // pred_check
          %p3498 = pneg %p387
        $region86: #{nonlocal_transformer_forward.1} parent=75 // pred_check_branch
          %3500 = sbr.rel (%p3498) target = $region88
        $region87: #{nonlocal_transformer_forward.1} parent=75 // pred_region
          %3502 = vsyncadd %s3480, 0
          %s3503 = smul.addr %s34, 8
          %s3504 = smul.addr %s3503, 8
          %s3505 = scalar_lea.hbm %s15, %s3504
          %s3506 = sshll.u32 %s3483, 4
          %s3507 = int_to_ptr.vmem [resolvable:$true] %s3506
          %s3508 = sshll.u32 %s3505, 4
          %s3509 = int_to_ptr.hbm [resolvable:$true] %s3508
          %3514 = dma.vmem_to_hbm [thread:$0]  %s3507, 1024, %s3509, %s3480, 128, 128, 8
        $region88: #{nonlocal_transformer_forward.1} parent=75 // pred_fallthru
          _
      $region76: #{nonlocal_transformer_forward.1} parent=5 // pred_fallthru
        _
      %p3515 = scmp.le.s32.totalorder 2, %s29
      // Predicated region
      $region89: #{nonlocal_transformer_forward.1} parent=5 // pred_check
        %p3516 = pneg %p3515
      $region90: #{nonlocal_transformer_forward.1} parent=5 // pred_check_branch
        %3518 = sbr.rel (%p3516) target = $region92
      $region91: #{nonlocal_transformer_forward.1} parent=5 // pred_region
        %s3519 = ssub.s32 %s29, 2
        // Predicated region
        $region93: #{nonlocal_transformer_forward.1} parent=91 // pred_check
          %p3520 = pneg %p367
        $region94: #{nonlocal_transformer_forward.1} parent=91 // pred_check_branch
          %3522 = sbr.rel (%p3520) target = $region96
        $region95: #{nonlocal_transformer_forward.1} parent=91 // pred_region
          %s3523 = sand.u32 %s352, 1
          %s3524 = scalar_lea.sflag [#allocation4], %s3523
          %s3525 = sand.u32 %s352, 1
          %s3526 = smul.addr %s3525, 8
          %s3527 = scalar_lea.vmem [#allocation5], %s3526
          %3529 = dma.done %s3524, 128
        $region96: #{nonlocal_transformer_forward.1} parent=91 // pred_fallthru
          _
        // Predicated region
        $region97: #{nonlocal_transformer_forward.1} parent=91 // pred_check
          %p3530 = pneg %p393
        $region98: #{nonlocal_transformer_forward.1} parent=91 // pred_check_branch
          %3532 = sbr.rel (%p3530) target = $region100
        $region99: #{nonlocal_transformer_forward.1} parent=91 // pred_region
          %s3533 = sand.u32 %s378, 1
          %s3534 = scalar_lea.sflag [#allocation7], %s3533
          %s3535 = sand.u32 %s378, 1
          %s3536 = smul.addr %s3535, 64
          %s3537 = scalar_lea.vmem [#allocation6], %s3536
          %3539 = dma.done %s3534, 1024
        $region100: #{nonlocal_transformer_forward.1} parent=91 // pred_fallthru
          _
      $region92: #{nonlocal_transformer_forward.1} parent=5 // pred_fallthru
        _
    $region6: #{nonlocal_transformer_forward.1} parent=1 // loop_footer
      %s33 = sadd.s32 1, %s29
    $region7: #{nonlocal_transformer_forward.1} parent=1 // loop_footer_branch
      %28 = sbr.rel target = $region3
    $region8: #{nonlocal_transformer_forward.1} parent=1 // loop_exit
      _
    %3540 = vsyncpa [#allocation3], 1
    %s3541 = scalar_lea.sflag [#allocation3], 1
    %3542 = vsyncpa %s3541, 1
    %3543 = vsyncpa [#allocation4], 1
    %s3544 = scalar_lea.sflag [#allocation4], 1
    %3545 = vsyncpa %s3544, 1
    %3546 = vsyncpa [#allocation7], 1
    %s3547 = scalar_lea.sflag [#allocation7], 1
    %3548 = vsyncpa %s3547, 1

</llo_original>
